<compile_context>
chip_gen: v7x
topology: tpu7x:2x2x1
jax: 0.10.0
libtpu: 0.0.40
codegen_flags: <defaults>
</compile_context>

<pallas_src>
import functools

import jax
import jax.numpy as jnp
from jax.experimental import pallas as pl
from jax.experimental.pallas import tpu as pltpu


# --------------------------------------------------------------------------
# Pallas kernel:  W @ P  (+bias) -> optional InstanceNorm -> activation
#                 -> optional fused residual add.
# Output layout is (channels, HW) with HW on the lane dimension.
# --------------------------------------------------------------------------
def conv_in_act_kernel(*refs, phases, apply_in, act, add_residual):
    if add_residual:
        p_ref, w_ref, b_ref, r_ref, o_ref = refs
    else:
        p_ref, w_ref, b_ref, o_ref = refs
        r_ref = None

    # p_ref: (1, K, HW) bf16, w_ref: (PC, K) bf16, b_ref: (PC, 1) f32,
    # r_ref: (1, PC, HW) f32 (optional), o_ref: (1, PC, HW) f32
    y = jnp.dot(w_ref[...], p_ref[0], preferred_element_type=jnp.float32)  # (PC, HW) f32
    y = y + b_ref[...]  # per-row (per-channel) bias, broadcast over lanes

    if apply_in:
        # InstanceNorm2d: per-channel stats over all spatial positions.
        # Rows are laid out as phase-major blocks of C channels (phases=1 for a
        # normal conv, 4 for the phase-decomposed conv-transpose), so channel
        # co's positions are rows {p*C + co} x all HW lanes.
        PC, HW = y.shape
        C = PC // phases
        denom = float(phases * HW)

        rs = jnp.sum(y, axis=1, keepdims=True)                    # (PC, 1)
        gs = rs[0:C]
        for p in range(1, phases):
            gs = gs + rs[p * C:(p + 1) * C]                       # (C, 1)
        mean = gs / denom
        mean_full = jnp.concatenate([mean] * phases, axis=0) if phases > 1 else mean

        d = y - mean_full
        rs2 = jnp.sum(d * d, axis=1, keepdims=True)               # (PC, 1)
        gs2 = rs2[0:C]
        for p in range(1, phases):
            gs2 = gs2 + rs2[p * C:(p + 1) * C]                    # (C, 1)
        var = gs2 / denom
        var_full = jnp.concatenate([var] * phases, axis=0) if phases > 1 else var

        y = d * jax.lax.rsqrt(var_full + 1e-5)

    if act == "relu":
        y = jnp.maximum(y, 0.0)
    elif act == "lrelu":
        y = jnp.where(y >= 0.0, y, 0.2 * y)
    elif act == "tanh":
        y = jnp.tanh(y)
    # act == "none": identity

    if add_residual:
        y = y + r_ref[0]

    o_ref[0] = y.astype(o_ref.dtype)


def pallas_conv_matmul(patches, w2d, b_rows, residual=None, *, phases, apply_in, act):
    """patches: (N, K, HW) bf16, w2d: (PC, K) bf16, b_rows: (PC, 1) f32,
    residual: optional (N, PC, HW) f32.  Returns (N, PC, HW) f32."""
    N, K, HW = patches.shape
    PC = w2d.shape[0]
    kernel = functools.partial(
        conv_in_act_kernel,
        phases=phases, apply_in=apply_in, act=act,
        add_residual=residual is not None)

    in_specs = [
        pl.BlockSpec((1, K, HW), lambda n: (n, 0, 0)),
        pl.BlockSpec((PC, K), lambda n: (0, 0)),
        pl.BlockSpec((PC, 1), lambda n: (0, 0)),
    ]
    args = [patches, w2d, b_rows]
    if residual is not None:
        in_specs.append(pl.BlockSpec((1, PC, HW), lambda n: (n, 0, 0)))
        args.append(residual)

    return pl.pallas_call(
        kernel,
        out_shape=jax.ShapeDtypeStruct((N, PC, HW), jnp.float32),
        grid=(N,),
        in_specs=in_specs,
        out_specs=pl.BlockSpec((1, PC, HW), lambda n: (n, 0, 0)),
        compiler_params=pltpu.CompilerParams(
            dimension_semantics=("parallel",)),  # independent samples -> both TCs on v7x
    )(*args)


# --------------------------------------------------------------------------
# Plain-JAX glue (padding, patch extraction, weight re-layout, pixel shuffle)
# --------------------------------------------------------------------------
def reflect_pad(x, p):  # x: NCHW
    return jnp.pad(x, ((0, 0), (0, 0), (p, p), (p, p)), mode="reflect")


def im2col_cf(x, kh, kw):
    """Channel-first im2col. x: (N, C, Hp, Wp) -> (N, kh*kw*C, Ho*Wo)."""
    N, C, Hp, Wp = x.shape
    Ho, Wo = Hp - kh + 1, Wp - kw + 1
    slabs = []
    for i in range(kh):
        for j in range(kw):
            slabs.append(x[:, :, i:i + Ho, j:j + Wo])
    p = jnp.stack(slabs, axis=1)                  # (N, kh*kw, C, Ho, Wo)
    return p.reshape(N, kh * kw * C, Ho * Wo), Ho, Wo


def conv_layer(x_padded, w_pt, b, k, *, apply_in, act, residual=None):
    """Valid conv on pre-padded NCHW input. w_pt: (Cout, Cin, k, k)."""
    N = x_padded.shape[0]
    Cout, Cin = w_pt.shape[0], w_pt.shape[1]
    patches, Ho, Wo = im2col_cf(x_padded, k, k)               # (N, k*k*Cin, HW)
    # weight rows: Cout, cols ordered (ky, kx, cin) to match the patch layout
    w2d = jnp.transpose(w_pt, (0, 2, 3, 1)).reshape(Cout, k * k * Cin)
    res = residual.reshape(N, Cout, Ho * Wo) if residual is not None else None
    out = pallas_conv_matmul(
        patches.astype(jnp.bfloat16), w2d.astype(jnp.bfloat16),
        b.reshape(Cout, 1).astype(jnp.float32), res,
        phases=1, apply_in=apply_in, act=act)
    return out.reshape(N, Cout, Ho, Wo)


def conv_transpose_layer(x, w_t, b, *, apply_in, act):
    """ConvTranspose2d(k=4, s=2, p=1) via phase decomposition (no zero-dilated
    input): one matmul over 3x3 windows of the zero-padded input produces the
    4 sub-pixel phases, then a pixel-shuffle.  w_t: (Cin, Cout, 4, 4)."""
    N, Cin, H, W = x.shape
    Cout = w_t.shape[1]

    xpad = jnp.pad(x, ((0, 0), (0, 0), (1, 1), (1, 1)))       # zero pad by 1
    patches, Ho, Wo = im2col_cf(xpad, 3, 3)                   # (N, 9*Cin, H*W)

    # combined phase weight: rows = (phase a*2+b)*Cout + co, cols = (dy*3+dx)*Cin + ci
    wflip = jnp.flip(w_t, axis=(2, 3))                        # (Cin, Cout, 4, 4)
    Wc = jnp.zeros((2, 2, Cout, 3, 3, Cin), w_t.dtype)
    for a in range(2):
        for bph in range(2):
            for s in range(2):
                for t in range(2):
                    Wc = Wc.at[a, bph, :, a + s, bph + t, :].set(
                        jnp.transpose(wflip[:, :, a + 2 * s, bph + 2 * t]))
    Wc = Wc.reshape(4 * Cout, 9 * Cin)
    b_rows = jnp.tile(b, 4).reshape(4 * Cout, 1).astype(jnp.float32)

    out = pallas_conv_matmul(
        patches.astype(jnp.bfloat16), Wc.astype(jnp.bfloat16), b_rows, None,
        phases=4, apply_in=apply_in, act=act)                 # (N, 4*Cout, H*W)

    # pixel shuffle: (N, 4*Cout, H*W) -> (N, Cout, 2H, 2W)
    y = out.reshape(N, 2, 2, Cout, H, W)
    y = jnp.transpose(y, (0, 3, 4, 1, 5, 2))                  # (N, Cout, H, 2, W, 2)
    return y.reshape(N, Cout, 2 * H, 2 * W)


def residual_block(x, p):
    w1, b1, w2, b2 = p
    y = conv_layer(reflect_pad(x, 1), w1, b1, 3, apply_in=True, act="relu")
    # second conv: InstanceNorm, no activation, residual add fused in-kernel
    y = conv_layer(reflect_pad(y, 1), w2, b2, 3, apply_in=True, act="none",
                   residual=x)
    return y


# --------------------------------------------------------------------------
# Parameter init (deterministic, synthetic) and full forward
# --------------------------------------------------------------------------
def _conv_init(key, cout, cin, k):
    wk, bk = jax.random.split(key)
    scale = (cin * k * k) ** -0.5
    w = jax.random.uniform(wk, (cout, cin, k, k), jnp.float32, -scale, scale)
    b = jax.random.uniform(bk, (cout,), jnp.float32, -scale, scale)
    return w, b


def _convT_init(key, cin, cout, k):
    wk, bk = jax.random.split(key)
    scale = (cin * k * k) ** -0.5
    w = jax.random.uniform(wk, (cin, cout, k, k), jnp.float32, -scale, scale)
    b = jax.random.uniform(bk, (cout,), jnp.float32, -scale, scale)
    return w, b


def _resblock_init(key, d):
    k1, k2 = jax.random.split(key)
    w1, b1 = _conv_init(k1, d, d, 3)
    w2, b2 = _conv_init(k2, d, d, 3)
    return (w1, b1, w2, b2)


def init_params(key, base_dim, n_upsample, out_channels):
    d = base_dim * 2 ** n_upsample
    keys = jax.random.split(key, 4 + n_upsample + 1)
    params = {}
    params["shared"] = _resblock_init(keys[0], d)            # shared_block = ResidualBlock(d)
    params["res"] = [_resblock_init(keys[1 + i], d) for i in range(3)]
    params["up"] = []
    dd = d
    for i in range(n_upsample):
        params["up"].append(_convT_init(keys[4 + i], dd, dd // 2, 4))
        dd //= 2
    params["final"] = _conv_init(keys[4 + n_upsample], out_channels, dd, 7)
    return params


def g_forward(x, params):
    # x: NCHW latent
    x = residual_block(x, params["shared"])                   # shared ResidualBlock
    for p in params["res"]:                                   # 3 residual blocks
        x = residual_block(x, p)
    for (wt, bt) in params["up"]:                             # ConvT -> IN -> LeakyReLU(0.2)
        x = conv_transpose_layer(x, wt, bt, apply_in=True, act="lrelu")
    wf, bf = params["final"]                                  # ReflPad(3) -> Conv7 -> Tanh
    x = conv_layer(reflect_pad(x, 3), wf, bf, 7, apply_in=False, act="tanh")
    return x


# --------------------------------------------------------------------------
if __name__ == "__main__":
    # Small shapes: base dim=8, n_upsample=2 -> inner dim=32, out_channels=3
    B, base_dim, n_up, out_ch, H = 2, 8, 2, 3, 8
    D = base_dim * 2 ** n_up  # 32

    params = init_params(jax.random.PRNGKey(0), base_dim, n_up, out_ch)
    x = jax.random.normal(jax.random.PRNGKey(1), (B, D, H, H), jnp.float32)  # NCHW latent

    y = jax.jit(g_forward)(x, params)
    y = jax.block_until_ready(y)

    assert y.shape == (B, out_ch, H * 2 ** n_up, H * 2 ** n_up), y.shape
    assert bool(jnp.all(jnp.isfinite(y)))
    assert bool(jnp.max(jnp.abs(y)) <= 1.0 + 1e-6)  # tanh output range
    print("KERNEL_OK")
</pallas_src>

<mosaic_0001>
module attributes {stable_mosaic.version = 11 : i64} {
  func.func @conv_in_act_kernel(%arg0: i32, %arg1: memref<1x288x64xbf16, #tpu.memory_space<vmem>>, %arg2: memref<32x288xbf16, #tpu.memory_space<vmem>>, %arg3: memref<32x1xf32, #tpu.memory_space<vmem>>, %arg4: memref<1x32x64xf32, #tpu.memory_space<vmem>>) attributes {dimension_semantics = [#tpu.dimension_semantics<parallel>], iteration_bounds = array<i64: 2>, scalar_prefetch = 0 : i64, scratch_operands = 0 : i64, tpu.core_type = #tpu.core_type<tc>, window_params = [{transform_indices = @transform_0, window_bounds = array<i64: 1, 288, 64>}, {pipeline_mode = #tpu.pipeline_mode<synchronous>, transform_indices = @transform_1, window_bounds = array<i64: 32, 288>}, {pipeline_mode = #tpu.pipeline_mode<synchronous>, transform_indices = @transform_2, window_bounds = array<i64: 32, 1>}, {transform_indices = @transform_3, window_bounds = array<i64: 1, 32, 64>}]} {
    %c0 = arith.constant 0 : index
    %c0_0 = arith.constant 0 : index
    %0 = vector.load %arg2[%c0, %c0_0] : memref<32x288xbf16, #tpu.memory_space<vmem>>, vector<32x288xbf16>
    %c0_1 = arith.constant 0 : index
    %c0_2 = arith.constant 0 : index
    %c0_3 = arith.constant 0 : index
    %1 = vector.load %arg1[%c0_1, %c0_2, %c0_3] : memref<1x288x64xbf16, #tpu.memory_space<vmem>>, vector<1x288x64xbf16>
    %2 = vector.shape_cast %1 : vector<1x288x64xbf16> to vector<288x64xbf16>
    %cst = arith.constant dense<0.000000e+00> : vector<32x64xf32>
    %3 = tpu.matmul %0, %2, %cst {dimension_numbers = #tpu.dot_dimension_numbers<[1], [0], [0], [1], [0, 0, 1, 1], [], []>} : vector<32x288xbf16>, vector<288x64xbf16>, vector<32x64xf32> -> vector<32x64xf32>
    %c0_4 = arith.constant 0 : index
    %c0_5 = arith.constant 0 : index
    %4 = vector.load %arg3[%c0_4, %c0_5] : memref<32x1xf32, #tpu.memory_space<vmem>>, vector<32x1xf32>
    %5 = vector.broadcast %4 : vector<32x1xf32> to vector<32x64xf32>
    %6 = arith.addf %3, %5 : vector<32x64xf32>
    %cst_6 = arith.constant dense<0.000000e+00> : vector<32xf32>
    %7 = vector.multi_reduction <add>, %6, %cst_6 [1] : vector<32x64xf32> to vector<32xf32>
    %8 = vector.shape_cast %7 : vector<32xf32> to vector<32x1xf32>
    %cst_7 = arith.constant 6.400000e+01 : f32
    %9 = vector.broadcast %cst_7 : f32 to vector<32x1xf32>
    %10 = arith.divf %8, %9 : vector<32x1xf32>
    %11 = vector.broadcast %10 : vector<32x1xf32> to vector<32x64xf32>
    %12 = arith.subf %6, %11 : vector<32x64xf32>
    %13 = arith.mulf %12, %12 : vector<32x64xf32>
    %cst_8 = arith.constant dense<0.000000e+00> : vector<32xf32>
    %14 = vector.multi_reduction <add>, %13, %cst_8 [1] : vector<32x64xf32> to vector<32xf32>
    %15 = vector.shape_cast %14 : vector<32xf32> to vector<32x1xf32>
    %cst_9 = arith.constant 6.400000e+01 : f32
    %16 = vector.broadcast %cst_9 : f32 to vector<32x1xf32>
    %17 = arith.divf %15, %16 : vector<32x1xf32>
    %cst_10 = arith.constant 9.99999974E-6 : f32
    %18 = vector.broadcast %cst_10 : f32 to vector<32x1xf32>
    %19 = arith.addf %17, %18 : vector<32x1xf32>
    %20 = math.rsqrt %19 : vector<32x1xf32>
    %21 = vector.broadcast %20 : vector<32x1xf32> to vector<32x64xf32>
    %22 = arith.mulf %12, %21 : vector<32x64xf32>
    %cst_11 = arith.constant 0.000000e+00 : f32
    %23 = vector.broadcast %cst_11 : f32 to vector<32x64xf32>
    %24 = arith.maximumf %22, %23 : vector<32x64xf32>
    %c0_12 = arith.constant 0 : index
    %c0_13 = arith.constant 0 : index
    %c0_14 = arith.constant 0 : index
    %25 = vector.load %arg4[%c0_12, %c0_13, %c0_14] : memref<1x32x64xf32, #tpu.memory_space<vmem>>, vector<1x32x64xf32>
    %26 = vector.shape_cast %25 : vector<1x32x64xf32> to vector<32x64xf32>
    %27 = vector.shape_cast %24 : vector<32x64xf32> to vector<1x32x64xf32>
    tpu.vector_store %arg4[%c0_12, %c0_13, %c0_14], %27 {strides = array<i32>} : memref<1x32x64xf32, #tpu.memory_space<vmem>>, vector<1x32x64xf32>,
    return
  }
  func.func @transform_0(%arg0: i32) -> (i32, i32, i32) {
    %c0_i32 = arith.constant 0 : i32
    %c0_i32_0 = arith.constant 0 : i32
    %c0_i32_1 = arith.constant 0 : i32
    return %arg0, %c0_i32, %c0_i32_0 : i32, i32, i32
  }
  func.func @transform_1(%arg0: i32) -> (i32, i32) {
    %c0_i32 = arith.constant 0 : i32
    %c0_i32_0 = arith.constant 0 : i32
    %c0_i32_1 = arith.constant 0 : i32
    return %c0_i32, %c0_i32_0 : i32, i32
  }
  func.func @transform_2(%arg0: i32) -> (i32, i32) {
    %c0_i32 = arith.constant 0 : i32
    %c0_i32_0 = arith.constant 0 : i32
    %c0_i32_1 = arith.constant 0 : i32
    return %c0_i32, %c0_i32_0 : i32, i32
  }
  func.func @transform_3(%arg0: i32) -> (i32, i32, i32) {
    %c0_i32 = arith.constant 0 : i32
    %c0_i32_0 = arith.constant 0 : i32
    %c0_i32_1 = arith.constant 0 : i32
    return %arg0, %c0_i32, %c0_i32_0 : i32, i32, i32
  }
}

module attributes {stable_mosaic.version = 11 : i64} {
  func.func @conv_in_act_kernel(%arg0: i32, %arg1: memref<1x288x64xbf16, #tpu.memory_space<vmem>>, %arg2: memref<32x288xbf16, #tpu.memory_space<vmem>>, %arg3: memref<32x1xf32, #tpu.memory_space<vmem>>, %arg4: memref<1x32x64xf32, #tpu.memory_space<vmem>>, %arg5: memref<1x32x64xf32, #tpu.memory_space<vmem>>) attributes {dimension_semantics = [#tpu.dimension_semantics<parallel>], iteration_bounds = array<i64: 2>, scalar_prefetch = 0 : i64, scratch_operands = 0 : i64, tpu.core_type = #tpu.core_type<tc>, window_params = [{transform_indices = @transform_0, window_bounds = array<i64: 1, 288, 64>}, {pipeline_mode = #tpu.pipeline_mode<synchronous>, transform_indices = @transform_1, window_bounds = array<i64: 32, 288>}, {pipeline_mode = #tpu.pipeline_mode<synchronous>, transform_indices = @transform_2, window_bounds = array<i64: 32, 1>}, {transform_indices = @transform_3, window_bounds = array<i64: 1, 32, 64>}, {transform_indices = @transform_4, window_bounds = array<i64: 1, 32, 64>}]} {
    %c0 = arith.constant 0 : index
    %c0_0 = arith.constant 0 : index
    %0 = vector.load %arg2[%c0, %c0_0] : memref<32x288xbf16, #tpu.memory_space<vmem>>, vector<32x288xbf16>
    %c0_1 = arith.constant 0 : index
    %c0_2 = arith.constant 0 : index
    %c0_3 = arith.constant 0 : index
    %1 = vector.load %arg1[%c0_1, %c0_2, %c0_3] : memref<1x288x64xbf16, #tpu.memory_space<vmem>>, vector<1x288x64xbf16>
    %2 = vector.shape_cast %1 : vector<1x288x64xbf16> to vector<288x64xbf16>
    %cst = arith.constant dense<0.000000e+00> : vector<32x64xf32>
    %3 = tpu.matmul %0, %2, %cst {dimension_numbers = #tpu.dot_dimension_numbers<[1], [0], [0], [1], [0, 0, 1, 1], [], []>} : vector<32x288xbf16>, vector<288x64xbf16>, vector<32x64xf32> -> vector<32x64xf32>
    %c0_4 = arith.constant 0 : index
    %c0_5 = arith.constant 0 : index
    %4 = vector.load %arg3[%c0_4, %c0_5] : memref<32x1xf32, #tpu.memory_space<vmem>>, vector<32x1xf32>
    %5 = vector.broadcast %4 : vector<32x1xf32> to vector<32x64xf32>
    %6 = arith.addf %3, %5 : vector<32x64xf32>
    %cst_6 = arith.constant dense<0.000000e+00> : vector<32xf32>
    %7 = vector.multi_reduction <add>, %6, %cst_6 [1] : vector<32x64xf32> to vector<32xf32>
    %8 = vector.shape_cast %7 : vector<32xf32> to vector<32x1xf32>
    %cst_7 = arith.constant 6.400000e+01 : f32
    %9 = vector.broadcast %cst_7 : f32 to vector<32x1xf32>
    %10 = arith.divf %8, %9 : vector<32x1xf32>
    %11 = vector.broadcast %10 : vector<32x1xf32> to vector<32x64xf32>
    %12 = arith.subf %6, %11 : vector<32x64xf32>
    %13 = arith.mulf %12, %12 : vector<32x64xf32>
    %cst_8 = arith.constant dense<0.000000e+00> : vector<32xf32>
    %14 = vector.multi_reduction <add>, %13, %cst_8 [1] : vector<32x64xf32> to vector<32xf32>
    %15 = vector.shape_cast %14 : vector<32xf32> to vector<32x1xf32>
    %cst_9 = arith.constant 6.400000e+01 : f32
    %16 = vector.broadcast %cst_9 : f32 to vector<32x1xf32>
    %17 = arith.divf %15, %16 : vector<32x1xf32>
    %cst_10 = arith.constant 9.99999974E-6 : f32
    %18 = vector.broadcast %cst_10 : f32 to vector<32x1xf32>
    %19 = arith.addf %17, %18 : vector<32x1xf32>
    %20 = math.rsqrt %19 : vector<32x1xf32>
    %21 = vector.broadcast %20 : vector<32x1xf32> to vector<32x64xf32>
    %22 = arith.mulf %12, %21 : vector<32x64xf32>
    %c0_11 = arith.constant 0 : index
    %c0_12 = arith.constant 0 : index
    %c0_13 = arith.constant 0 : index
    %23 = vector.load %arg4[%c0_11, %c0_12, %c0_13] : memref<1x32x64xf32, #tpu.memory_space<vmem>>, vector<1x32x64xf32>
    %24 = vector.shape_cast %23 : vector<1x32x64xf32> to vector<32x64xf32>
    %25 = arith.addf %22, %24 : vector<32x64xf32>
    %c0_14 = arith.constant 0 : index
    %c0_15 = arith.constant 0 : index
    %c0_16 = arith.constant 0 : index
    %26 = vector.load %arg5[%c0_14, %c0_15, %c0_16] : memref<1x32x64xf32, #tpu.memory_space<vmem>>, vector<1x32x64xf32>
    %27 = vector.shape_cast %26 : vector<1x32x64xf32> to vector<32x64xf32>
    %28 = vector.shape_cast %25 : vector<32x64xf32> to vector<1x32x64xf32>
    tpu.vector_store %arg5[%c0_14, %c0_15, %c0_16], %28 {strides = array<i32>} : memref<1x32x64xf32, #tpu.memory_space<vmem>>, vector<1x32x64xf32>,
    return
  }
  func.func @transform_0(%arg0: i32) -> (i32, i32, i32) {
    %c0_i32 = arith.constant 0 : i32
    %c0_i32_0 = arith.constant 0 : i32
    %c0_i32_1 = arith.constant 0 : i32
    return %arg0, %c0_i32, %c0_i32_0 : i32, i32, i32
  }
  func.func @transform_1(%arg0: i32) -> (i32, i32) {
    %c0_i32 = arith.constant 0 : i32
    %c0_i32_0 = arith.constant 0 : i32
    %c0_i32_1 = arith.constant 0 : i32
    return %c0_i32, %c0_i32_0 : i32, i32
  }
  func.func @transform_2(%arg0: i32) -> (i32, i32) {
    %c0_i32 = arith.constant 0 : i32
    %c0_i32_0 = arith.constant 0 : i32
    %c0_i32_1 = arith.constant 0 : i32
    return %c0_i32, %c0_i32_0 : i32, i32
  }
  func.func @transform_3(%arg0: i32) -> (i32, i32, i32) {
    %c0_i32 = arith.constant 0 : i32
    %c0_i32_0 = arith.constant 0 : i32
    %c0_i32_1 = arith.constant 0 : i32
    return %arg0, %c0_i32, %c0_i32_0 : i32, i32, i32
  }
  func.func @transform_4(%arg0: i32) -> (i32, i32, i32) {
    %c0_i32 = arith.constant 0 : i32
    %c0_i32_0 = arith.constant 0 : i32
    %c0_i32_1 = arith.constant 0 : i32
    return %arg0, %c0_i32, %c0_i32_0 : i32, i32, i32
  }
}

module attributes {stable_mosaic.version = 11 : i64} {
  func.func @conv_in_act_kernel(%arg0: i32, %arg1: memref<1x288x64xbf16, #tpu.memory_space<vmem>>, %arg2: memref<64x288xbf16, #tpu.memory_space<vmem>>, %arg3: memref<64x1xf32, #tpu.memory_space<vmem>>, %arg4: memref<1x64x64xf32, #tpu.memory_space<vmem>>) attributes {dimension_semantics = [#tpu.dimension_semantics<parallel>], iteration_bounds = array<i64: 2>, scalar_prefetch = 0 : i64, scratch_operands = 0 : i64, tpu.core_type = #tpu.core_type<tc>, window_params = [{transform_indices = @transform_0, window_bounds = array<i64: 1, 288, 64>}, {pipeline_mode = #tpu.pipeline_mode<synchronous>, transform_indices = @transform_1, window_bounds = array<i64: 64, 288>}, {pipeline_mode = #tpu.pipeline_mode<synchronous>, transform_indices = @transform_2, window_bounds = array<i64: 64, 1>}, {transform_indices = @transform_3, window_bounds = array<i64: 1, 64, 64>}]} {
    %c0 = arith.constant 0 : index
    %c0_0 = arith.constant 0 : index
    %0 = vector.load %arg2[%c0, %c0_0] : memref<64x288xbf16, #tpu.memory_space<vmem>>, vector<64x288xbf16>
    %c0_1 = arith.constant 0 : index
    %c0_2 = arith.constant 0 : index
    %c0_3 = arith.constant 0 : index
    %1 = vector.load %arg1[%c0_1, %c0_2, %c0_3] : memref<1x288x64xbf16, #tpu.memory_space<vmem>>, vector<1x288x64xbf16>
    %2 = vector.shape_cast %1 : vector<1x288x64xbf16> to vector<288x64xbf16>
    %cst = arith.constant dense<0.000000e+00> : vector<64x64xf32>
    %3 = tpu.matmul %0, %2, %cst {dimension_numbers = #tpu.dot_dimension_numbers<[1], [0], [0], [1], [0, 0, 1, 1], [], []>} : vector<64x288xbf16>, vector<288x64xbf16>, vector<64x64xf32> -> vector<64x64xf32>
    %c0_4 = arith.constant 0 : index
    %c0_5 = arith.constant 0 : index
    %4 = vector.load %arg3[%c0_4, %c0_5] : memref<64x1xf32, #tpu.memory_space<vmem>>, vector<64x1xf32>
    %5 = vector.broadcast %4 : vector<64x1xf32> to vector<64x64xf32>
    %6 = arith.addf %3, %5 : vector<64x64xf32>
    %cst_6 = arith.constant dense<0.000000e+00> : vector<64xf32>
    %7 = vector.multi_reduction <add>, %6, %cst_6 [1] : vector<64x64xf32> to vector<64xf32>
    %8 = vector.shape_cast %7 : vector<64xf32> to vector<64x1xf32>
    %9 = vector.extract_strided_slice %8 {offsets = [0, 0], sizes = [16, 1], strides = [1, 1]} : vector<64x1xf32> to vector<16x1xf32>
    %10 = vector.extract_strided_slice %8 {offsets = [16, 0], sizes = [16, 1], strides = [1, 1]} : vector<64x1xf32> to vector<16x1xf32>
    %11 = arith.addf %9, %10 : vector<16x1xf32>
    %12 = vector.extract_strided_slice %8 {offsets = [32, 0], sizes = [16, 1], strides = [1, 1]} : vector<64x1xf32> to vector<16x1xf32>
    %13 = arith.addf %11, %12 : vector<16x1xf32>
    %14 = vector.extract_strided_slice %8 {offsets = [48, 0], sizes = [16, 1], strides = [1, 1]} : vector<64x1xf32> to vector<16x1xf32>
    %15 = arith.addf %13, %14 : vector<16x1xf32>
    %cst_7 = arith.constant 2.560000e+02 : f32
    %16 = vector.broadcast %cst_7 : f32 to vector<16x1xf32>
    %17 = arith.divf %15, %16 : vector<16x1xf32>
    %18 = tpu.concatenate %17, %17, %17, %17 in 0 : vector<16x1xf32>, vector<16x1xf32>, vector<16x1xf32>, vector<16x1xf32> -> vector<64x1xf32>
    %19 = vector.broadcast %18 : vector<64x1xf32> to vector<64x64xf32>
    %20 = arith.subf %6, %19 : vector<64x64xf32>
    %21 = arith.mulf %20, %20 : vector<64x64xf32>
    %cst_8 = arith.constant dense<0.000000e+00> : vector<64xf32>
    %22 = vector.multi_reduction <add>, %21, %cst_8 [1] : vector<64x64xf32> to vector<64xf32>
    %23 = vector.shape_cast %22 : vector<64xf32> to vector<64x1xf32>
    %24 = vector.extract_strided_slice %23 {offsets = [0, 0], sizes = [16, 1], strides = [1, 1]} : vector<64x1xf32> to vector<16x1xf32>
    %25 = vector.extract_strided_slice %23 {offsets = [16, 0], sizes = [16, 1], strides = [1, 1]} : vector<64x1xf32> to vector<16x1xf32>
    %26 = arith.addf %24, %25 : vector<16x1xf32>
    %27 = vector.extract_strided_slice %23 {offsets = [32, 0], sizes = [16, 1], strides = [1, 1]} : vector<64x1xf32> to vector<16x1xf32>
    %28 = arith.addf %26, %27 : vector<16x1xf32>
    %29 = vector.extract_strided_slice %23 {offsets = [48, 0], sizes = [16, 1], strides = [1, 1]} : vector<64x1xf32> to vector<16x1xf32>
    %30 = arith.addf %28, %29 : vector<16x1xf32>
    %cst_9 = arith.constant 2.560000e+02 : f32
    %31 = vector.broadcast %cst_9 : f32 to vector<16x1xf32>
    %32 = arith.divf %30, %31 : vector<16x1xf32>
    %33 = tpu.concatenate %32, %32, %32, %32 in 0 : vector<16x1xf32>, vector<16x1xf32>, vector<16x1xf32>, vector<16x1xf32> -> vector<64x1xf32>
    %cst_10 = arith.constant 9.99999974E-6 : f32
    %34 = vector.broadcast %cst_10 : f32 to vector<64x1xf32>
    %35 = arith.addf %33, %34 : vector<64x1xf32>
    %36 = math.rsqrt %35 : vector<64x1xf32>
    %37 = vector.broadcast %36 : vector<64x1xf32> to vector<64x64xf32>
    %38 = arith.mulf %20, %37 : vector<64x64xf32>
    %cst_11 = arith.constant 0.000000e+00 : f32
    %39 = vector.broadcast %cst_11 : f32 to vector<64x64xf32>
    %40 = arith.cmpf oge, %38, %39 : vector<64x64xf32>
    %cst_12 = arith.constant 2.000000e-01 : f32
    %41 = vector.broadcast %cst_12 : f32 to vector<64x64xf32>
    %42 = arith.mulf %41, %38 : vector<64x64xf32>
    %43 = arith.select %40, %38, %42 : vector<64x64xi1>, vector<64x64xf32>
    %c0_13 = arith.constant 0 : index
    %c0_14 = arith.constant 0 : index
    %c0_15 = arith.constant 0 : index
    %44 = vector.load %arg4[%c0_13, %c0_14, %c0_15] : memref<1x64x64xf32, #tpu.memory_space<vmem>>, vector<1x64x64xf32>
    %45 = vector.shape_cast %44 : vector<1x64x64xf32> to vector<64x64xf32>
    %46 = vector.shape_cast %43 : vector<64x64xf32> to vector<1x64x64xf32>
    tpu.vector_store %arg4[%c0_13, %c0_14, %c0_15], %46 {strides = array<i32>} : memref<1x64x64xf32, #tpu.memory_space<vmem>>, vector<1x64x64xf32>,
    return
  }
  func.func @transform_0(%arg0: i32) -> (i32, i32, i32) {
    %c0_i32 = arith.constant 0 : i32
    %c0_i32_0 = arith.constant 0 : i32
    %c0_i32_1 = arith.constant 0 : i32
    return %arg0, %c0_i32, %c0_i32_0 : i32, i32, i32
  }
  func.func @transform_1(%arg0: i32) -> (i32, i32) {
    %c0_i32 = arith.constant 0 : i32
    %c0_i32_0 = arith.constant 0 : i32
    %c0_i32_1 = arith.constant 0 : i32
    return %c0_i32, %c0_i32_0 : i32, i32
  }
  func.func @transform_2(%arg0: i32) -> (i32, i32) {
    %c0_i32 = arith.constant 0 : i32
    %c0_i32_0 = arith.constant 0 : i32
    %c0_i32_1 = arith.constant 0 : i32
    return %c0_i32, %c0_i32_0 : i32, i32
  }
  func.func @transform_3(%arg0: i32) -> (i32, i32, i32) {
    %c0_i32 = arith.constant 0 : i32
    %c0_i32_0 = arith.constant 0 : i32
    %c0_i32_1 = arith.constant 0 : i32
    return %arg0, %c0_i32, %c0_i32_0 : i32, i32, i32
  }
}

module attributes {stable_mosaic.version = 11 : i64} {
  func.func @conv_in_act_kernel(%arg0: i32, %arg1: memref<1x144x256xbf16, #tpu.memory_space<vmem>>, %arg2: memref<32x144xbf16, #tpu.memory_space<vmem>>, %arg3: memref<32x1xf32, #tpu.memory_space<vmem>>, %arg4: memref<1x32x256xf32, #tpu.memory_space<vmem>>) attributes {dimension_semantics = [#tpu.dimension_semantics<parallel>], iteration_bounds = array<i64: 2>, scalar_prefetch = 0 : i64, scratch_operands = 0 : i64, tpu.core_type = #tpu.core_type<tc>, window_params = [{transform_indices = @transform_0, window_bounds = array<i64: 1, 144, 256>}, {pipeline_mode = #tpu.pipeline_mode<synchronous>, transform_indices = @transform_1, window_bounds = array<i64: 32, 144>}, {pipeline_mode = #tpu.pipeline_mode<synchronous>, transform_indices = @transform_2, window_bounds = array<i64: 32, 1>}, {transform_indices = @transform_3, window_bounds = array<i64: 1, 32, 256>}]} {
    %c0 = arith.constant 0 : index
    %c0_0 = arith.constant 0 : index
    %0 = vector.load %arg2[%c0, %c0_0] : memref<32x144xbf16, #tpu.memory_space<vmem>>, vector<32x144xbf16>
    %c0_1 = arith.constant 0 : index
    %c0_2 = arith.constant 0 : index
    %c0_3 = arith.constant 0 : index
    %1 = vector.load %arg1[%c0_1, %c0_2, %c0_3] : memref<1x144x256xbf16, #tpu.memory_space<vmem>>, vector<1x144x256xbf16>
    %2 = vector.shape_cast %1 : vector<1x144x256xbf16> to vector<144x256xbf16>
    %cst = arith.constant dense<0.000000e+00> : vector<32x256xf32>
    %3 = tpu.matmul %0, %2, %cst {dimension_numbers = #tpu.dot_dimension_numbers<[1], [0], [0], [1], [0, 0, 1, 1], [], []>} : vector<32x144xbf16>, vector<144x256xbf16>, vector<32x256xf32> -> vector<32x256xf32>
    %c0_4 = arith.constant 0 : index
    %c0_5 = arith.constant 0 : index
    %4 = vector.load %arg3[%c0_4, %c0_5] : memref<32x1xf32, #tpu.memory_space<vmem>>, vector<32x1xf32>
    %5 = vector.broadcast %4 : vector<32x1xf32> to vector<32x256xf32>
    %6 = arith.addf %3, %5 : vector<32x256xf32>
    %cst_6 = arith.constant dense<0.000000e+00> : vector<32xf32>
    %7 = vector.multi_reduction <add>, %6, %cst_6 [1] : vector<32x256xf32> to vector<32xf32>
    %8 = vector.shape_cast %7 : vector<32xf32> to vector<32x1xf32>
    %9 = vector.extract_strided_slice %8 {offsets = [0, 0], sizes = [8, 1], strides = [1, 1]} : vector<32x1xf32> to vector<8x1xf32>
    %10 = vector.extract_strided_slice %8 {offsets = [8, 0], sizes = [8, 1], strides = [1, 1]} : vector<32x1xf32> to vector<8x1xf32>
    %11 = arith.addf %9, %10 : vector<8x1xf32>
    %12 = vector.extract_strided_slice %8 {offsets = [16, 0], sizes = [8, 1], strides = [1, 1]} : vector<32x1xf32> to vector<8x1xf32>
    %13 = arith.addf %11, %12 : vector<8x1xf32>
    %14 = vector.extract_strided_slice %8 {offsets = [24, 0], sizes = [8, 1], strides = [1, 1]} : vector<32x1xf32> to vector<8x1xf32>
    %15 = arith.addf %13, %14 : vector<8x1xf32>
    %cst_7 = arith.constant 1.024000e+03 : f32
    %16 = vector.broadcast %cst_7 : f32 to vector<8x1xf32>
    %17 = arith.divf %15, %16 : vector<8x1xf32>
    %18 = tpu.concatenate %17, %17, %17, %17 in 0 : vector<8x1xf32>, vector<8x1xf32>, vector<8x1xf32>, vector<8x1xf32> -> vector<32x1xf32>
    %19 = vector.broadcast %18 : vector<32x1xf32> to vector<32x256xf32>
    %20 = arith.subf %6, %19 : vector<32x256xf32>
    %21 = arith.mulf %20, %20 : vector<32x256xf32>
    %cst_8 = arith.constant dense<0.000000e+00> : vector<32xf32>
    %22 = vector.multi_reduction <add>, %21, %cst_8 [1] : vector<32x256xf32> to vector<32xf32>
    %23 = vector.shape_cast %22 : vector<32xf32> to vector<32x1xf32>
    %24 = vector.extract_strided_slice %23 {offsets = [0, 0], sizes = [8, 1], strides = [1, 1]} : vector<32x1xf32> to vector<8x1xf32>
    %25 = vector.extract_strided_slice %23 {offsets = [8, 0], sizes = [8, 1], strides = [1, 1]} : vector<32x1xf32> to vector<8x1xf32>
    %26 = arith.addf %24, %25 : vector<8x1xf32>
    %27 = vector.extract_strided_slice %23 {offsets = [16, 0], sizes = [8, 1], strides = [1, 1]} : vector<32x1xf32> to vector<8x1xf32>
    %28 = arith.addf %26, %27 : vector<8x1xf32>
    %29 = vector.extract_strided_slice %23 {offsets = [24, 0], sizes = [8, 1], strides = [1, 1]} : vector<32x1xf32> to vector<8x1xf32>
    %30 = arith.addf %28, %29 : vector<8x1xf32>
    %cst_9 = arith.constant 1.024000e+03 : f32
    %31 = vector.broadcast %cst_9 : f32 to vector<8x1xf32>
    %32 = arith.divf %30, %31 : vector<8x1xf32>
    %33 = tpu.concatenate %32, %32, %32, %32 in 0 : vector<8x1xf32>, vector<8x1xf32>, vector<8x1xf32>, vector<8x1xf32> -> vector<32x1xf32>
    %cst_10 = arith.constant 9.99999974E-6 : f32
    %34 = vector.broadcast %cst_10 : f32 to vector<32x1xf32>
    %35 = arith.addf %33, %34 : vector<32x1xf32>
    %36 = math.rsqrt %35 : vector<32x1xf32>
    %37 = vector.broadcast %36 : vector<32x1xf32> to vector<32x256xf32>
    %38 = arith.mulf %20, %37 : vector<32x256xf32>
    %cst_11 = arith.constant 0.000000e+00 : f32
    %39 = vector.broadcast %cst_11 : f32 to vector<32x256xf32>
    %40 = arith.cmpf oge, %38, %39 : vector<32x256xf32>
    %cst_12 = arith.constant 2.000000e-01 : f32
    %41 = vector.broadcast %cst_12 : f32 to vector<32x256xf32>
    %42 = arith.mulf %41, %38 : vector<32x256xf32>
    %43 = arith.select %40, %38, %42 : vector<32x256xi1>, vector<32x256xf32>
    %c0_13 = arith.constant 0 : index
    %c0_14 = arith.constant 0 : index
    %c0_15 = arith.constant 0 : index
    %44 = vector.load %arg4[%c0_13, %c0_14, %c0_15] : memref<1x32x256xf32, #tpu.memory_space<vmem>>, vector<1x32x256xf32>
    %45 = vector.shape_cast %44 : vector<1x32x256xf32> to vector<32x256xf32>
    %46 = vector.shape_cast %43 : vector<32x256xf32> to vector<1x32x256xf32>
    tpu.vector_store %arg4[%c0_13, %c0_14, %c0_15], %46 {strides = array<i32>} : memref<1x32x256xf32, #tpu.memory_space<vmem>>, vector<1x32x256xf32>,
    return
  }
  func.func @transform_0(%arg0: i32) -> (i32, i32, i32) {
    %c0_i32 = arith.constant 0 : i32
    %c0_i32_0 = arith.constant 0 : i32
    %c0_i32_1 = arith.constant 0 : i32
    return %arg0, %c0_i32, %c0_i32_0 : i32, i32, i32
  }
  func.func @transform_1(%arg0: i32) -> (i32, i32) {
    %c0_i32 = arith.constant 0 : i32
    %c0_i32_0 = arith.constant 0 : i32
    %c0_i32_1 = arith.constant 0 : i32
    return %c0_i32, %c0_i32_0 : i32, i32
  }
  func.func @transform_2(%arg0: i32) -> (i32, i32) {
    %c0_i32 = arith.constant 0 : i32
    %c0_i32_0 = arith.constant 0 : i32
    %c0_i32_1 = arith.constant 0 : i32
    return %c0_i32, %c0_i32_0 : i32, i32
  }
  func.func @transform_3(%arg0: i32) -> (i32, i32, i32) {
    %c0_i32 = arith.constant 0 : i32
    %c0_i32_0 = arith.constant 0 : i32
    %c0_i32_1 = arith.constant 0 : i32
    return %arg0, %c0_i32, %c0_i32_0 : i32, i32, i32
  }
}

module attributes {stable_mosaic.version = 11 : i64} {
  func.func @conv_in_act_kernel(%arg0: i32, %arg1: memref<1x392x1024xbf16, #tpu.memory_space<vmem>>, %arg2: memref<3x392xbf16, #tpu.memory_space<vmem>>, %arg3: memref<3x1xf32, #tpu.memory_space<vmem>>, %arg4: memref<1x3x1024xf32, #tpu.memory_space<vmem>>) attributes {dimension_semantics = [#tpu.dimension_semantics<parallel>], iteration_bounds = array<i64: 2>, scalar_prefetch = 0 : i64, scratch_operands = 0 : i64, tpu.core_type = #tpu.core_type<tc>, window_params = [{transform_indices = @transform_0, window_bounds = array<i64: 1, 392, 1024>}, {pipeline_mode = #tpu.pipeline_mode<synchronous>, transform_indices = @transform_1, window_bounds = array<i64: 3, 392>}, {pipeline_mode = #tpu.pipeline_mode<synchronous>, transform_indices = @transform_2, window_bounds = array<i64: 3, 1>}, {transform_indices = @transform_3, window_bounds = array<i64: 1, 3, 1024>}]} {
    %c0 = arith.constant 0 : index
    %c0_0 = arith.constant 0 : index
    %0 = vector.load %arg2[%c0, %c0_0] : memref<3x392xbf16, #tpu.memory_space<vmem>>, vector<3x392xbf16>
    %c0_1 = arith.constant 0 : index
    %c0_2 = arith.constant 0 : index
    %c0_3 = arith.constant 0 : index
    %1 = vector.load %arg1[%c0_1, %c0_2, %c0_3] : memref<1x392x1024xbf16, #tpu.memory_space<vmem>>, vector<1x392x1024xbf16>
    %2 = vector.shape_cast %1 : vector<1x392x1024xbf16> to vector<392x1024xbf16>
    %cst = arith.constant dense<0.000000e+00> : vector<3x1024xf32>
    %3 = tpu.matmul %0, %2, %cst {dimension_numbers = #tpu.dot_dimension_numbers<[1], [0], [0], [1], [0, 0, 1, 1], [], []>} : vector<3x392xbf16>, vector<392x1024xbf16>, vector<3x1024xf32> -> vector<3x1024xf32>
    %c0_4 = arith.constant 0 : index
    %c0_5 = arith.constant 0 : index
    %4 = vector.load %arg3[%c0_4, %c0_5] : memref<3x1xf32, #tpu.memory_space<vmem>>, vector<3x1xf32>
    %5 = vector.broadcast %4 : vector<3x1xf32> to vector<3x1024xf32>
    %6 = arith.addf %3, %5 : vector<3x1024xf32>
    %7 = math.tanh %6 : vector<3x1024xf32>
    %c0_6 = arith.constant 0 : index
    %c0_7 = arith.constant 0 : index
    %c0_8 = arith.constant 0 : index
    %8 = vector.load %arg4[%c0_6, %c0_7, %c0_8] : memref<1x3x1024xf32, #tpu.memory_space<vmem>>, vector<1x3x1024xf32>
    %9 = vector.shape_cast %8 : vector<1x3x1024xf32> to vector<3x1024xf32>
    %10 = vector.shape_cast %7 : vector<3x1024xf32> to vector<1x3x1024xf32>
    tpu.vector_store %arg4[%c0_6, %c0_7, %c0_8], %10 {strides = array<i32>} : memref<1x3x1024xf32, #tpu.memory_space<vmem>>, vector<1x3x1024xf32>,
    return
  }
  func.func @transform_0(%arg0: i32) -> (i32, i32, i32) {
    %c0_i32 = arith.constant 0 : i32
    %c0_i32_0 = arith.constant 0 : i32
    %c0_i32_1 = arith.constant 0 : i32
    return %arg0, %c0_i32, %c0_i32_0 : i32, i32, i32
  }
  func.func @transform_1(%arg0: i32) -> (i32, i32) {
    %c0_i32 = arith.constant 0 : i32
    %c0_i32_0 = arith.constant 0 : i32
    %c0_i32_1 = arith.constant 0 : i32
    return %c0_i32, %c0_i32_0 : i32, i32
  }
  func.func @transform_2(%arg0: i32) -> (i32, i32) {
    %c0_i32 = arith.constant 0 : i32
    %c0_i32_0 = arith.constant 0 : i32
    %c0_i32_1 = arith.constant 0 : i32
    return %c0_i32, %c0_i32_0 : i32, i32
  }
  func.func @transform_3(%arg0: i32) -> (i32, i32, i32) {
    %c0_i32 = arith.constant 0 : i32
    %c0_i32_0 = arith.constant 0 : i32
    %c0_i32_1 = arith.constant 0 : i32
    return %arg0, %c0_i32, %c0_i32_0 : i32, i32, i32
  }
}

</mosaic_0001>

<llo_original>
// kernel: g_forward.11
$region0: #{g_forward.11}
  #allocation0 [shape = 'u32[]', space=smem, size = 0x4, offset = 0x4, fixed_abs, tag = 'smem constant byte address 0x4 - core index']
  #allocation1 [shape = 'u32[144,128]{1,0:T(1,128)}', space=vmem, size = 0x12000, scoped, tag = 'internal scratch']
  %s0 = inlined_call_operand.vmem [shape: bf16[2,288,64], index: 0, kind: input, shape index: {}]
  %s1 = inlined_call_operand.vmem [shape: bf16[32,288], index: 1, kind: input, shape index: {}]
  %s2 = inlined_call_operand.vmem [shape: f32[32,1], index: 2, kind: input, shape index: {}]
  %s3 = inlined_call_operand.vmem [shape: f32[2,32,64], index: 3, kind: output, shape index: {}]
  %s4 = sld [smem:[#allocation0]]
  $region45: #{g_forward.11} parent=0
    _
  %s6 = ssub.s32 1, %s4
  %s7 = scalar_select 0, %s6, %s4
  loop: start=0, step=1, limit=4
  $region2: #{g_forward.11} parent=0 // loop_pre_header
    _
  $region3: #{g_forward.11} parent=0 // loop_header
    %s9 = sphi 0, %s13
    %p10 = scmp.ge.s32.totalorder %s9, 4
    %s19 = sphi 0, %s21
    %s22 = sphi 0, %s19
    %s23 = sphi 0, %s22
    %s39 = sphi 0, %s23
    %s43 = sphi 0, %s43
    %s45 = sphi 0, %s43
    %s46 = sphi 0, %s45
    %s60 = sphi 0, %s46
    %s64 = sphi 0, %s64
    %s66 = sphi 0, %s64
    %s67 = sphi 0, %s66
    %s81 = sphi 0, %s67
    %s87 = sphi 0, %s89
    %s90 = sphi 0, %s87
    %s91 = sphi 0, %s90
    %s107 = sphi 0, %s91
  $region4: #{g_forward.11} parent=0 // loop_header_branch
    %12 = sbr.rel (%p10) target = $region8
  $region5: #{g_forward.11} parent=0 // loop_body
    %s14 = ssub.s32 %s9, 1
    %s15 = ssub.s32 %s9, 2
    %s16 = sadd.s32 %s9, 1
    %s17 = ssub.s32 %s9, %s16
    %p18 = scmp.eq.s32.totalorder %s17, 0
    %s20 = sadd.s32 %s19, 1
    %s21 = scalar_select %p18, %s19, %s20
    %p24 = pneg %p18
    %p25 = scmp.eq.s32.totalorder %s9, 1
    %p26 = por %p24, %p25
    %p27 = scmp.ne.s32.totalorder %s19, %s22
    %p28 = scmp.eq.s32.totalorder %s9, 0
    %p29 = por %p27, %p28
    %p30 = scmp.ne.s32.totalorder %s19, %s22
    %p31 = scmp.eq.s32.totalorder %s14, 1
    %p32 = por %p30, %p31
    %p33 = scmp.ne.s32.totalorder %s22, %s23
    %p34 = scmp.eq.s32.totalorder %s14, 0
    %p35 = por %p33, %p34
    %p36 = scmp.ne.s32.totalorder %s22, %s23
    %p37 = scmp.eq.s32.totalorder %s15, 1
    %p38 = por %p36, %p37
    %p40 = scmp.ne.s32.totalorder %s23, %s39
    %p41 = scmp.eq.s32.totalorder %s15, 0
    %p42 = por %p40, %p41
    %s44 = sadd.s32 %s43, 1
    %p47 = scmp.eq.s32.totalorder %s9, 1
    %p48 = scmp.ne.s32.totalorder %s43, %s45
    %p49 = scmp.eq.s32.totalorder %s9, 0
    %p50 = por %p48, %p49
    %p51 = scmp.ne.s32.totalorder %s43, %s45
    %p52 = scmp.eq.s32.totalorder %s14, 1
    %p53 = por %p51, %p52
    %p54 = scmp.ne.s32.totalorder %s45, %s46
    %p55 = scmp.eq.s32.totalorder %s14, 0
    %p56 = por %p54, %p55
    %p57 = scmp.ne.s32.totalorder %s45, %s46
    %p58 = scmp.eq.s32.totalorder %s15, 1
    %p59 = por %p57, %p58
    %p61 = scmp.ne.s32.totalorder %s46, %s60
    %p62 = scmp.eq.s32.totalorder %s15, 0
    %p63 = por %p61, %p62
    %s65 = sadd.s32 %s64, 1
    %p68 = scmp.eq.s32.totalorder %s9, 1
    %p69 = scmp.ne.s32.totalorder %s64, %s66
    %p70 = scmp.eq.s32.totalorder %s9, 0
    %p71 = por %p69, %p70
    %p72 = scmp.ne.s32.totalorder %s64, %s66
    %p73 = scmp.eq.s32.totalorder %s14, 1
    %p74 = por %p72, %p73
    %p75 = scmp.ne.s32.totalorder %s66, %s67
    %p76 = scmp.eq.s32.totalorder %s14, 0
    %p77 = por %p75, %p76
    %p78 = scmp.ne.s32.totalorder %s66, %s67
    %p79 = scmp.eq.s32.totalorder %s15, 1
    %p80 = por %p78, %p79
    %p82 = scmp.ne.s32.totalorder %s67, %s81
    %p83 = scmp.eq.s32.totalorder %s15, 0
    %p84 = por %p82, %p83
    %s85 = ssub.s32 %s9, %s16
    %p86 = scmp.eq.s32.totalorder %s85, 0
    %s88 = sadd.s32 %s87, 1
    %s89 = scalar_select %p86, %s87, %s88
    %p92 = pneg %p86
    %p93 = scmp.eq.s32.totalorder %s9, 1
    %p94 = por %p92, %p93
    %p95 = scmp.ne.s32.totalorder %s87, %s90
    %p96 = scmp.eq.s32.totalorder %s9, 0
    %p97 = por %p95, %p96
    %p98 = scmp.ne.s32.totalorder %s87, %s90
    %p99 = scmp.eq.s32.totalorder %s14, 1
    %p100 = por %p98, %p99
    %p101 = scmp.ne.s32.totalorder %s90, %s91
    %p102 = scmp.eq.s32.totalorder %s14, 0
    %p103 = por %p101, %p102
    %p104 = scmp.ne.s32.totalorder %s90, %s91
    %p105 = scmp.eq.s32.totalorder %s15, 1
    %p106 = por %p104, %p105
    %p108 = scmp.ne.s32.totalorder %s91, %s107
    %p109 = scmp.eq.s32.totalorder %s15, 0
    %p110 = por %p108, %p109
    %p111 = scmp.le.s32.totalorder 1, %s9
    %p112 = scmp.lt.s32.totalorder %s9, 3
    %p113 = pnand %p111, %p112
    %p114 = pneg %p113
    // Predicated region
    $region9: #{g_forward.11} parent=5 // pred_check
      _
    $region10: #{g_forward.11} parent=5 // pred_check_branch
      %116 = sbr.rel (%p113) target = $region12
    $region11: #{g_forward.11} parent=5 // pred_region
      %s117 = ssub.s32 %s9, 1
      // Predicated region
      $region13: #{g_forward.11} parent=11 // pred_check
        %p118 = pneg %p56
      $region14: #{g_forward.11} parent=11 // pred_check_branch
        %120 = sbr.rel (%p118) target = $region16
      $region15: #{g_forward.11} parent=11 // pred_region
        _
      $region16: #{g_forward.11} parent=11 // pred_fallthru
        _
      // Predicated region
      $region17: #{g_forward.11} parent=11 // pred_check
        %p121 = pneg %p77
      $region18: #{g_forward.11} parent=11 // pred_check_branch
        %123 = sbr.rel (%p121) target = $region20
      $region19: #{g_forward.11} parent=11 // pred_region
        _
      $region20: #{g_forward.11} parent=11 // pred_fallthru
        _
    $region12: #{g_forward.11} parent=5 // pred_fallthru
      _
    %p124 = scmp.lt.s32.totalorder %s9, 2
    // Predicated region
    $region21: #{g_forward.11} parent=5 // pred_check
      %p125 = pneg %p124
    $region22: #{g_forward.11} parent=5 // pred_check_branch
      %127 = sbr.rel (%p125) target = $region24
    $region23: #{g_forward.11} parent=5 // pred_region
      // Predicated region
      $region25: #{g_forward.11} parent=23 // pred_check
        %p128 = pneg %p29
      $region26: #{g_forward.11} parent=23 // pred_check_branch
        %130 = sbr.rel (%p128) target = $region28
      $region27: #{g_forward.11} parent=23 // pred_region
        %p131 = scmp.lt.s32.totalorder %s9, 1
        %s132 = scalar_select %p131, %s9, 1
        %s133 = smul.addr %s132, 36
        %s134 = smul.addr %s133, 4
        %s135 = scalar_lea.vmem %s0, %s134
      $region28: #{g_forward.11} parent=23 // pred_fallthru
        _
    $region24: #{g_forward.11} parent=5 // pred_fallthru
      _
    %p136 = scmp.le.s32.totalorder 1, %s9
    %p137 = scmp.lt.s32.totalorder %s9, 3
    %p138 = pnand %p136, %p137
    %p139 = pneg %p138
    // Predicated region
    $region29: #{g_forward.11} parent=5 // pred_check
      _
    $region30: #{g_forward.11} parent=5 // pred_check_branch
      %141 = sbr.rel (%p138) target = $region32
    $region31: #{g_forward.11} parent=5 // pred_region
      %s142 = ssub.s32 %s9, 1
      %p143 = scmp.lt.s32.totalorder %s14, 1
      %s144 = scalar_select %p143, %s14, 1
      %s145 = smul.addr %s144, 36
      %s146 = smul.addr %s145, 4
      %s147 = scalar_lea.vmem %s0, %s146
      %p148 = pneg %p35
      %p149 = pneg %p32
      %p150 = pneg %p56
      %p151 = pneg %p53
      %p152 = pneg %p77
      %p153 = pneg %p74
      %p154 = pneg %p103
      %p155 = pneg %p100
      %p156 = scmp.lt.s32.totalorder %s14, 1
      %s157 = scalar_select %p156, %s14, 1
      %s158 = smul.addr %s157, 4
      %s159 = smul.addr %s158, 8
      %s160 = scalar_lea.vmem %s3, %s159
      %p161 = scmp.lt.s32.totalorder %s14, 1
      %s162 = scalar_select %p161, %s14, 1
      %s163 = smul.addr %s162, 36
      %s164 = smul.addr %s163, 4
      %s165 = scalar_lea.vmem %s0, %s164
      %p166 = scmp.lt.s32.totalorder %s14, 1
      %s167 = scalar_select %p166, %s14, 1
      %s168 = smul.addr %s167, 4
      %s169 = smul.addr %s168, 8
      %s170 = scalar_lea.vmem %s3, %s169
      %v172 = vld [vmem:[%s1] sm:$0xff]
      %v173 = vld [vmem:[%s1 + $0x8] sm:$0xf]
      %v174 = vld [vmem:[%s1 + $0xc] sm:$0xff]
      %v175 = vld [vmem:[%s1 + $0x14] sm:$0xf]
      %v176 = vld [vmem:[%s1 + $0x18] sm:$0xff]
      %v177 = vld [vmem:[%s1 + $0x20] sm:$0xf]
      %v178 = vld [vmem:[%s1 + $0x24] sm:$0xff]
      %v179 = vld [vmem:[%s1 + $0x2c] sm:$0xf]
      %v180 = vld [vmem:[%s165] sm:$0xf]
      %v181 = vld [vmem:[%s165 + $0x4] sm:$0xf]
      %v182 = vld [vmem:[%s165 + $0x8] sm:$0xf]
      %v183 = vld [vmem:[%s165 + $0xc] sm:$0xf]
      %v184 = vld [vmem:[%s165 + $0x10] sm:$0xf]
      %v185 = vld [vmem:[%s165 + $0x14] sm:$0xf]
      %v186 = vld [vmem:[%s165 + $0x18] sm:$0xf]
      %v187 = vld [vmem:[%s165 + $0x1c] sm:$0xf]
      %v188 = vld [vmem:[%s165 + $0x20] sm:$0xf]
      %v189 = vld [vmem:[%s165 + $0x24] sm:$0xf]
      %v190 = vld [vmem:[%s165 + $0x28] sm:$0xf]
      %v191 = vld [vmem:[%s165 + $0x2c] sm:$0xf]
      %v192 = vld [vmem:[%s165 + $0x30] sm:$0xf]
      %v193 = vld [vmem:[%s165 + $0x34] sm:$0xf]
      %v194 = vld [vmem:[%s165 + $0x38] sm:$0xf]
      %v195 = vld [vmem:[%s165 + $0x3c] sm:$0xf]
      %v196 = vld [vmem:[%s165 + $0x40] sm:$0xf]
      %v197 = vld [vmem:[%s165 + $0x44] sm:$0xf]
      %v198 = vld [vmem:[%s165 + $0x48] sm:$0xf]
      %v199 = vld [vmem:[%s165 + $0x4c] sm:$0xf]
      %v200 = vld [vmem:[%s165 + $0x50] sm:$0xf]
      %v201 = vld [vmem:[%s165 + $0x54] sm:$0xf]
      %v202 = vld [vmem:[%s165 + $0x58] sm:$0xf]
      %v203 = vld [vmem:[%s165 + $0x5c] sm:$0xf]
      %v204 = vld [vmem:[%s165 + $0x60] sm:$0xf]
      %v205 = vld [vmem:[%s165 + $0x64] sm:$0xf]
      %v206 = vld [vmem:[%s165 + $0x68] sm:$0xf]
      %v207 = vld [vmem:[%s165 + $0x6c] sm:$0xf]
      %v208 = vld [vmem:[%s165 + $0x70] sm:$0xf]
      %v209 = vld [vmem:[%s165 + $0x74] sm:$0xf]
      %v210 = vld [vmem:[%s165 + $0x78] sm:$0xf]
      %v211 = vld [vmem:[%s165 + $0x7c] sm:$0xf]
      %v212 = vld [vmem:[%s165 + $0x80] sm:$0xf]
      %v213 = vld [vmem:[%s165 + $0x84] sm:$0xf]
      %v214 = vld [vmem:[%s165 + $0x88] sm:$0xf]
      %v215 = vld [vmem:[%s165 + $0x8c] sm:$0xf]
      %v216 = vld [vmem:[%s2] sm:$0xff]
      %v217 = vld [vmem:[%s2 + $0x8] sm:$0xff]
      %v218 = vld [vmem:[%s2 + $0x10] sm:$0xff]
      %v219 = vld [vmem:[%s2 + $0x18] sm:$0xff]
      %221 = vset.pattern.permute.xlu0 0
      %222 = vperm.xlu0 %221, %v216
      %v223 = vpop.permute.xlu0 %222
      %226 = vset.pattern.permute.xlu0 0
      %227 = vperm.xlu0 %226, %v217
      %v228 = vpop.permute.xlu0 %227
      %231 = vset.pattern.permute.xlu0 0
      %232 = vperm.xlu0 %231, %v218
      %v233 = vpop.permute.xlu0 %232
      %236 = vset.pattern.permute.xlu0 0
      %237 = vperm.xlu0 %236, %v219
      %v238 = vpop.permute.xlu0 %237
      %v248 = vunpack.c.l.b16 %v172
      %v249 = vunpack.c.h.b16 %v172
      %v250 = vunpack.c.l.b16 %v173
      %v251 = vunpack.c.l.b16 %v174
      %v252 = vunpack.c.h.b16 %v174
      %v253 = vunpack.c.l.b16 %v175
      %v254 = vunpack.c.l.b16 %v176
      %v255 = vunpack.c.h.b16 %v176
      %v256 = vunpack.c.l.b16 %v177
      %v257 = vunpack.c.l.b16 %v178
      %v258 = vunpack.c.h.b16 %v178
      %v259 = vunpack.c.l.b16 %v179
      %v260 = vpack.c.b16 %v251, %v248
      %v261 = vpack.c.b16 %v252, %v249
      %v262 = vpack.c.b16 %v253, %v250
      %v263 = vpack.c.b16 %v257, %v254
      %v264 = vpack.c.b16 %v258, %v255
      %v265 = vpack.c.b16 %v259, %v256
      %v306 = vunpack.c.l.b16 %v180
      %v307 = vunpack.c.l.b16 %v181
      %v308 = vunpack.c.l.b16 %v182
      %v309 = vunpack.c.l.b16 %v183
      %v310 = vunpack.c.l.b16 %v184
      %v311 = vunpack.c.l.b16 %v185
      %v312 = vunpack.c.l.b16 %v186
      %v313 = vunpack.c.l.b16 %v187
      %v314 = vunpack.c.l.b16 %v188
      %v315 = vunpack.c.l.b16 %v189
      %v316 = vunpack.c.l.b16 %v190
      %v317 = vunpack.c.l.b16 %v191
      %v318 = vunpack.c.l.b16 %v192
      %v319 = vunpack.c.l.b16 %v193
      %v320 = vunpack.c.l.b16 %v194
      %v321 = vunpack.c.l.b16 %v195
      %v322 = vunpack.c.l.b16 %v196
      %v323 = vunpack.c.l.b16 %v197
      %v324 = vunpack.c.l.b16 %v198
      %v325 = vunpack.c.l.b16 %v199
      %v326 = vunpack.c.l.b16 %v200
      %v327 = vunpack.c.l.b16 %v201
      %v328 = vunpack.c.l.b16 %v202
      %v329 = vunpack.c.l.b16 %v203
      %v330 = vunpack.c.l.b16 %v204
      %v331 = vunpack.c.l.b16 %v205
      %v332 = vunpack.c.l.b16 %v206
      %v333 = vunpack.c.l.b16 %v207
      %v334 = vunpack.c.l.b16 %v208
      %v335 = vunpack.c.l.b16 %v209
      %v336 = vunpack.c.l.b16 %v210
      %v337 = vunpack.c.l.b16 %v211
      %v338 = vunpack.c.l.b16 %v212
      %v339 = vunpack.c.l.b16 %v213
      %v340 = vunpack.c.l.b16 %v214
      %v341 = vunpack.c.l.b16 %v215
      %v342 = vpack.c.b16 %v307, %v306
      %v343 = vpack.c.b16 %v309, %v308
      %v344 = vpack.c.b16 %v311, %v310
      %v345 = vpack.c.b16 %v313, %v312
      %v346 = vpack.c.b16 %v315, %v314
      %v347 = vpack.c.b16 %v317, %v316
      %v348 = vpack.c.b16 %v319, %v318
      %v349 = vpack.c.b16 %v321, %v320
      %v350 = vpack.c.b16 %v323, %v322
      %v351 = vpack.c.b16 %v325, %v324
      %v352 = vpack.c.b16 %v327, %v326
      %v353 = vpack.c.b16 %v329, %v328
      %v354 = vpack.c.b16 %v331, %v330
      %v355 = vpack.c.b16 %v333, %v332
      %v356 = vpack.c.b16 %v335, %v334
      %v357 = vpack.c.b16 %v337, %v336
      %v358 = vpack.c.b16 %v339, %v338
      %v359 = vpack.c.b16 %v341, %v340
      %vm378 = vcmask 261120
      %v380 = vsel %vm378, %v262, 0
      %v383 = vsel %vm378, %v265, 0
      %385 = vmatprep.subr.bf16.mxu0 0
      %386 = vmatpush1.bf16.msra.mxu0 %v342
      %387 = vmatprep.subr.bf16.mxu0 0
      %388 = vmatpush1.bf16.msra.mxu0 %v343
      %389 = vmatprep.subr.bf16.mxu0 0
      %390 = vmatpush1.bf16.msra.mxu0 %v344
      %391 = vmatprep.subr.bf16.mxu0 0
      %392 = vmatpush1.bf16.msra.mxu0 %v345
      %393 = vmatprep.subr.bf16.mxu0 0
      %394 = vmatpush1.bf16.msra.mxu0 %v346
      %395 = vmatprep.subr.bf16.mxu0 0
      %396 = vmatpush1.bf16.msra.mxu0 %v347
      %397 = vmatprep.subr.bf16.mxu0 0
      %398 = vmatpush1.bf16.msra.mxu0 %v348
      %399 = vmatprep.subr.bf16.mxu0 0
      %400 = vmatpush1.bf16.msra.mxu0 %v349
      %401 = vmatprep.subr.bf16.mxu0 0
      %402 = vmatpush1.bf16.msra.mxu0 %v350
      %403 = vmatprep.subr.bf16.mxu0 0
      %404 = vmatpush1.bf16.msra.mxu0 %v351
      %405 = vmatprep.subr.bf16.mxu0 0
      %406 = vmatpush1.bf16.msra.mxu0 %v352
      %407 = vmatprep.subr.bf16.mxu0 0
      %408 = vmatpush1.bf16.msra.mxu0 %v353
      %409 = vmatprep.subr.bf16.mxu0 0
      %410 = vmatpush1.bf16.msra.mxu0 %v354
      %411 = vmatprep.subr.bf16.mxu0 0
      %412 = vmatpush1.bf16.msra.mxu0 %v355
      %413 = vmatprep.subr.bf16.mxu0 0
      %414 = vmatpush1.bf16.msra.mxu0 %v356
      %415 = vmatprep.subr.bf16.mxu0 0
      %416 = vmatpush1.bf16.msra.mxu0 %v357
      %417 = vmatprep.mubr.bf16.mxu0 %v261
      %418 = vmatmul.mubr.bf16.gmra.mrb[0].mxu0 %v260
      %v419 = vpop.f32.mrb[0].mxu0
      %v420 = vadd.f32 %v223, %v419
      %v421 = vpop.f32.mrb[0].mxu0
      %v422 = vpop.f32.mrb[0].mxu0
      %v423 = vadd.f32 %v228, %v422
      %v424 = vpop.f32.mrb[0].mxu0
      %425 = vmatprep.mubr.bf16.mxu0 %v264
      %426 = vmatmul.mubr.bf16.gmra.mrb[0].mxu0 %v263
      %v427 = vpop.f32.mrb[0].mxu0
      %v428 = vadd.f32 %v233, %v427
      %v429 = vpop.f32.mrb[0].mxu0
      %v430 = vpop.f32.mrb[0].mxu0
      %v431 = vadd.f32 %v238, %v430
      %v432 = vpop.f32.mrb[0].mxu0
      %433 = vdwg.mxu0
      %434 = vmatprep.subr.bf16.mxu0 0
      %435 = vmatpush1.bf16.msra.mxu0 %v358
      %436 = vmatprep.subr.bf16.mxu0 0
      %437 = vmatpush1.bf16.msra.mxu0 %v359
      %438 = vmatprep.subr.bf16.mxu0 0
      %439 = vmatpush1.bf16.msra.mxu0 0
      %440 = vmatprep.subr.bf16.mxu0 0
      %441 = vmatpush1.bf16.msra.mxu0 0
      %442 = vmatprep.subr.bf16.mxu0 0
      %443 = vmatpush1.bf16.msra.mxu0 0
      %444 = vmatprep.subr.bf16.mxu0 0
      %445 = vmatpush1.bf16.msra.mxu0 0
      %446 = vmatprep.subr.bf16.mxu0 0
      %447 = vmatpush1.bf16.msra.mxu0 0
      %448 = vmatprep.subr.bf16.mxu0 0
      %449 = vmatpush1.bf16.msra.mxu0 0
      %450 = vmatprep.subr.bf16.mxu0 0
      %451 = vmatpush1.bf16.msra.mxu0 0
      %452 = vmatprep.subr.bf16.mxu0 0
      %453 = vmatpush1.bf16.msra.mxu0 0
      %454 = vmatprep.subr.bf16.mxu0 0
      %455 = vmatpush1.bf16.msra.mxu0 0
      %456 = vmatprep.subr.bf16.mxu0 0
      %457 = vmatpush1.bf16.msra.mxu0 0
      %458 = vmatprep.subr.bf16.mxu0 0
      %459 = vmatpush1.bf16.msra.mxu0 0
      %460 = vmatprep.subr.bf16.mxu0 0
      %461 = vmatpush1.bf16.msra.mxu0 0
      %462 = vmatprep.subr.bf16.mxu0 0
      %463 = vmatpush1.bf16.msra.mxu0 0
      %464 = vmatprep.subr.bf16.mxu0 0
      %465 = vmatpush1.bf16.msra.mxu0 0
      %466 = vmatprep.mubr.bf16.mxu0 0
      %467 = vmatmul.mubr.bf16.gmra.mrb[0].mxu0 %v380
      %v468 = vpop.f32.mrb[0].mxu0
      %v469 = vadd.f32 %v420, %v468
      %v470 = vpop.f32.mrb[0].mxu0
      %v471 = vpop.f32.mrb[0].mxu0
      %v472 = vadd.f32 %v423, %v471
      %v473 = vpop.f32.mrb[0].mxu0
      %474 = vmatprep.mubr.bf16.mxu0 0
      %475 = vmatmul.mubr.bf16.gmra.mrb[0].mxu0 %v383
      %v476 = vpop.f32.mrb[0].mxu0
      %v477 = vadd.f32 %v428, %v476
      %v478 = vpop.f32.mrb[0].mxu0
      %v479 = vpop.f32.mrb[0].mxu0
      %v480 = vadd.f32 %v431, %v479
      %v481 = vpop.f32.mrb[0].mxu0
      %482 = vdwg.mxu0
      %vm483 = vcmask 523264
      %v484 = vsel %vm483, %v469, 0.0
      %485 = vadd.xlane.f32.xlu0 %v484
      %v486 = vpop.xlane.xlu0 %485
      %v487 = vsel %vm483, %v472, 0.0
      %488 = vadd.xlane.f32.xlu0 %v487
      %v489 = vpop.xlane.xlu0 %488
      %v490 = vsel %vm483, %v477, 0.0
      %491 = vadd.xlane.f32.xlu0 %v490
      %v492 = vpop.xlane.xlu0 %491
      %v493 = vsel %vm483, %v480, 0.0
      %494 = vadd.xlane.f32.xlu0 %v493
      %v495 = vpop.xlane.xlu0 %494
      %v496 = vrcp.pop 64.0
      %v497 = vmul.f32 %v486, %v496
      %v498 = vmul.f32 %v489, %v496
      %v499 = vmul.f32 %v492, %v496
      %v500 = vmul.f32 %v495, %v496
      %v501 = vsub.f32 %v469, %v497
      %v502 = vsub.f32 %v472, %v498
      %v503 = vsub.f32 %v477, %v499
      %v504 = vsub.f32 %v480, %v500
      %v505 = vmul.f32 %v501, %v501
      %v506 = vmul.f32 %v502, %v502
      %v507 = vmul.f32 %v503, %v503
      %v508 = vmul.f32 %v504, %v504
      %v509 = vsel %vm483, %v505, 0.0
      %510 = vadd.xlane.f32.xlu0 %v509
      %v511 = vpop.xlane.xlu0 %510
      %v512 = vsel %vm483, %v506, 0.0
      %513 = vadd.xlane.f32.xlu0 %v512
      %v514 = vpop.xlane.xlu0 %513
      %v515 = vsel %vm483, %v507, 0.0
      %516 = vadd.xlane.f32.xlu0 %v515
      %v517 = vpop.xlane.xlu0 %516
      %v518 = vsel %vm483, %v508, 0.0
      %519 = vadd.xlane.f32.xlu0 %v518
      %v520 = vpop.xlane.xlu0 %519
      %v521 = vmul.f32 %v511, %v496
      %v522 = vmul.f32 %v514, %v496
      %v523 = vmul.f32 %v517, %v496
      %v524 = vmul.f32 %v520, %v496
      %v525 = vadd.f32 %v521, 1e-05
      %v526 = vadd.f32 %v522, 1e-05
      %v527 = vadd.f32 %v523, 1e-05
      %v528 = vadd.f32 %v524, 1e-05
      %v529 = vrsqrt.pop %v525
      %v530 = vrsqrt.pop %v526
      %v531 = vrsqrt.pop %v527
      %v532 = vrsqrt.pop %v528
      %v533 = vmul.f32 %v501, %v529
      %v534 = vmul.f32 %v502, %v530
      %v535 = vmul.f32 %v503, %v531
      %v536 = vmul.f32 %v504, %v532
      %v537 = vmax.f32 %v533, 0.0
      %v538 = vmax.f32 %v534, 0.0
      %v539 = vmax.f32 %v535, 0.0
      %v540 = vmax.f32 %v536, 0.0
      %541 = vst.msk [vmem:[%s170] sm:$0xff] %vm483, %v537
      %542 = vst.msk [vmem:[%s170 + $0x8] sm:$0xff] %vm483, %v538
      %543 = vst.msk [vmem:[%s170 + $0x10] sm:$0xff] %vm483, %v539
      %544 = vst.msk [vmem:[%s170 + $0x18] sm:$0xff] %vm483, %v540
      %p545 = scmp.lt.s32.totalorder %s14, 1
      %s546 = scalar_select %p545, %s14, 1
      %s547 = smul.addr %s546, 4
      %s548 = smul.addr %s547, 8
      %s549 = scalar_lea.vmem %s3, %s548
      // Predicated region
      $region33: #{g_forward.11} parent=31 // pred_check
        %p550 = pneg %p100
      $region34: #{g_forward.11} parent=31 // pred_check_branch
        %552 = sbr.rel (%p550) target = $region36
      $region35: #{g_forward.11} parent=31 // pred_region
        _
      $region36: #{g_forward.11} parent=31 // pred_fallthru
        _
    $region32: #{g_forward.11} parent=5 // pred_fallthru
      _
    %p553 = scmp.le.s32.totalorder 2, %s9
    // Predicated region
    $region37: #{g_forward.11} parent=5 // pred_check
      %p554 = pneg %p553
    $region38: #{g_forward.11} parent=5 // pred_check_branch
      %556 = sbr.rel (%p554) target = $region40
    $region39: #{g_forward.11} parent=5 // pred_region
      %s557 = ssub.s32 %s9, 2
      // Predicated region
      $region41: #{g_forward.11} parent=39 // pred_check
        %p558 = pneg %p106
      $region42: #{g_forward.11} parent=39 // pred_check_branch
        %560 = sbr.rel (%p558) target = $region44
      $region43: #{g_forward.11} parent=39 // pred_region
        %p561 = scmp.lt.s32.totalorder %s15, 1
        %s562 = scalar_select %p561, %s15, 1
        %s563 = smul.addr %s562, 4
        %s564 = smul.addr %s563, 8
        %s565 = scalar_lea.vmem %s3, %s564
      $region44: #{g_forward.11} parent=39 // pred_fallthru
        _
    $region40: #{g_forward.11} parent=5 // pred_fallthru
      _
  $region6: #{g_forward.11} parent=0 // loop_footer
    %s13 = sadd.s32 1, %s9
  $region7: #{g_forward.11} parent=0 // loop_footer_branch
    %8 = sbr.rel target = $region3
  $region8: #{g_forward.11} parent=0 // loop_exit
    _

// kernel: g_forward.12
$region0: #{g_forward.12}
  #allocation0 [shape = 'u32[]', space=smem, size = 0x4, offset = 0x4, fixed_abs, tag = 'smem constant byte address 0x4 - core index']
  #allocation1 [shape = 'u32[144,128]{1,0:T(1,128)}', space=vmem, size = 0x12000, scoped, tag = 'internal scratch']
  %s0 = inlined_call_operand.vmem [shape: bf16[2,288,64], index: 0, kind: input, shape index: {}]
  %s1 = inlined_call_operand.vmem [shape: bf16[32,288], index: 1, kind: input, shape index: {}]
  %s2 = inlined_call_operand.vmem [shape: f32[32,1], index: 2, kind: input, shape index: {}]
  %s3 = inlined_call_operand.vmem [shape: f32[2,32,64], index: 3, kind: input, shape index: {}]
  %s4 = inlined_call_operand.vmem [shape: f32[2,32,64], index: 4, kind: output, shape index: {}]
  %s5 = sld [smem:[#allocation0]]
  $region49: #{g_forward.12} parent=0
    _
  %s7 = ssub.s32 1, %s5
  %s8 = scalar_select 0, %s7, %s5
  loop: start=0, step=1, limit=4
  $region2: #{g_forward.12} parent=0 // loop_pre_header
    _
  $region3: #{g_forward.12} parent=0 // loop_header
    %s10 = sphi 0, %s14
    %p11 = scmp.ge.s32.totalorder %s10, 4
    %s20 = sphi 0, %s22
    %s23 = sphi 0, %s20
    %s24 = sphi 0, %s23
    %s40 = sphi 0, %s24
    %s44 = sphi 0, %s44
    %s46 = sphi 0, %s44
    %s47 = sphi 0, %s46
    %s61 = sphi 0, %s47
    %s65 = sphi 0, %s65
    %s67 = sphi 0, %s65
    %s68 = sphi 0, %s67
    %s82 = sphi 0, %s68
    %s88 = sphi 0, %s90
    %s91 = sphi 0, %s88
    %s92 = sphi 0, %s91
    %s108 = sphi 0, %s92
    %s114 = sphi 0, %s116
    %s117 = sphi 0, %s114
    %s118 = sphi 0, %s117
    %s134 = sphi 0, %s118
  $region4: #{g_forward.12} parent=0 // loop_header_branch
    %13 = sbr.rel (%p11) target = $region8
  $region5: #{g_forward.12} parent=0 // loop_body
    %s15 = ssub.s32 %s10, 1
    %s16 = ssub.s32 %s10, 2
    %s17 = sadd.s32 %s10, 1
    %s18 = ssub.s32 %s10, %s17
    %p19 = scmp.eq.s32.totalorder %s18, 0
    %s21 = sadd.s32 %s20, 1
    %s22 = scalar_select %p19, %s20, %s21
    %p25 = pneg %p19
    %p26 = scmp.eq.s32.totalorder %s10, 1
    %p27 = por %p25, %p26
    %p28 = scmp.ne.s32.totalorder %s20, %s23
    %p29 = scmp.eq.s32.totalorder %s10, 0
    %p30 = por %p28, %p29
    %p31 = scmp.ne.s32.totalorder %s20, %s23
    %p32 = scmp.eq.s32.totalorder %s15, 1
    %p33 = por %p31, %p32
    %p34 = scmp.ne.s32.totalorder %s23, %s24
    %p35 = scmp.eq.s32.totalorder %s15, 0
    %p36 = por %p34, %p35
    %p37 = scmp.ne.s32.totalorder %s23, %s24
    %p38 = scmp.eq.s32.totalorder %s16, 1
    %p39 = por %p37, %p38
    %p41 = scmp.ne.s32.totalorder %s24, %s40
    %p42 = scmp.eq.s32.totalorder %s16, 0
    %p43 = por %p41, %p42
    %s45 = sadd.s32 %s44, 1
    %p48 = scmp.eq.s32.totalorder %s10, 1
    %p49 = scmp.ne.s32.totalorder %s44, %s46
    %p50 = scmp.eq.s32.totalorder %s10, 0
    %p51 = por %p49, %p50
    %p52 = scmp.ne.s32.totalorder %s44, %s46
    %p53 = scmp.eq.s32.totalorder %s15, 1
    %p54 = por %p52, %p53
    %p55 = scmp.ne.s32.totalorder %s46, %s47
    %p56 = scmp.eq.s32.totalorder %s15, 0
    %p57 = por %p55, %p56
    %p58 = scmp.ne.s32.totalorder %s46, %s47
    %p59 = scmp.eq.s32.totalorder %s16, 1
    %p60 = por %p58, %p59
    %p62 = scmp.ne.s32.totalorder %s47, %s61
    %p63 = scmp.eq.s32.totalorder %s16, 0
    %p64 = por %p62, %p63
    %s66 = sadd.s32 %s65, 1
    %p69 = scmp.eq.s32.totalorder %s10, 1
    %p70 = scmp.ne.s32.totalorder %s65, %s67
    %p71 = scmp.eq.s32.totalorder %s10, 0
    %p72 = por %p70, %p71
    %p73 = scmp.ne.s32.totalorder %s65, %s67
    %p74 = scmp.eq.s32.totalorder %s15, 1
    %p75 = por %p73, %p74
    %p76 = scmp.ne.s32.totalorder %s67, %s68
    %p77 = scmp.eq.s32.totalorder %s15, 0
    %p78 = por %p76, %p77
    %p79 = scmp.ne.s32.totalorder %s67, %s68
    %p80 = scmp.eq.s32.totalorder %s16, 1
    %p81 = por %p79, %p80
    %p83 = scmp.ne.s32.totalorder %s68, %s82
    %p84 = scmp.eq.s32.totalorder %s16, 0
    %p85 = por %p83, %p84
    %s86 = ssub.s32 %s10, %s17
    %p87 = scmp.eq.s32.totalorder %s86, 0
    %s89 = sadd.s32 %s88, 1
    %s90 = scalar_select %p87, %s88, %s89
    %p93 = pneg %p87
    %p94 = scmp.eq.s32.totalorder %s10, 1
    %p95 = por %p93, %p94
    %p96 = scmp.ne.s32.totalorder %s88, %s91
    %p97 = scmp.eq.s32.totalorder %s10, 0
    %p98 = por %p96, %p97
    %p99 = scmp.ne.s32.totalorder %s88, %s91
    %p100 = scmp.eq.s32.totalorder %s15, 1
    %p101 = por %p99, %p100
    %p102 = scmp.ne.s32.totalorder %s91, %s92
    %p103 = scmp.eq.s32.totalorder %s15, 0
    %p104 = por %p102, %p103
    %p105 = scmp.ne.s32.totalorder %s91, %s92
    %p106 = scmp.eq.s32.totalorder %s16, 1
    %p107 = por %p105, %p106
    %p109 = scmp.ne.s32.totalorder %s92, %s108
    %p110 = scmp.eq.s32.totalorder %s16, 0
    %p111 = por %p109, %p110
    %s112 = ssub.s32 %s10, %s17
    %p113 = scmp.eq.s32.totalorder %s112, 0
    %s115 = sadd.s32 %s114, 1
    %s116 = scalar_select %p113, %s114, %s115
    %p119 = pneg %p113
    %p120 = scmp.eq.s32.totalorder %s10, 1
    %p121 = por %p119, %p120
    %p122 = scmp.ne.s32.totalorder %s114, %s117
    %p123 = scmp.eq.s32.totalorder %s10, 0
    %p124 = por %p122, %p123
    %p125 = scmp.ne.s32.totalorder %s114, %s117
    %p126 = scmp.eq.s32.totalorder %s15, 1
    %p127 = por %p125, %p126
    %p128 = scmp.ne.s32.totalorder %s117, %s118
    %p129 = scmp.eq.s32.totalorder %s15, 0
    %p130 = por %p128, %p129
    %p131 = scmp.ne.s32.totalorder %s117, %s118
    %p132 = scmp.eq.s32.totalorder %s16, 1
    %p133 = por %p131, %p132
    %p135 = scmp.ne.s32.totalorder %s118, %s134
    %p136 = scmp.eq.s32.totalorder %s16, 0
    %p137 = por %p135, %p136
    %p138 = scmp.le.s32.totalorder 1, %s10
    %p139 = scmp.lt.s32.totalorder %s10, 3
    %p140 = pnand %p138, %p139
    %p141 = pneg %p140
    // Predicated region
    $region9: #{g_forward.12} parent=5 // pred_check
      _
    $region10: #{g_forward.12} parent=5 // pred_check_branch
      %143 = sbr.rel (%p140) target = $region12
    $region11: #{g_forward.12} parent=5 // pred_region
      %s144 = ssub.s32 %s10, 1
      // Predicated region
      $region13: #{g_forward.12} parent=11 // pred_check
        %p145 = pneg %p57
      $region14: #{g_forward.12} parent=11 // pred_check_branch
        %147 = sbr.rel (%p145) target = $region16
      $region15: #{g_forward.12} parent=11 // pred_region
        _
      $region16: #{g_forward.12} parent=11 // pred_fallthru
        _
      // Predicated region
      $region17: #{g_forward.12} parent=11 // pred_check
        %p148 = pneg %p78
      $region18: #{g_forward.12} parent=11 // pred_check_branch
        %150 = sbr.rel (%p148) target = $region20
      $region19: #{g_forward.12} parent=11 // pred_region
        _
      $region20: #{g_forward.12} parent=11 // pred_fallthru
        _
    $region12: #{g_forward.12} parent=5 // pred_fallthru
      _
    %p151 = scmp.lt.s32.totalorder %s10, 2
    // Predicated region
    $region21: #{g_forward.12} parent=5 // pred_check
      %p152 = pneg %p151
    $region22: #{g_forward.12} parent=5 // pred_check_branch
      %154 = sbr.rel (%p152) target = $region24
    $region23: #{g_forward.12} parent=5 // pred_region
      // Predicated region
      $region25: #{g_forward.12} parent=23 // pred_check
        %p155 = pneg %p30
      $region26: #{g_forward.12} parent=23 // pred_check_branch
        %157 = sbr.rel (%p155) target = $region28
      $region27: #{g_forward.12} parent=23 // pred_region
        %p158 = scmp.lt.s32.totalorder %s10, 1
        %s159 = scalar_select %p158, %s10, 1
        %s160 = smul.addr %s159, 36
        %s161 = smul.addr %s160, 4
        %s162 = scalar_lea.vmem %s0, %s161
      $region28: #{g_forward.12} parent=23 // pred_fallthru
        _
      // Predicated region
      $region29: #{g_forward.12} parent=23 // pred_check
        %p163 = pneg %p98
      $region30: #{g_forward.12} parent=23 // pred_check_branch
        %165 = sbr.rel (%p163) target = $region32
      $region31: #{g_forward.12} parent=23 // pred_region
        %p166 = scmp.lt.s32.totalorder %s10, 1
        %s167 = scalar_select %p166, %s10, 1
        %s168 = smul.addr %s167, 4
        %s169 = smul.addr %s168, 8
        %s170 = scalar_lea.vmem %s3, %s169
      $region32: #{g_forward.12} parent=23 // pred_fallthru
        _
    $region24: #{g_forward.12} parent=5 // pred_fallthru
      _
    %p171 = scmp.le.s32.totalorder 1, %s10
    %p172 = scmp.lt.s32.totalorder %s10, 3
    %p173 = pnand %p171, %p172
    %p174 = pneg %p173
    // Predicated region
    $region33: #{g_forward.12} parent=5 // pred_check
      _
    $region34: #{g_forward.12} parent=5 // pred_check_branch
      %176 = sbr.rel (%p173) target = $region36
    $region35: #{g_forward.12} parent=5 // pred_region
      %s177 = ssub.s32 %s10, 1
      %p178 = scmp.lt.s32.totalorder %s15, 1
      %s179 = scalar_select %p178, %s15, 1
      %s180 = smul.addr %s179, 36
      %s181 = smul.addr %s180, 4
      %s182 = scalar_lea.vmem %s0, %s181
      %p183 = pneg %p36
      %p184 = pneg %p33
      %p185 = pneg %p57
      %p186 = pneg %p54
      %p187 = pneg %p78
      %p188 = pneg %p75
      %p189 = scmp.lt.s32.totalorder %s15, 1
      %s190 = scalar_select %p189, %s15, 1
      %s191 = smul.addr %s190, 4
      %s192 = smul.addr %s191, 8
      %s193 = scalar_lea.vmem %s3, %s192
      %p194 = pneg %p104
      %p195 = pneg %p101
      %p196 = pneg %p130
      %p197 = pneg %p127
      %p198 = scmp.lt.s32.totalorder %s15, 1
      %s199 = scalar_select %p198, %s15, 1
      %s200 = smul.addr %s199, 4
      %s201 = smul.addr %s200, 8
      %s202 = scalar_lea.vmem %s4, %s201
      %p203 = scmp.lt.s32.totalorder %s15, 1
      %s204 = scalar_select %p203, %s15, 1
      %s205 = smul.addr %s204, 36
      %s206 = smul.addr %s205, 4
      %s207 = scalar_lea.vmem %s0, %s206
      %p208 = scmp.lt.s32.totalorder %s15, 1
      %s209 = scalar_select %p208, %s15, 1
      %s210 = smul.addr %s209, 4
      %s211 = smul.addr %s210, 8
      %s212 = scalar_lea.vmem %s3, %s211
      %p213 = scmp.lt.s32.totalorder %s15, 1
      %s214 = scalar_select %p213, %s15, 1
      %s215 = smul.addr %s214, 4
      %s216 = smul.addr %s215, 8
      %s217 = scalar_lea.vmem %s4, %s216
      %v219 = vld [vmem:[%s1] sm:$0xff]
      %v220 = vld [vmem:[%s1 + $0x8] sm:$0xf]
      %v221 = vld [vmem:[%s1 + $0xc] sm:$0xff]
      %v222 = vld [vmem:[%s1 + $0x14] sm:$0xf]
      %v223 = vld [vmem:[%s1 + $0x18] sm:$0xff]
      %v224 = vld [vmem:[%s1 + $0x20] sm:$0xf]
      %v225 = vld [vmem:[%s1 + $0x24] sm:$0xff]
      %v226 = vld [vmem:[%s1 + $0x2c] sm:$0xf]
      %v227 = vld [vmem:[%s207] sm:$0xf]
      %v228 = vld [vmem:[%s207 + $0x4] sm:$0xf]
      %v229 = vld [vmem:[%s207 + $0x8] sm:$0xf]
      %v230 = vld [vmem:[%s207 + $0xc] sm:$0xf]
      %v231 = vld [vmem:[%s207 + $0x10] sm:$0xf]
      %v232 = vld [vmem:[%s207 + $0x14] sm:$0xf]
      %v233 = vld [vmem:[%s207 + $0x18] sm:$0xf]
      %v234 = vld [vmem:[%s207 + $0x1c] sm:$0xf]
      %v235 = vld [vmem:[%s207 + $0x20] sm:$0xf]
      %v236 = vld [vmem:[%s207 + $0x24] sm:$0xf]
      %v237 = vld [vmem:[%s207 + $0x28] sm:$0xf]
      %v238 = vld [vmem:[%s207 + $0x2c] sm:$0xf]
      %v239 = vld [vmem:[%s207 + $0x30] sm:$0xf]
      %v240 = vld [vmem:[%s207 + $0x34] sm:$0xf]
      %v241 = vld [vmem:[%s207 + $0x38] sm:$0xf]
      %v242 = vld [vmem:[%s207 + $0x3c] sm:$0xf]
      %v243 = vld [vmem:[%s207 + $0x40] sm:$0xf]
      %v244 = vld [vmem:[%s207 + $0x44] sm:$0xf]
      %v245 = vld [vmem:[%s207 + $0x48] sm:$0xf]
      %v246 = vld [vmem:[%s207 + $0x4c] sm:$0xf]
      %v247 = vld [vmem:[%s207 + $0x50] sm:$0xf]
      %v248 = vld [vmem:[%s207 + $0x54] sm:$0xf]
      %v249 = vld [vmem:[%s207 + $0x58] sm:$0xf]
      %v250 = vld [vmem:[%s207 + $0x5c] sm:$0xf]
      %v251 = vld [vmem:[%s207 + $0x60] sm:$0xf]
      %v252 = vld [vmem:[%s207 + $0x64] sm:$0xf]
      %v253 = vld [vmem:[%s207 + $0x68] sm:$0xf]
      %v254 = vld [vmem:[%s207 + $0x6c] sm:$0xf]
      %v255 = vld [vmem:[%s207 + $0x70] sm:$0xf]
      %v256 = vld [vmem:[%s207 + $0x74] sm:$0xf]
      %v257 = vld [vmem:[%s207 + $0x78] sm:$0xf]
      %v258 = vld [vmem:[%s207 + $0x7c] sm:$0xf]
      %v259 = vld [vmem:[%s207 + $0x80] sm:$0xf]
      %v260 = vld [vmem:[%s207 + $0x84] sm:$0xf]
      %v261 = vld [vmem:[%s207 + $0x88] sm:$0xf]
      %v262 = vld [vmem:[%s207 + $0x8c] sm:$0xf]
      %v263 = vld [vmem:[%s2] sm:$0xff]
      %v264 = vld [vmem:[%s2 + $0x8] sm:$0xff]
      %v265 = vld [vmem:[%s2 + $0x10] sm:$0xff]
      %v266 = vld [vmem:[%s2 + $0x18] sm:$0xff]
      %268 = vset.pattern.permute.xlu0 0
      %269 = vperm.xlu0 %268, %v263
      %v270 = vpop.permute.xlu0 %269
      %273 = vset.pattern.permute.xlu0 0
      %274 = vperm.xlu0 %273, %v264
      %v275 = vpop.permute.xlu0 %274
      %278 = vset.pattern.permute.xlu0 0
      %279 = vperm.xlu0 %278, %v265
      %v280 = vpop.permute.xlu0 %279
      %283 = vset.pattern.permute.xlu0 0
      %284 = vperm.xlu0 %283, %v266
      %v285 = vpop.permute.xlu0 %284
      %v295 = vunpack.c.l.b16 %v219
      %v296 = vunpack.c.h.b16 %v219
      %v297 = vunpack.c.l.b16 %v220
      %v298 = vunpack.c.l.b16 %v221
      %v299 = vunpack.c.h.b16 %v221
      %v300 = vunpack.c.l.b16 %v222
      %v301 = vunpack.c.l.b16 %v223
      %v302 = vunpack.c.h.b16 %v223
      %v303 = vunpack.c.l.b16 %v224
      %v304 = vunpack.c.l.b16 %v225
      %v305 = vunpack.c.h.b16 %v225
      %v306 = vunpack.c.l.b16 %v226
      %v307 = vpack.c.b16 %v298, %v295
      %v308 = vpack.c.b16 %v299, %v296
      %v309 = vpack.c.b16 %v300, %v297
      %v310 = vpack.c.b16 %v304, %v301
      %v311 = vpack.c.b16 %v305, %v302
      %v312 = vpack.c.b16 %v306, %v303
      %v353 = vunpack.c.l.b16 %v227
      %v354 = vunpack.c.l.b16 %v228
      %v355 = vunpack.c.l.b16 %v229
      %v356 = vunpack.c.l.b16 %v230
      %v357 = vunpack.c.l.b16 %v231
      %v358 = vunpack.c.l.b16 %v232
      %v359 = vunpack.c.l.b16 %v233
      %v360 = vunpack.c.l.b16 %v234
      %v361 = vunpack.c.l.b16 %v235
      %v362 = vunpack.c.l.b16 %v236
      %v363 = vunpack.c.l.b16 %v237
      %v364 = vunpack.c.l.b16 %v238
      %v365 = vunpack.c.l.b16 %v239
      %v366 = vunpack.c.l.b16 %v240
      %v367 = vunpack.c.l.b16 %v241
      %v368 = vunpack.c.l.b16 %v242
      %v369 = vunpack.c.l.b16 %v243
      %v370 = vunpack.c.l.b16 %v244
      %v371 = vunpack.c.l.b16 %v245
      %v372 = vunpack.c.l.b16 %v246
      %v373 = vunpack.c.l.b16 %v247
      %v374 = vunpack.c.l.b16 %v248
      %v375 = vunpack.c.l.b16 %v249
      %v376 = vunpack.c.l.b16 %v250
      %v377 = vunpack.c.l.b16 %v251
      %v378 = vunpack.c.l.b16 %v252
      %v379 = vunpack.c.l.b16 %v253
      %v380 = vunpack.c.l.b16 %v254
      %v381 = vunpack.c.l.b16 %v255
      %v382 = vunpack.c.l.b16 %v256
      %v383 = vunpack.c.l.b16 %v257
      %v384 = vunpack.c.l.b16 %v258
      %v385 = vunpack.c.l.b16 %v259
      %v386 = vunpack.c.l.b16 %v260
      %v387 = vunpack.c.l.b16 %v261
      %v388 = vunpack.c.l.b16 %v262
      %v389 = vpack.c.b16 %v354, %v353
      %v390 = vpack.c.b16 %v356, %v355
      %v391 = vpack.c.b16 %v358, %v357
      %v392 = vpack.c.b16 %v360, %v359
      %v393 = vpack.c.b16 %v362, %v361
      %v394 = vpack.c.b16 %v364, %v363
      %v395 = vpack.c.b16 %v366, %v365
      %v396 = vpack.c.b16 %v368, %v367
      %v397 = vpack.c.b16 %v370, %v369
      %v398 = vpack.c.b16 %v372, %v371
      %v399 = vpack.c.b16 %v374, %v373
      %v400 = vpack.c.b16 %v376, %v375
      %v401 = vpack.c.b16 %v378, %v377
      %v402 = vpack.c.b16 %v380, %v379
      %v403 = vpack.c.b16 %v382, %v381
      %v404 = vpack.c.b16 %v384, %v383
      %v405 = vpack.c.b16 %v386, %v385
      %v406 = vpack.c.b16 %v388, %v387
      %vm425 = vcmask 261120
      %v427 = vsel %vm425, %v309, 0
      %v430 = vsel %vm425, %v312, 0
      %432 = vmatprep.subr.bf16.mxu0 0
      %433 = vmatpush1.bf16.msra.mxu0 %v389
      %434 = vmatprep.subr.bf16.mxu0 0
      %435 = vmatpush1.bf16.msra.mxu0 %v390
      %436 = vmatprep.subr.bf16.mxu0 0
      %437 = vmatpush1.bf16.msra.mxu0 %v391
      %438 = vmatprep.subr.bf16.mxu0 0
      %439 = vmatpush1.bf16.msra.mxu0 %v392
      %440 = vmatprep.subr.bf16.mxu0 0
      %441 = vmatpush1.bf16.msra.mxu0 %v393
      %442 = vmatprep.subr.bf16.mxu0 0
      %443 = vmatpush1.bf16.msra.mxu0 %v394
      %444 = vmatprep.subr.bf16.mxu0 0
      %445 = vmatpush1.bf16.msra.mxu0 %v395
      %446 = vmatprep.subr.bf16.mxu0 0
      %447 = vmatpush1.bf16.msra.mxu0 %v396
      %448 = vmatprep.subr.bf16.mxu0 0
      %449 = vmatpush1.bf16.msra.mxu0 %v397
      %450 = vmatprep.subr.bf16.mxu0 0
      %451 = vmatpush1.bf16.msra.mxu0 %v398
      %452 = vmatprep.subr.bf16.mxu0 0
      %453 = vmatpush1.bf16.msra.mxu0 %v399
      %454 = vmatprep.subr.bf16.mxu0 0
      %455 = vmatpush1.bf16.msra.mxu0 %v400
      %456 = vmatprep.subr.bf16.mxu0 0
      %457 = vmatpush1.bf16.msra.mxu0 %v401
      %458 = vmatprep.subr.bf16.mxu0 0
      %459 = vmatpush1.bf16.msra.mxu0 %v402
      %460 = vmatprep.subr.bf16.mxu0 0
      %461 = vmatpush1.bf16.msra.mxu0 %v403
      %462 = vmatprep.subr.bf16.mxu0 0
      %463 = vmatpush1.bf16.msra.mxu0 %v404
      %464 = vmatprep.mubr.bf16.mxu0 %v308
      %465 = vmatmul.mubr.bf16.gmra.mrb[0].mxu0 %v307
      %v466 = vpop.f32.mrb[0].mxu0
      %v467 = vadd.f32 %v270, %v466
      %v468 = vpop.f32.mrb[0].mxu0
      %v469 = vpop.f32.mrb[0].mxu0
      %v470 = vadd.f32 %v275, %v469
      %v471 = vpop.f32.mrb[0].mxu0
      %472 = vmatprep.mubr.bf16.mxu0 %v311
      %473 = vmatmul.mubr.bf16.gmra.mrb[0].mxu0 %v310
      %v474 = vpop.f32.mrb[0].mxu0
      %v475 = vadd.f32 %v280, %v474
      %v476 = vpop.f32.mrb[0].mxu0
      %v477 = vpop.f32.mrb[0].mxu0
      %v478 = vadd.f32 %v285, %v477
      %v479 = vpop.f32.mrb[0].mxu0
      %480 = vdwg.mxu0
      %481 = vmatprep.subr.bf16.mxu0 0
      %482 = vmatpush1.bf16.msra.mxu0 %v405
      %483 = vmatprep.subr.bf16.mxu0 0
      %484 = vmatpush1.bf16.msra.mxu0 %v406
      %485 = vmatprep.subr.bf16.mxu0 0
      %486 = vmatpush1.bf16.msra.mxu0 0
      %487 = vmatprep.subr.bf16.mxu0 0
      %488 = vmatpush1.bf16.msra.mxu0 0
      %489 = vmatprep.subr.bf16.mxu0 0
      %490 = vmatpush1.bf16.msra.mxu0 0
      %491 = vmatprep.subr.bf16.mxu0 0
      %492 = vmatpush1.bf16.msra.mxu0 0
      %493 = vmatprep.subr.bf16.mxu0 0
      %494 = vmatpush1.bf16.msra.mxu0 0
      %495 = vmatprep.subr.bf16.mxu0 0
      %496 = vmatpush1.bf16.msra.mxu0 0
      %497 = vmatprep.subr.bf16.mxu0 0
      %498 = vmatpush1.bf16.msra.mxu0 0
      %499 = vmatprep.subr.bf16.mxu0 0
      %500 = vmatpush1.bf16.msra.mxu0 0
      %501 = vmatprep.subr.bf16.mxu0 0
      %502 = vmatpush1.bf16.msra.mxu0 0
      %503 = vmatprep.subr.bf16.mxu0 0
      %504 = vmatpush1.bf16.msra.mxu0 0
      %505 = vmatprep.subr.bf16.mxu0 0
      %506 = vmatpush1.bf16.msra.mxu0 0
      %507 = vmatprep.subr.bf16.mxu0 0
      %508 = vmatpush1.bf16.msra.mxu0 0
      %509 = vmatprep.subr.bf16.mxu0 0
      %510 = vmatpush1.bf16.msra.mxu0 0
      %511 = vmatprep.subr.bf16.mxu0 0
      %512 = vmatpush1.bf16.msra.mxu0 0
      %513 = vmatprep.mubr.bf16.mxu0 0
      %514 = vmatmul.mubr.bf16.gmra.mrb[0].mxu0 %v427
      %v515 = vpop.f32.mrb[0].mxu0
      %v516 = vadd.f32 %v467, %v515
      %v517 = vpop.f32.mrb[0].mxu0
      %v518 = vpop.f32.mrb[0].mxu0
      %v519 = vadd.f32 %v470, %v518
      %v520 = vpop.f32.mrb[0].mxu0
      %521 = vmatprep.mubr.bf16.mxu0 0
      %522 = vmatmul.mubr.bf16.gmra.mrb[0].mxu0 %v430
      %v523 = vpop.f32.mrb[0].mxu0
      %v524 = vadd.f32 %v475, %v523
      %v525 = vpop.f32.mrb[0].mxu0
      %v526 = vpop.f32.mrb[0].mxu0
      %v527 = vadd.f32 %v478, %v526
      %v528 = vpop.f32.mrb[0].mxu0
      %529 = vdwg.mxu0
      %vm530 = vcmask 523264
      %v531 = vsel %vm530, %v516, 0.0
      %532 = vadd.xlane.f32.xlu0 %v531
      %v533 = vpop.xlane.xlu0 %532
      %v534 = vsel %vm530, %v519, 0.0
      %535 = vadd.xlane.f32.xlu0 %v534
      %v536 = vpop.xlane.xlu0 %535
      %v537 = vsel %vm530, %v524, 0.0
      %538 = vadd.xlane.f32.xlu0 %v537
      %v539 = vpop.xlane.xlu0 %538
      %v540 = vsel %vm530, %v527, 0.0
      %541 = vadd.xlane.f32.xlu0 %v540
      %v542 = vpop.xlane.xlu0 %541
      %v543 = vrcp.pop 64.0
      %v544 = vmul.f32 %v533, %v543
      %v545 = vmul.f32 %v536, %v543
      %v546 = vmul.f32 %v539, %v543
      %v547 = vmul.f32 %v542, %v543
      %v548 = vsub.f32 %v516, %v544
      %v549 = vsub.f32 %v519, %v545
      %v550 = vsub.f32 %v524, %v546
      %v551 = vsub.f32 %v527, %v547
      %v552 = vmul.f32 %v548, %v548
      %v553 = vmul.f32 %v549, %v549
      %v554 = vmul.f32 %v550, %v550
      %v555 = vmul.f32 %v551, %v551
      %v556 = vsel %vm530, %v552, 0.0
      %557 = vadd.xlane.f32.xlu0 %v556
      %v558 = vpop.xlane.xlu0 %557
      %v559 = vsel %vm530, %v553, 0.0
      %560 = vadd.xlane.f32.xlu0 %v559
      %v561 = vpop.xlane.xlu0 %560
      %v562 = vsel %vm530, %v554, 0.0
      %563 = vadd.xlane.f32.xlu0 %v562
      %v564 = vpop.xlane.xlu0 %563
      %v565 = vsel %vm530, %v555, 0.0
      %566 = vadd.xlane.f32.xlu0 %v565
      %v567 = vpop.xlane.xlu0 %566
      %v568 = vmul.f32 %v558, %v543
      %v569 = vmul.f32 %v561, %v543
      %v570 = vmul.f32 %v564, %v543
      %v571 = vmul.f32 %v567, %v543
      %v572 = vadd.f32 %v568, 1e-05
      %v573 = vadd.f32 %v569, 1e-05
      %v574 = vadd.f32 %v570, 1e-05
      %v575 = vadd.f32 %v571, 1e-05
      %v576 = vrsqrt.pop %v572
      %v577 = vrsqrt.pop %v573
      %v578 = vrsqrt.pop %v574
      %v579 = vrsqrt.pop %v575
      %v580 = vmul.f32 %v548, %v576
      %v581 = vmul.f32 %v549, %v577
      %v582 = vmul.f32 %v550, %v578
      %v583 = vmul.f32 %v551, %v579
      %v584 = vld [vmem:[%s212] sm:$0xff]
      %v585 = vld [vmem:[%s212 + $0x8] sm:$0xff]
      %v586 = vld [vmem:[%s212 + $0x10] sm:$0xff]
      %v587 = vld [vmem:[%s212 + $0x18] sm:$0xff]
      %v588 = vadd.f32 %v580, %v584
      %v589 = vadd.f32 %v581, %v585
      %v590 = vadd.f32 %v582, %v586
      %v591 = vadd.f32 %v583, %v587
      %592 = vst.msk [vmem:[%s217] sm:$0xff] %vm530, %v588
      %593 = vst.msk [vmem:[%s217 + $0x8] sm:$0xff] %vm530, %v589
      %594 = vst.msk [vmem:[%s217 + $0x10] sm:$0xff] %vm530, %v590
      %595 = vst.msk [vmem:[%s217 + $0x18] sm:$0xff] %vm530, %v591
      %p596 = scmp.lt.s32.totalorder %s15, 1
      %s597 = scalar_select %p596, %s15, 1
      %s598 = smul.addr %s597, 4
      %s599 = smul.addr %s598, 8
      %s600 = scalar_lea.vmem %s4, %s599
      // Predicated region
      $region37: #{g_forward.12} parent=35 // pred_check
        %p601 = pneg %p127
      $region38: #{g_forward.12} parent=35 // pred_check_branch
        %603 = sbr.rel (%p601) target = $region40
      $region39: #{g_forward.12} parent=35 // pred_region
        _
      $region40: #{g_forward.12} parent=35 // pred_fallthru
        _
    $region36: #{g_forward.12} parent=5 // pred_fallthru
      _
    %p604 = scmp.le.s32.totalorder 2, %s10
    // Predicated region
    $region41: #{g_forward.12} parent=5 // pred_check
      %p605 = pneg %p604
    $region42: #{g_forward.12} parent=5 // pred_check_branch
      %607 = sbr.rel (%p605) target = $region44
    $region43: #{g_forward.12} parent=5 // pred_region
      %s608 = ssub.s32 %s10, 2
      // Predicated region
      $region45: #{g_forward.12} parent=43 // pred_check
        %p609 = pneg %p133
      $region46: #{g_forward.12} parent=43 // pred_check_branch
        %611 = sbr.rel (%p609) target = $region48
      $region47: #{g_forward.12} parent=43 // pred_region
        %p612 = scmp.lt.s32.totalorder %s16, 1
        %s613 = scalar_select %p612, %s16, 1
        %s614 = smul.addr %s613, 4
        %s615 = smul.addr %s614, 8
        %s616 = scalar_lea.vmem %s4, %s615
      $region48: #{g_forward.12} parent=43 // pred_fallthru
        _
    $region44: #{g_forward.12} parent=5 // pred_fallthru
      _
  $region6: #{g_forward.12} parent=0 // loop_footer
    %s14 = sadd.s32 1, %s10
  $region7: #{g_forward.12} parent=0 // loop_footer_branch
    %9 = sbr.rel target = $region3
  $region8: #{g_forward.12} parent=0 // loop_exit
    _

// kernel: tile.13
$region0: #{tile.13}
  #allocation0 [shape = 's32[1]{0}', space=sflag, size = 0x4, scoped, tag = 'scoped memory for tile.13']
  %s0 = inlined_call_operand.vmem [shape: f32[16], index: 0, kind: input, shape index: {}]
  %s1 = inlined_call_operand.vmem [shape: f32[4,16], index: 1, kind: output, shape index: {}]
  // Predicated region
  $region2: #{tile.13} parent=0 // pred_check
    _
  $region3: #{tile.13} parent=0 // pred_check_branch
    %3 = sbr.rel (0) target = $region5
  $region4: #{tile.13} parent=0 // pred_region
    _
  $region5: #{tile.13} parent=0 // pred_fallthru
    _
  %v4 = vld [vmem:[%s0] ss:$0 sm:$0xff]
  %5 = vst [vmem:[%s1] sm:$0xf] %v4

// kernel: tile.0
$region0: #{tile.0}
  %s0 = inlined_call_operand.vmem [shape: f32[4,16], index: 0, kind: input, shape index: {}]
  %s1 = inlined_call_operand.vmem [shape: f32[64,1], index: 1, kind: output, shape index: {}]
  $region1: #{tile.0} parent=0
    #allocation0 [shape = 'u8[4096]{0}', space=vmem, size = 0x1000, scoped, tag = 'scoped mem for input reshape']
    %s3 = sshllo.u32 0, 4
    %v4 = vld [vmem:[%s0] sm:%s3]
    %5 = vst [vmem:[#allocation0] sm:%s3] %v4
    %v6 = vld [vmem:[#allocation0] sm:$0xf]
    %vm7 = vcmask 7168
    %8 = vst.msk [vmem:[%s1] ss:$16 sm:$0x3] %vm7, %v6
    %9 = vst.msk [vmem:[%s1] ss:$16 sm:$0xc] %vm7, %v6
    %v10 = vld [vmem:[#allocation0] sm:$0xf]
    %11 = vrot.lane.b32.xlu0 %v10, 127
    %v12 = vpop.permute.xlu0 %11
    %vm13 = vcmask 7168
    %s14 = scalar_lea.vmem %s1, 1
    %15 = vst.msk [vmem:[%s14] ss:$16 sm:$0x3] %vm13, %v12
    %s16 = scalar_lea.vmem %s1, 1
    %17 = vst.msk [vmem:[%s16] ss:$16 sm:$0xc] %vm13, %v12
    %v18 = vld [vmem:[#allocation0] sm:$0xf]
    %19 = vrot.lane.b32.xlu0 %v18, 126
    %v20 = vpop.permute.xlu0 %19
    %vm21 = vcmask 7168
    %s22 = scalar_lea.vmem %s1, 2
    %23 = vst.msk [vmem:[%s22] ss:$16 sm:$0x3] %vm21, %v20
    %s24 = scalar_lea.vmem %s1, 2
    %25 = vst.msk [vmem:[%s24] ss:$16 sm:$0xc] %vm21, %v20
    %v26 = vld [vmem:[#allocation0] sm:$0xf]
    %27 = vrot.lane.b32.xlu0 %v26, 125
    %v28 = vpop.permute.xlu0 %27
    %vm29 = vcmask 7168
    %s30 = scalar_lea.vmem %s1, 3
    %31 = vst.msk [vmem:[%s30] ss:$16 sm:$0x3] %vm29, %v28
    %s32 = scalar_lea.vmem %s1, 3
    %33 = vst.msk [vmem:[%s32] ss:$16 sm:$0xc] %vm29, %v28
    %v34 = vld [vmem:[#allocation0] sm:$0xf]
    %35 = vrot.lane.b32.xlu0 %v34, 124
    %v36 = vpop.permute.xlu0 %35
    %vm37 = vcmask 7168
    %s38 = scalar_lea.vmem %s1, 4
    %39 = vst.msk [vmem:[%s38] ss:$16 sm:$0x3] %vm37, %v36
    %s40 = scalar_lea.vmem %s1, 4
    %41 = vst.msk [vmem:[%s40] ss:$16 sm:$0xc] %vm37, %v36
    %v42 = vld [vmem:[#allocation0] sm:$0xf]
    %43 = vrot.lane.b32.xlu0 %v42, 123
    %v44 = vpop.permute.xlu0 %43
    %vm45 = vcmask 7168
    %s46 = scalar_lea.vmem %s1, 5
    %47 = vst.msk [vmem:[%s46] ss:$16 sm:$0x3] %vm45, %v44
    %s48 = scalar_lea.vmem %s1, 5
    %49 = vst.msk [vmem:[%s48] ss:$16 sm:$0xc] %vm45, %v44
    %v50 = vld [vmem:[#allocation0] sm:$0xf]
    %51 = vrot.lane.b32.xlu0 %v50, 122
    %v52 = vpop.permute.xlu0 %51
    %vm53 = vcmask 7168
    %s54 = scalar_lea.vmem %s1, 6
    %55 = vst.msk [vmem:[%s54] ss:$16 sm:$0x3] %vm53, %v52
    %s56 = scalar_lea.vmem %s1, 6
    %57 = vst.msk [vmem:[%s56] ss:$16 sm:$0xc] %vm53, %v52
    %v58 = vld [vmem:[#allocation0] sm:$0xf]
    %59 = vrot.lane.b32.xlu0 %v58, 121
    %v60 = vpop.permute.xlu0 %59
    %vm61 = vcmask 7168
    %s62 = scalar_lea.vmem %s1, 7
    %63 = vst.msk [vmem:[%s62] ss:$16 sm:$0x3] %vm61, %v60
    %s64 = scalar_lea.vmem %s1, 7
    %65 = vst.msk [vmem:[%s64] ss:$16 sm:$0xc] %vm61, %v60
    %v66 = vld [vmem:[#allocation0] sm:$0xf]
    %67 = vrot.lane.b32.xlu0 %v66, 120
    %v68 = vpop.permute.xlu0 %67
    %vm69 = vcmask 7168
    %s70 = scalar_lea.vmem %s1, 8
    %71 = vst.msk [vmem:[%s70] ss:$16 sm:$0x3] %vm69, %v68
    %s72 = scalar_lea.vmem %s1, 8
    %73 = vst.msk [vmem:[%s72] ss:$16 sm:$0xc] %vm69, %v68
    %v74 = vld [vmem:[#allocation0] sm:$0xf]
    %75 = vrot.lane.b32.xlu0 %v74, 119
    %v76 = vpop.permute.xlu0 %75
    %vm77 = vcmask 7168
    %s78 = scalar_lea.vmem %s1, 9
    %79 = vst.msk [vmem:[%s78] ss:$16 sm:$0x3] %vm77, %v76
    %s80 = scalar_lea.vmem %s1, 9
    %81 = vst.msk [vmem:[%s80] ss:$16 sm:$0xc] %vm77, %v76
    %v82 = vld [vmem:[#allocation0] sm:$0xf]
    %83 = vrot.lane.b32.xlu0 %v82, 118
    %v84 = vpop.permute.xlu0 %83
    %vm85 = vcmask 7168
    %s86 = scalar_lea.vmem %s1, 10
    %87 = vst.msk [vmem:[%s86] ss:$16 sm:$0x3] %vm85, %v84
    %s88 = scalar_lea.vmem %s1, 10
    %89 = vst.msk [vmem:[%s88] ss:$16 sm:$0xc] %vm85, %v84
    %v90 = vld [vmem:[#allocation0] sm:$0xf]
    %91 = vrot.lane.b32.xlu0 %v90, 117
    %v92 = vpop.permute.xlu0 %91
    %vm93 = vcmask 7168
    %s94 = scalar_lea.vmem %s1, 11
    %95 = vst.msk [vmem:[%s94] ss:$16 sm:$0x3] %vm93, %v92
    %s96 = scalar_lea.vmem %s1, 11
    %97 = vst.msk [vmem:[%s96] ss:$16 sm:$0xc] %vm93, %v92
    %v98 = vld [vmem:[#allocation0] sm:$0xf]
    %99 = vrot.lane.b32.xlu0 %v98, 116
    %v100 = vpop.permute.xlu0 %99
    %vm101 = vcmask 7168
    %s102 = scalar_lea.vmem %s1, 12
    %103 = vst.msk [vmem:[%s102] ss:$16 sm:$0x3] %vm101, %v100
    %s104 = scalar_lea.vmem %s1, 12
    %105 = vst.msk [vmem:[%s104] ss:$16 sm:$0xc] %vm101, %v100
    %v106 = vld [vmem:[#allocation0] sm:$0xf]
    %107 = vrot.lane.b32.xlu0 %v106, 115
    %v108 = vpop.permute.xlu0 %107
    %vm109 = vcmask 7168
    %s110 = scalar_lea.vmem %s1, 13
    %111 = vst.msk [vmem:[%s110] ss:$16 sm:$0x3] %vm109, %v108
    %s112 = scalar_lea.vmem %s1, 13
    %113 = vst.msk [vmem:[%s112] ss:$16 sm:$0xc] %vm109, %v108
    %v114 = vld [vmem:[#allocation0] sm:$0xf]
    %115 = vrot.lane.b32.xlu0 %v114, 114
    %v116 = vpop.permute.xlu0 %115
    %vm117 = vcmask 7168
    %s118 = scalar_lea.vmem %s1, 14
    %119 = vst.msk [vmem:[%s118] ss:$16 sm:$0x3] %vm117, %v116
    %s120 = scalar_lea.vmem %s1, 14
    %121 = vst.msk [vmem:[%s120] ss:$16 sm:$0xc] %vm117, %v116
    %v122 = vld [vmem:[#allocation0] sm:$0xf]
    %123 = vrot.lane.b32.xlu0 %v122, 113
    %v124 = vpop.permute.xlu0 %123
    %vm125 = vcmask 7168
    %s126 = scalar_lea.vmem %s1, 15
    %127 = vst.msk [vmem:[%s126] ss:$16 sm:$0x3] %vm125, %v124
    %s128 = scalar_lea.vmem %s1, 15
    %129 = vst.msk [vmem:[%s128] ss:$16 sm:$0xc] %vm125, %v124

// kernel: g_forward.19
$region0: #{g_forward.19}
  #allocation0 [shape = 'u32[]', space=smem, size = 0x4, offset = 0x4, fixed_abs, tag = 'smem constant byte address 0x4 - core index']
  #allocation1 [shape = 'u32[144,128]{1,0:T(1,128)}', space=vmem, size = 0x12000, scoped, tag = 'internal scratch']
  %s0 = inlined_call_operand.vmem [shape: bf16[2,288,64], index: 0, kind: input, shape index: {}]
  %s1 = inlined_call_operand.vmem [shape: bf16[64,288], index: 1, kind: input, shape index: {}]
  %s2 = inlined_call_operand.vmem [shape: f32[64,1], index: 2, kind: input, shape index: {}]
  %s3 = inlined_call_operand.vmem [shape: f32[2,64,64], index: 3, kind: output, shape index: {}]
  %s4 = sld [smem:[#allocation0]]
  $region45: #{g_forward.19} parent=0
    _
  %s6 = ssub.s32 1, %s4
  %s7 = scalar_select 0, %s6, %s4
  loop: start=0, step=1, limit=4
  $region2: #{g_forward.19} parent=0 // loop_pre_header
    _
  $region3: #{g_forward.19} parent=0 // loop_header
    %s9 = sphi 0, %s13
    %p10 = scmp.ge.s32.totalorder %s9, 4
    %s19 = sphi 0, %s21
    %s22 = sphi 0, %s19
    %s23 = sphi 0, %s22
    %s39 = sphi 0, %s23
    %s43 = sphi 0, %s43
    %s45 = sphi 0, %s43
    %s46 = sphi 0, %s45
    %s60 = sphi 0, %s46
    %s64 = sphi 0, %s64
    %s66 = sphi 0, %s64
    %s67 = sphi 0, %s66
    %s81 = sphi 0, %s67
    %s87 = sphi 0, %s89
    %s90 = sphi 0, %s87
    %s91 = sphi 0, %s90
    %s107 = sphi 0, %s91
  $region4: #{g_forward.19} parent=0 // loop_header_branch
    %12 = sbr.rel (%p10) target = $region8
  $region5: #{g_forward.19} parent=0 // loop_body
    %s14 = ssub.s32 %s9, 1
    %s15 = ssub.s32 %s9, 2
    %s16 = sadd.s32 %s9, 1
    %s17 = ssub.s32 %s9, %s16
    %p18 = scmp.eq.s32.totalorder %s17, 0
    %s20 = sadd.s32 %s19, 1
    %s21 = scalar_select %p18, %s19, %s20
    %p24 = pneg %p18
    %p25 = scmp.eq.s32.totalorder %s9, 1
    %p26 = por %p24, %p25
    %p27 = scmp.ne.s32.totalorder %s19, %s22
    %p28 = scmp.eq.s32.totalorder %s9, 0
    %p29 = por %p27, %p28
    %p30 = scmp.ne.s32.totalorder %s19, %s22
    %p31 = scmp.eq.s32.totalorder %s14, 1
    %p32 = por %p30, %p31
    %p33 = scmp.ne.s32.totalorder %s22, %s23
    %p34 = scmp.eq.s32.totalorder %s14, 0
    %p35 = por %p33, %p34
    %p36 = scmp.ne.s32.totalorder %s22, %s23
    %p37 = scmp.eq.s32.totalorder %s15, 1
    %p38 = por %p36, %p37
    %p40 = scmp.ne.s32.totalorder %s23, %s39
    %p41 = scmp.eq.s32.totalorder %s15, 0
    %p42 = por %p40, %p41
    %s44 = sadd.s32 %s43, 1
    %p47 = scmp.eq.s32.totalorder %s9, 1
    %p48 = scmp.ne.s32.totalorder %s43, %s45
    %p49 = scmp.eq.s32.totalorder %s9, 0
    %p50 = por %p48, %p49
    %p51 = scmp.ne.s32.totalorder %s43, %s45
    %p52 = scmp.eq.s32.totalorder %s14, 1
    %p53 = por %p51, %p52
    %p54 = scmp.ne.s32.totalorder %s45, %s46
    %p55 = scmp.eq.s32.totalorder %s14, 0
    %p56 = por %p54, %p55
    %p57 = scmp.ne.s32.totalorder %s45, %s46
    %p58 = scmp.eq.s32.totalorder %s15, 1
    %p59 = por %p57, %p58
    %p61 = scmp.ne.s32.totalorder %s46, %s60
    %p62 = scmp.eq.s32.totalorder %s15, 0
    %p63 = por %p61, %p62
    %s65 = sadd.s32 %s64, 1
    %p68 = scmp.eq.s32.totalorder %s9, 1
    %p69 = scmp.ne.s32.totalorder %s64, %s66
    %p70 = scmp.eq.s32.totalorder %s9, 0
    %p71 = por %p69, %p70
    %p72 = scmp.ne.s32.totalorder %s64, %s66
    %p73 = scmp.eq.s32.totalorder %s14, 1
    %p74 = por %p72, %p73
    %p75 = scmp.ne.s32.totalorder %s66, %s67
    %p76 = scmp.eq.s32.totalorder %s14, 0
    %p77 = por %p75, %p76
    %p78 = scmp.ne.s32.totalorder %s66, %s67
    %p79 = scmp.eq.s32.totalorder %s15, 1
    %p80 = por %p78, %p79
    %p82 = scmp.ne.s32.totalorder %s67, %s81
    %p83 = scmp.eq.s32.totalorder %s15, 0
    %p84 = por %p82, %p83
    %s85 = ssub.s32 %s9, %s16
    %p86 = scmp.eq.s32.totalorder %s85, 0
    %s88 = sadd.s32 %s87, 1
    %s89 = scalar_select %p86, %s87, %s88
    %p92 = pneg %p86
    %p93 = scmp.eq.s32.totalorder %s9, 1
    %p94 = por %p92, %p93
    %p95 = scmp.ne.s32.totalorder %s87, %s90
    %p96 = scmp.eq.s32.totalorder %s9, 0
    %p97 = por %p95, %p96
    %p98 = scmp.ne.s32.totalorder %s87, %s90
    %p99 = scmp.eq.s32.totalorder %s14, 1
    %p100 = por %p98, %p99
    %p101 = scmp.ne.s32.totalorder %s90, %s91
    %p102 = scmp.eq.s32.totalorder %s14, 0
    %p103 = por %p101, %p102
    %p104 = scmp.ne.s32.totalorder %s90, %s91
    %p105 = scmp.eq.s32.totalorder %s15, 1
    %p106 = por %p104, %p105
    %p108 = scmp.ne.s32.totalorder %s91, %s107
    %p109 = scmp.eq.s32.totalorder %s15, 0
    %p110 = por %p108, %p109
    %p111 = scmp.le.s32.totalorder 1, %s9
    %p112 = scmp.lt.s32.totalorder %s9, 3
    %p113 = pnand %p111, %p112
    %p114 = pneg %p113
    // Predicated region
    $region9: #{g_forward.19} parent=5 // pred_check
      _
    $region10: #{g_forward.19} parent=5 // pred_check_branch
      %116 = sbr.rel (%p113) target = $region12
    $region11: #{g_forward.19} parent=5 // pred_region
      %s117 = ssub.s32 %s9, 1
      // Predicated region
      $region13: #{g_forward.19} parent=11 // pred_check
        %p118 = pneg %p56
      $region14: #{g_forward.19} parent=11 // pred_check_branch
        %120 = sbr.rel (%p118) target = $region16
      $region15: #{g_forward.19} parent=11 // pred_region
        _
      $region16: #{g_forward.19} parent=11 // pred_fallthru
        _
      // Predicated region
      $region17: #{g_forward.19} parent=11 // pred_check
        %p121 = pneg %p77
      $region18: #{g_forward.19} parent=11 // pred_check_branch
        %123 = sbr.rel (%p121) target = $region20
      $region19: #{g_forward.19} parent=11 // pred_region
        _
      $region20: #{g_forward.19} parent=11 // pred_fallthru
        _
    $region12: #{g_forward.19} parent=5 // pred_fallthru
      _
    %p124 = scmp.lt.s32.totalorder %s9, 2
    // Predicated region
    $region21: #{g_forward.19} parent=5 // pred_check
      %p125 = pneg %p124
    $region22: #{g_forward.19} parent=5 // pred_check_branch
      %127 = sbr.rel (%p125) target = $region24
    $region23: #{g_forward.19} parent=5 // pred_region
      // Predicated region
      $region25: #{g_forward.19} parent=23 // pred_check
        %p128 = pneg %p29
      $region26: #{g_forward.19} parent=23 // pred_check_branch
        %130 = sbr.rel (%p128) target = $region28
      $region27: #{g_forward.19} parent=23 // pred_region
        %p131 = scmp.lt.s32.totalorder %s9, 1
        %s132 = scalar_select %p131, %s9, 1
        %s133 = smul.addr %s132, 36
        %s134 = smul.addr %s133, 4
        %s135 = scalar_lea.vmem %s0, %s134
      $region28: #{g_forward.19} parent=23 // pred_fallthru
        _
    $region24: #{g_forward.19} parent=5 // pred_fallthru
      _
    %p136 = scmp.le.s32.totalorder 1, %s9
    %p137 = scmp.lt.s32.totalorder %s9, 3
    %p138 = pnand %p136, %p137
    %p139 = pneg %p138
    // Predicated region
    $region29: #{g_forward.19} parent=5 // pred_check
      _
    $region30: #{g_forward.19} parent=5 // pred_check_branch
      %141 = sbr.rel (%p138) target = $region32
    $region31: #{g_forward.19} parent=5 // pred_region
      %s142 = ssub.s32 %s9, 1
      %p143 = scmp.lt.s32.totalorder %s14, 1
      %s144 = scalar_select %p143, %s14, 1
      %s145 = smul.addr %s144, 36
      %s146 = smul.addr %s145, 4
      %s147 = scalar_lea.vmem %s0, %s146
      %p148 = pneg %p35
      %p149 = pneg %p32
      %p150 = pneg %p56
      %p151 = pneg %p53
      %p152 = pneg %p77
      %p153 = pneg %p74
      %p154 = pneg %p103
      %p155 = pneg %p100
      %p156 = scmp.lt.s32.totalorder %s14, 1
      %s157 = scalar_select %p156, %s14, 1
      %s158 = smul.addr %s157, 8
      %s159 = smul.addr %s158, 8
      %s160 = scalar_lea.vmem %s3, %s159
      %p161 = scmp.lt.s32.totalorder %s14, 1
      %s162 = scalar_select %p161, %s14, 1
      %s163 = smul.addr %s162, 36
      %s164 = smul.addr %s163, 4
      %s165 = scalar_lea.vmem %s0, %s164
      %p166 = scmp.lt.s32.totalorder %s14, 1
      %s167 = scalar_select %p166, %s14, 1
      %s168 = smul.addr %s167, 8
      %s169 = smul.addr %s168, 8
      %s170 = scalar_lea.vmem %s3, %s169
      %v172 = vld [vmem:[%s1] sm:$0xff]
      %v173 = vld [vmem:[%s1 + $0x8] sm:$0xf]
      %v174 = vld [vmem:[%s1 + $0xc] sm:$0xff]
      %v175 = vld [vmem:[%s1 + $0x14] sm:$0xf]
      %v176 = vld [vmem:[%s1 + $0x18] sm:$0xff]
      %v177 = vld [vmem:[%s1 + $0x20] sm:$0xf]
      %v178 = vld [vmem:[%s1 + $0x24] sm:$0xff]
      %v179 = vld [vmem:[%s1 + $0x2c] sm:$0xf]
      %v180 = vld [vmem:[%s1 + $0x30] sm:$0xff]
      %v181 = vld [vmem:[%s1 + $0x38] sm:$0xf]
      %v182 = vld [vmem:[%s1 + $0x3c] sm:$0xff]
      %v183 = vld [vmem:[%s1 + $0x44] sm:$0xf]
      %v184 = vld [vmem:[%s1 + $0x48] sm:$0xff]
      %v185 = vld [vmem:[%s1 + $0x50] sm:$0xf]
      %v186 = vld [vmem:[%s1 + $0x54] sm:$0xff]
      %v187 = vld [vmem:[%s1 + $0x5c] sm:$0xf]
      %v188 = vld [vmem:[%s165] sm:$0xf]
      %v189 = vld [vmem:[%s165 + $0x4] sm:$0xf]
      %v190 = vld [vmem:[%s165 + $0x8] sm:$0xf]
      %v191 = vld [vmem:[%s165 + $0xc] sm:$0xf]
      %v192 = vld [vmem:[%s165 + $0x10] sm:$0xf]
      %v193 = vld [vmem:[%s165 + $0x14] sm:$0xf]
      %v194 = vld [vmem:[%s165 + $0x18] sm:$0xf]
      %v195 = vld [vmem:[%s165 + $0x1c] sm:$0xf]
      %v196 = vld [vmem:[%s165 + $0x20] sm:$0xf]
      %v197 = vld [vmem:[%s165 + $0x24] sm:$0xf]
      %v198 = vld [vmem:[%s165 + $0x28] sm:$0xf]
      %v199 = vld [vmem:[%s165 + $0x2c] sm:$0xf]
      %v200 = vld [vmem:[%s165 + $0x30] sm:$0xf]
      %v201 = vld [vmem:[%s165 + $0x34] sm:$0xf]
      %v202 = vld [vmem:[%s165 + $0x38] sm:$0xf]
      %v203 = vld [vmem:[%s165 + $0x3c] sm:$0xf]
      %v204 = vld [vmem:[%s165 + $0x40] sm:$0xf]
      %v205 = vld [vmem:[%s165 + $0x44] sm:$0xf]
      %v206 = vld [vmem:[%s165 + $0x48] sm:$0xf]
      %v207 = vld [vmem:[%s165 + $0x4c] sm:$0xf]
      %v208 = vld [vmem:[%s165 + $0x50] sm:$0xf]
      %v209 = vld [vmem:[%s165 + $0x54] sm:$0xf]
      %v210 = vld [vmem:[%s165 + $0x58] sm:$0xf]
      %v211 = vld [vmem:[%s165 + $0x5c] sm:$0xf]
      %v212 = vld [vmem:[%s165 + $0x60] sm:$0xf]
      %v213 = vld [vmem:[%s165 + $0x64] sm:$0xf]
      %v214 = vld [vmem:[%s165 + $0x68] sm:$0xf]
      %v215 = vld [vmem:[%s165 + $0x6c] sm:$0xf]
      %v216 = vld [vmem:[%s165 + $0x70] sm:$0xf]
      %v217 = vld [vmem:[%s165 + $0x74] sm:$0xf]
      %v218 = vld [vmem:[%s165 + $0x78] sm:$0xf]
      %v219 = vld [vmem:[%s165 + $0x7c] sm:$0xf]
      %v220 = vld [vmem:[%s165 + $0x80] sm:$0xf]
      %v221 = vld [vmem:[%s165 + $0x84] sm:$0xf]
      %v222 = vld [vmem:[%s165 + $0x88] sm:$0xf]
      %v223 = vld [vmem:[%s165 + $0x8c] sm:$0xf]
      %v224 = vld [vmem:[%s2] sm:$0xff]
      %v225 = vld [vmem:[%s2 + $0x8] sm:$0xff]
      %v226 = vld [vmem:[%s2 + $0x10] sm:$0xff]
      %v227 = vld [vmem:[%s2 + $0x18] sm:$0xff]
      %v228 = vld [vmem:[%s2 + $0x20] sm:$0xff]
      %v229 = vld [vmem:[%s2 + $0x28] sm:$0xff]
      %v230 = vld [vmem:[%s2 + $0x30] sm:$0xff]
      %v231 = vld [vmem:[%s2 + $0x38] sm:$0xff]
      %233 = vset.pattern.permute.xlu0 0
      %234 = vperm.xlu0 %233, %v224
      %v235 = vpop.permute.xlu0 %234
      %238 = vset.pattern.permute.xlu0 0
      %239 = vperm.xlu0 %238, %v225
      %v240 = vpop.permute.xlu0 %239
      %243 = vset.pattern.permute.xlu0 0
      %244 = vperm.xlu0 %243, %v226
      %v245 = vpop.permute.xlu0 %244
      %248 = vset.pattern.permute.xlu0 0
      %249 = vperm.xlu0 %248, %v227
      %v250 = vpop.permute.xlu0 %249
      %253 = vset.pattern.permute.xlu0 0
      %254 = vperm.xlu0 %253, %v228
      %v255 = vpop.permute.xlu0 %254
      %258 = vset.pattern.permute.xlu0 0
      %259 = vperm.xlu0 %258, %v229
      %v260 = vpop.permute.xlu0 %259
      %263 = vset.pattern.permute.xlu0 0
      %264 = vperm.xlu0 %263, %v230
      %v265 = vpop.permute.xlu0 %264
      %268 = vset.pattern.permute.xlu0 0
      %269 = vperm.xlu0 %268, %v231
      %v270 = vpop.permute.xlu0 %269
      %v288 = vunpack.c.l.b16 %v172
      %v289 = vunpack.c.h.b16 %v172
      %v290 = vunpack.c.l.b16 %v173
      %v291 = vunpack.c.l.b16 %v174
      %v292 = vunpack.c.h.b16 %v174
      %v293 = vunpack.c.l.b16 %v175
      %v294 = vunpack.c.l.b16 %v176
      %v295 = vunpack.c.h.b16 %v176
      %v296 = vunpack.c.l.b16 %v177
      %v297 = vunpack.c.l.b16 %v178
      %v298 = vunpack.c.h.b16 %v178
      %v299 = vunpack.c.l.b16 %v179
      %v300 = vunpack.c.l.b16 %v180
      %v301 = vunpack.c.h.b16 %v180
      %v302 = vunpack.c.l.b16 %v181
      %v303 = vunpack.c.l.b16 %v182
      %v304 = vunpack.c.h.b16 %v182
      %v305 = vunpack.c.l.b16 %v183
      %v306 = vunpack.c.l.b16 %v184
      %v307 = vunpack.c.h.b16 %v184
      %v308 = vunpack.c.l.b16 %v185
      %v309 = vunpack.c.l.b16 %v186
      %v310 = vunpack.c.h.b16 %v186
      %v311 = vunpack.c.l.b16 %v187
      %v312 = vpack.c.b16 %v291, %v288
      %v313 = vpack.c.b16 %v292, %v289
      %v314 = vpack.c.b16 %v293, %v290
      %v315 = vpack.c.b16 %v297, %v294
      %v316 = vpack.c.b16 %v298, %v295
      %v317 = vpack.c.b16 %v299, %v296
      %v318 = vpack.c.b16 %v303, %v300
      %v319 = vpack.c.b16 %v304, %v301
      %v320 = vpack.c.b16 %v305, %v302
      %v321 = vpack.c.b16 %v309, %v306
      %v322 = vpack.c.b16 %v310, %v307
      %v323 = vpack.c.b16 %v311, %v308
      %v368 = vunpack.c.l.b16 %v188
      %v369 = vunpack.c.l.b16 %v189
      %v370 = vunpack.c.l.b16 %v190
      %v371 = vunpack.c.l.b16 %v191
      %v372 = vunpack.c.l.b16 %v192
      %v373 = vunpack.c.l.b16 %v193
      %v374 = vunpack.c.l.b16 %v194
      %v375 = vunpack.c.l.b16 %v195
      %v376 = vunpack.c.l.b16 %v196
      %v377 = vunpack.c.l.b16 %v197
      %v378 = vunpack.c.l.b16 %v198
      %v379 = vunpack.c.l.b16 %v199
      %v380 = vunpack.c.l.b16 %v200
      %v381 = vunpack.c.l.b16 %v201
      %v382 = vunpack.c.l.b16 %v202
      %v383 = vunpack.c.l.b16 %v203
      %v384 = vunpack.c.l.b16 %v204
      %v385 = vunpack.c.l.b16 %v205
      %v386 = vunpack.c.l.b16 %v206
      %v387 = vunpack.c.l.b16 %v207
      %v388 = vunpack.c.l.b16 %v208
      %v389 = vunpack.c.l.b16 %v209
      %v390 = vunpack.c.l.b16 %v210
      %v391 = vunpack.c.l.b16 %v211
      %v392 = vunpack.c.l.b16 %v212
      %v393 = vunpack.c.l.b16 %v213
      %v394 = vunpack.c.l.b16 %v214
      %v395 = vunpack.c.l.b16 %v215
      %v396 = vunpack.c.l.b16 %v216
      %v397 = vunpack.c.l.b16 %v217
      %v398 = vunpack.c.l.b16 %v218
      %v399 = vunpack.c.l.b16 %v219
      %v400 = vunpack.c.l.b16 %v220
      %v401 = vunpack.c.l.b16 %v221
      %v402 = vunpack.c.l.b16 %v222
      %v403 = vunpack.c.l.b16 %v223
      %v404 = vpack.c.b16 %v369, %v368
      %v405 = vpack.c.b16 %v371, %v370
      %v406 = vpack.c.b16 %v373, %v372
      %v407 = vpack.c.b16 %v375, %v374
      %v408 = vpack.c.b16 %v377, %v376
      %v409 = vpack.c.b16 %v379, %v378
      %v410 = vpack.c.b16 %v381, %v380
      %v411 = vpack.c.b16 %v383, %v382
      %v412 = vpack.c.b16 %v385, %v384
      %v413 = vpack.c.b16 %v387, %v386
      %v414 = vpack.c.b16 %v389, %v388
      %v415 = vpack.c.b16 %v391, %v390
      %v416 = vpack.c.b16 %v393, %v392
      %v417 = vpack.c.b16 %v395, %v394
      %v418 = vpack.c.b16 %v397, %v396
      %v419 = vpack.c.b16 %v399, %v398
      %v420 = vpack.c.b16 %v401, %v400
      %v421 = vpack.c.b16 %v403, %v402
      %vm440 = vcmask 261120
      %v442 = vsel %vm440, %v314, 0
      %v445 = vsel %vm440, %v317, 0
      %v448 = vsel %vm440, %v320, 0
      %v451 = vsel %vm440, %v323, 0
      %453 = vmatprep.subr.bf16.mxu0 0
      %454 = vmatpush1.bf16.msra.mxu0 %v404
      %455 = vmatprep.subr.bf16.mxu0 0
      %456 = vmatpush1.bf16.msra.mxu0 %v405
      %457 = vmatprep.subr.bf16.mxu0 0
      %458 = vmatpush1.bf16.msra.mxu0 %v406
      %459 = vmatprep.subr.bf16.mxu0 0
      %460 = vmatpush1.bf16.msra.mxu0 %v407
      %461 = vmatprep.subr.bf16.mxu0 0
      %462 = vmatpush1.bf16.msra.mxu0 %v408
      %463 = vmatprep.subr.bf16.mxu0 0
      %464 = vmatpush1.bf16.msra.mxu0 %v409
      %465 = vmatprep.subr.bf16.mxu0 0
      %466 = vmatpush1.bf16.msra.mxu0 %v410
      %467 = vmatprep.subr.bf16.mxu0 0
      %468 = vmatpush1.bf16.msra.mxu0 %v411
      %469 = vmatprep.subr.bf16.mxu0 0
      %470 = vmatpush1.bf16.msra.mxu0 %v412
      %471 = vmatprep.subr.bf16.mxu0 0
      %472 = vmatpush1.bf16.msra.mxu0 %v413
      %473 = vmatprep.subr.bf16.mxu0 0
      %474 = vmatpush1.bf16.msra.mxu0 %v414
      %475 = vmatprep.subr.bf16.mxu0 0
      %476 = vmatpush1.bf16.msra.mxu0 %v415
      %477 = vmatprep.subr.bf16.mxu0 0
      %478 = vmatpush1.bf16.msra.mxu0 %v416
      %479 = vmatprep.subr.bf16.mxu0 0
      %480 = vmatpush1.bf16.msra.mxu0 %v417
      %481 = vmatprep.subr.bf16.mxu0 0
      %482 = vmatpush1.bf16.msra.mxu0 %v418
      %483 = vmatprep.subr.bf16.mxu0 0
      %484 = vmatpush1.bf16.msra.mxu0 %v419
      %485 = vmatprep.mubr.bf16.mxu0 %v313
      %486 = vmatmul.mubr.bf16.gmra.mrb[0].mxu0 %v312
      %v487 = vpop.f32.mrb[0].mxu0
      %v488 = vadd.f32 %v235, %v487
      %v489 = vpop.f32.mrb[0].mxu0
      %v490 = vpop.f32.mrb[0].mxu0
      %v491 = vadd.f32 %v240, %v490
      %v492 = vpop.f32.mrb[0].mxu0
      %493 = vmatprep.mubr.bf16.mxu0 %v316
      %494 = vmatmul.mubr.bf16.gmra.mrb[0].mxu0 %v315
      %v495 = vpop.f32.mrb[0].mxu0
      %v496 = vadd.f32 %v245, %v495
      %v497 = vpop.f32.mrb[0].mxu0
      %v498 = vpop.f32.mrb[0].mxu0
      %v499 = vadd.f32 %v250, %v498
      %v500 = vpop.f32.mrb[0].mxu0
      %501 = vmatprep.mubr.bf16.mxu0 %v319
      %502 = vmatmul.mubr.bf16.gmra.mrb[0].mxu0 %v318
      %v503 = vpop.f32.mrb[0].mxu0
      %v504 = vadd.f32 %v255, %v503
      %v505 = vpop.f32.mrb[0].mxu0
      %v506 = vpop.f32.mrb[0].mxu0
      %v507 = vadd.f32 %v260, %v506
      %v508 = vpop.f32.mrb[0].mxu0
      %509 = vmatprep.mubr.bf16.mxu0 %v322
      %510 = vmatmul.mubr.bf16.gmra.mrb[0].mxu0 %v321
      %v511 = vpop.f32.mrb[0].mxu0
      %v512 = vadd.f32 %v265, %v511
      %v513 = vpop.f32.mrb[0].mxu0
      %v514 = vpop.f32.mrb[0].mxu0
      %v515 = vadd.f32 %v270, %v514
      %v516 = vpop.f32.mrb[0].mxu0
      %517 = vdwg.mxu0
      %518 = vmatprep.subr.bf16.mxu0 0
      %519 = vmatpush1.bf16.msra.mxu0 %v420
      %520 = vmatprep.subr.bf16.mxu0 0
      %521 = vmatpush1.bf16.msra.mxu0 %v421
      %522 = vmatprep.subr.bf16.mxu0 0
      %523 = vmatpush1.bf16.msra.mxu0 0
      %524 = vmatprep.subr.bf16.mxu0 0
      %525 = vmatpush1.bf16.msra.mxu0 0
      %526 = vmatprep.subr.bf16.mxu0 0
      %527 = vmatpush1.bf16.msra.mxu0 0
      %528 = vmatprep.subr.bf16.mxu0 0
      %529 = vmatpush1.bf16.msra.mxu0 0
      %530 = vmatprep.subr.bf16.mxu0 0
      %531 = vmatpush1.bf16.msra.mxu0 0
      %532 = vmatprep.subr.bf16.mxu0 0
      %533 = vmatpush1.bf16.msra.mxu0 0
      %534 = vmatprep.subr.bf16.mxu0 0
      %535 = vmatpush1.bf16.msra.mxu0 0
      %536 = vmatprep.subr.bf16.mxu0 0
      %537 = vmatpush1.bf16.msra.mxu0 0
      %538 = vmatprep.subr.bf16.mxu0 0
      %539 = vmatpush1.bf16.msra.mxu0 0
      %540 = vmatprep.subr.bf16.mxu0 0
      %541 = vmatpush1.bf16.msra.mxu0 0
      %542 = vmatprep.subr.bf16.mxu0 0
      %543 = vmatpush1.bf16.msra.mxu0 0
      %544 = vmatprep.subr.bf16.mxu0 0
      %545 = vmatpush1.bf16.msra.mxu0 0
      %546 = vmatprep.subr.bf16.mxu0 0
      %547 = vmatpush1.bf16.msra.mxu0 0
      %548 = vmatprep.subr.bf16.mxu0 0
      %549 = vmatpush1.bf16.msra.mxu0 0
      %550 = vmatprep.mubr.bf16.mxu0 0
      %551 = vmatmul.mubr.bf16.gmra.mrb[0].mxu0 %v442
      %v552 = vpop.f32.mrb[0].mxu0
      %v553 = vadd.f32 %v488, %v552
      %v554 = vpop.f32.mrb[0].mxu0
      %v555 = vpop.f32.mrb[0].mxu0
      %v556 = vadd.f32 %v491, %v555
      %v557 = vpop.f32.mrb[0].mxu0
      %558 = vmatprep.mubr.bf16.mxu0 0
      %559 = vmatmul.mubr.bf16.gmra.mrb[0].mxu0 %v445
      %v560 = vpop.f32.mrb[0].mxu0
      %v561 = vadd.f32 %v496, %v560
      %v562 = vpop.f32.mrb[0].mxu0
      %v563 = vpop.f32.mrb[0].mxu0
      %v564 = vadd.f32 %v499, %v563
      %v565 = vpop.f32.mrb[0].mxu0
      %566 = vmatprep.mubr.bf16.mxu0 0
      %567 = vmatmul.mubr.bf16.gmra.mrb[0].mxu0 %v448
      %v568 = vpop.f32.mrb[0].mxu0
      %v569 = vadd.f32 %v504, %v568
      %v570 = vpop.f32.mrb[0].mxu0
      %v571 = vpop.f32.mrb[0].mxu0
      %v572 = vadd.f32 %v507, %v571
      %v573 = vpop.f32.mrb[0].mxu0
      %574 = vmatprep.mubr.bf16.mxu0 0
      %575 = vmatmul.mubr.bf16.gmra.mrb[0].mxu0 %v451
      %v576 = vpop.f32.mrb[0].mxu0
      %v577 = vadd.f32 %v512, %v576
      %v578 = vpop.f32.mrb[0].mxu0
      %v579 = vpop.f32.mrb[0].mxu0
      %v580 = vadd.f32 %v515, %v579
      %v581 = vpop.f32.mrb[0].mxu0
      %582 = vdwg.mxu0
      %vm583 = vcmask 523264
      %v584 = vsel %vm583, %v553, 0.0
      %585 = vadd.xlane.f32.xlu0 %v584
      %v586 = vpop.xlane.xlu0 %585
      %v587 = vsel %vm583, %v556, 0.0
      %588 = vadd.xlane.f32.xlu0 %v587
      %v589 = vpop.xlane.xlu0 %588
      %v590 = vsel %vm583, %v561, 0.0
      %591 = vadd.xlane.f32.xlu0 %v590
      %v592 = vpop.xlane.xlu0 %591
      %v593 = vsel %vm583, %v564, 0.0
      %594 = vadd.xlane.f32.xlu0 %v593
      %v595 = vpop.xlane.xlu0 %594
      %v596 = vsel %vm583, %v569, 0.0
      %597 = vadd.xlane.f32.xlu0 %v596
      %v598 = vpop.xlane.xlu0 %597
      %v599 = vsel %vm583, %v572, 0.0
      %600 = vadd.xlane.f32.xlu0 %v599
      %v601 = vpop.xlane.xlu0 %600
      %v602 = vsel %vm583, %v577, 0.0
      %603 = vadd.xlane.f32.xlu0 %v602
      %v604 = vpop.xlane.xlu0 %603
      %v605 = vsel %vm583, %v580, 0.0
      %606 = vadd.xlane.f32.xlu0 %v605
      %v607 = vpop.xlane.xlu0 %606
      %v608 = vadd.f32 %v586, %v592
      %v609 = vadd.f32 %v589, %v595
      %v610 = vadd.f32 %v608, %v598
      %v611 = vadd.f32 %v609, %v601
      %v612 = vadd.f32 %v610, %v604
      %v613 = vadd.f32 %v611, %v607
      %v614 = vrcp.pop 256.0
      %v615 = vmul.f32 %v612, %v614
      %v616 = vmul.f32 %v613, %v614
      %618 = vset.pattern.permute.xlu0 0
      %619 = vperm.xlu0 %618, %v615
      %v620 = vpop.permute.xlu0 %619
      %623 = vset.pattern.permute.xlu0 0
      %624 = vperm.xlu0 %623, %v616
      %v625 = vpop.permute.xlu0 %624
      %v627 = vsub.f32 %v553, %v620
      %v628 = vsub.f32 %v556, %v625
      %v629 = vsub.f32 %v561, %v620
      %v630 = vsub.f32 %v564, %v625
      %v631 = vsub.f32 %v569, %v620
      %v632 = vsub.f32 %v572, %v625
      %v633 = vsub.f32 %v577, %v620
      %v634 = vsub.f32 %v580, %v625
      %v635 = vmul.f32 %v627, %v627
      %v636 = vmul.f32 %v628, %v628
      %v637 = vmul.f32 %v629, %v629
      %v638 = vmul.f32 %v630, %v630
      %v639 = vmul.f32 %v631, %v631
      %v640 = vmul.f32 %v632, %v632
      %v641 = vmul.f32 %v633, %v633
      %v642 = vmul.f32 %v634, %v634
      %v643 = vsel %vm583, %v635, 0.0
      %644 = vadd.xlane.f32.xlu0 %v643
      %v645 = vpop.xlane.xlu0 %644
      %v646 = vsel %vm583, %v636, 0.0
      %647 = vadd.xlane.f32.xlu0 %v646
      %v648 = vpop.xlane.xlu0 %647
      %v649 = vsel %vm583, %v637, 0.0
      %650 = vadd.xlane.f32.xlu0 %v649
      %v651 = vpop.xlane.xlu0 %650
      %v652 = vsel %vm583, %v638, 0.0
      %653 = vadd.xlane.f32.xlu0 %v652
      %v654 = vpop.xlane.xlu0 %653
      %v655 = vsel %vm583, %v639, 0.0
      %656 = vadd.xlane.f32.xlu0 %v655
      %v657 = vpop.xlane.xlu0 %656
      %v658 = vsel %vm583, %v640, 0.0
      %659 = vadd.xlane.f32.xlu0 %v658
      %v660 = vpop.xlane.xlu0 %659
      %v661 = vsel %vm583, %v641, 0.0
      %662 = vadd.xlane.f32.xlu0 %v661
      %v663 = vpop.xlane.xlu0 %662
      %v664 = vsel %vm583, %v642, 0.0
      %665 = vadd.xlane.f32.xlu0 %v664
      %v666 = vpop.xlane.xlu0 %665
      %v667 = vadd.f32 %v645, %v651
      %v668 = vadd.f32 %v648, %v654
      %v669 = vadd.f32 %v667, %v657
      %v670 = vadd.f32 %v668, %v660
      %v671 = vadd.f32 %v669, %v663
      %v672 = vadd.f32 %v670, %v666
      %v673 = vmul.f32 %v671, %v614
      %v674 = vmul.f32 %v672, %v614
      %v675 = vadd.f32 %v673, 1e-05
      %v676 = vadd.f32 %v674, 1e-05
      %v677 = vrsqrt.pop %v675
      %v678 = vrsqrt.pop %v676
      %680 = vset.pattern.permute.xlu0 0
      %681 = vperm.xlu0 %680, %v677
      %v682 = vpop.permute.xlu0 %681
      %685 = vset.pattern.permute.xlu0 0
      %686 = vperm.xlu0 %685, %v678
      %v687 = vpop.permute.xlu0 %686
      %v689 = vmul.f32 %v627, %v682
      %v690 = vmul.f32 %v628, %v687
      %v691 = vmul.f32 %v629, %v682
      %v692 = vmul.f32 %v630, %v687
      %v693 = vmul.f32 %v631, %v682
      %v694 = vmul.f32 %v632, %v687
      %v695 = vmul.f32 %v633, %v682
      %v696 = vmul.f32 %v634, %v687
      %vm697 = vcmp.ge.f32.partialorder %v689, 0.0
      %vm698 = vcmp.ge.f32.partialorder %v690, 0.0
      %vm699 = vcmp.ge.f32.partialorder %v691, 0.0
      %vm700 = vcmp.ge.f32.partialorder %v692, 0.0
      %vm701 = vcmp.ge.f32.partialorder %v693, 0.0
      %vm702 = vcmp.ge.f32.partialorder %v694, 0.0
      %vm703 = vcmp.ge.f32.partialorder %v695, 0.0
      %vm704 = vcmp.ge.f32.partialorder %v696, 0.0
      %v705 = vmul.f32 %v689, 0.2
      %v706 = vmul.f32 %v690, 0.2
      %v707 = vmul.f32 %v691, 0.2
      %v708 = vmul.f32 %v692, 0.2
      %v709 = vmul.f32 %v693, 0.2
      %v710 = vmul.f32 %v694, 0.2
      %v711 = vmul.f32 %v695, 0.2
      %v712 = vmul.f32 %v696, 0.2
      %v713 = vsel %vm697, %v689, %v705
      %v714 = vsel %vm698, %v690, %v706
      %v715 = vsel %vm699, %v691, %v707
      %v716 = vsel %vm700, %v692, %v708
      %v717 = vsel %vm701, %v693, %v709
      %v718 = vsel %vm702, %v694, %v710
      %v719 = vsel %vm703, %v695, %v711
      %v720 = vsel %vm704, %v696, %v712
      %721 = vst.msk [vmem:[%s170] sm:$0xff] %vm583, %v713
      %722 = vst.msk [vmem:[%s170 + $0x8] sm:$0xff] %vm583, %v714
      %723 = vst.msk [vmem:[%s170 + $0x10] sm:$0xff] %vm583, %v715
      %724 = vst.msk [vmem:[%s170 + $0x18] sm:$0xff] %vm583, %v716
      %725 = vst.msk [vmem:[%s170 + $0x20] sm:$0xff] %vm583, %v717
      %726 = vst.msk [vmem:[%s170 + $0x28] sm:$0xff] %vm583, %v718
      %727 = vst.msk [vmem:[%s170 + $0x30] sm:$0xff] %vm583, %v719
      %728 = vst.msk [vmem:[%s170 + $0x38] sm:$0xff] %vm583, %v720
      %p729 = scmp.lt.s32.totalorder %s14, 1
      %s730 = scalar_select %p729, %s14, 1
      %s731 = smul.addr %s730, 8
      %s732 = smul.addr %s731, 8
      %s733 = scalar_lea.vmem %s3, %s732
      // Predicated region
      $region33: #{g_forward.19} parent=31 // pred_check
        %p734 = pneg %p100
      $region34: #{g_forward.19} parent=31 // pred_check_branch
        %736 = sbr.rel (%p734) target = $region36
      $region35: #{g_forward.19} parent=31 // pred_region
        _
      $region36: #{g_forward.19} parent=31 // pred_fallthru
        _
    $region32: #{g_forward.19} parent=5 // pred_fallthru
      _
    %p737 = scmp.le.s32.totalorder 2, %s9
    // Predicated region
    $region37: #{g_forward.19} parent=5 // pred_check
      %p738 = pneg %p737
    $region38: #{g_forward.19} parent=5 // pred_check_branch
      %740 = sbr.rel (%p738) target = $region40
    $region39: #{g_forward.19} parent=5 // pred_region
      %s741 = ssub.s32 %s9, 2
      // Predicated region
      $region41: #{g_forward.19} parent=39 // pred_check
        %p742 = pneg %p106
      $region42: #{g_forward.19} parent=39 // pred_check_branch
        %744 = sbr.rel (%p742) target = $region44
      $region43: #{g_forward.19} parent=39 // pred_region
        %p745 = scmp.lt.s32.totalorder %s15, 1
        %s746 = scalar_select %p745, %s15, 1
        %s747 = smul.addr %s746, 8
        %s748 = smul.addr %s747, 8
        %s749 = scalar_lea.vmem %s3, %s748
      $region44: #{g_forward.19} parent=39 // pred_fallthru
        _
    $region40: #{g_forward.19} parent=5 // pred_fallthru
      _
  $region6: #{g_forward.19} parent=0 // loop_footer
    %s13 = sadd.s32 1, %s9
  $region7: #{g_forward.19} parent=0 // loop_footer_branch
    %8 = sbr.rel target = $region3
  $region8: #{g_forward.19} parent=0 // loop_exit
    _

// kernel: tile.18
$region0: #{tile.18}
  #allocation0 [shape = 's32[1]{0}', space=sflag, size = 0x4, scoped, tag = 'scoped memory for tile.18']
  %s0 = inlined_call_operand.vmem [shape: f32[8], index: 0, kind: input, shape index: {}]
  %s1 = inlined_call_operand.vmem [shape: f32[4,8], index: 1, kind: output, shape index: {}]
  // Predicated region
  $region2: #{tile.18} parent=0 // pred_check
    _
  $region3: #{tile.18} parent=0 // pred_check_branch
    %3 = sbr.rel (0) target = $region5
  $region4: #{tile.18} parent=0 // pred_region
    _
  $region5: #{tile.18} parent=0 // pred_fallthru
    _
  %v4 = vld [vmem:[%s0] ss:$0 sm:$0xff]
  %5 = vst [vmem:[%s1] sm:$0xf] %v4

// kernel: tile.1
$region0: #{tile.1}
  %s0 = inlined_call_operand.vmem [shape: f32[4,8], index: 0, kind: input, shape index: {}]
  %s1 = inlined_call_operand.vmem [shape: f32[32,1], index: 1, kind: output, shape index: {}]
  $region1: #{tile.1} parent=0
    #allocation0 [shape = 'u8[4096]{0}', space=vmem, size = 0x1000, scoped, tag = 'scoped mem for input reshape']
    %s3 = sshllo.u32 0, 4
    %v4 = vld [vmem:[%s0] sm:%s3]
    %5 = vst [vmem:[#allocation0] sm:%s3] %v4
    %v6 = vld [vmem:[#allocation0] sm:$0xf]
    %vm7 = vcmask 7168
    %8 = vst.msk [vmem:[%s1] ss:$8 sm:$0xf] %vm7, %v6
    %v9 = vld [vmem:[#allocation0] sm:$0xf]
    %10 = vrot.lane.b32.xlu0 %v9, 127
    %v11 = vpop.permute.xlu0 %10
    %vm12 = vcmask 7168
    %s13 = scalar_lea.vmem %s1, 1
    %14 = vst.msk [vmem:[%s13] ss:$8 sm:$0xf] %vm12, %v11
    %v15 = vld [vmem:[#allocation0] sm:$0xf]
    %16 = vrot.lane.b32.xlu0 %v15, 126
    %v17 = vpop.permute.xlu0 %16
    %vm18 = vcmask 7168
    %s19 = scalar_lea.vmem %s1, 2
    %20 = vst.msk [vmem:[%s19] ss:$8 sm:$0xf] %vm18, %v17
    %v21 = vld [vmem:[#allocation0] sm:$0xf]
    %22 = vrot.lane.b32.xlu0 %v21, 125
    %v23 = vpop.permute.xlu0 %22
    %vm24 = vcmask 7168
    %s25 = scalar_lea.vmem %s1, 3
    %26 = vst.msk [vmem:[%s25] ss:$8 sm:$0xf] %vm24, %v23
    %v27 = vld [vmem:[#allocation0] sm:$0xf]
    %28 = vrot.lane.b32.xlu0 %v27, 124
    %v29 = vpop.permute.xlu0 %28
    %vm30 = vcmask 7168
    %s31 = scalar_lea.vmem %s1, 4
    %32 = vst.msk [vmem:[%s31] ss:$8 sm:$0xf] %vm30, %v29
    %v33 = vld [vmem:[#allocation0] sm:$0xf]
    %34 = vrot.lane.b32.xlu0 %v33, 123
    %v35 = vpop.permute.xlu0 %34
    %vm36 = vcmask 7168
    %s37 = scalar_lea.vmem %s1, 5
    %38 = vst.msk [vmem:[%s37] ss:$8 sm:$0xf] %vm36, %v35
    %v39 = vld [vmem:[#allocation0] sm:$0xf]
    %40 = vrot.lane.b32.xlu0 %v39, 122
    %v41 = vpop.permute.xlu0 %40
    %vm42 = vcmask 7168
    %s43 = scalar_lea.vmem %s1, 6
    %44 = vst.msk [vmem:[%s43] ss:$8 sm:$0xf] %vm42, %v41
    %v45 = vld [vmem:[#allocation0] sm:$0xf]
    %46 = vrot.lane.b32.xlu0 %v45, 121
    %v47 = vpop.permute.xlu0 %46
    %vm48 = vcmask 7168
    %s49 = scalar_lea.vmem %s1, 7
    %50 = vst.msk [vmem:[%s49] ss:$8 sm:$0xf] %vm48, %v47

// kernel: g_forward.20
$region0: #{g_forward.20}
  #allocation0 [shape = 'u32[]', space=smem, size = 0x4, offset = 0x4, fixed_abs, tag = 'smem constant byte address 0x4 - core index']
  #allocation1 [shape = 'u32[144,128]{1,0:T(1,128)}', space=vmem, size = 0x12000, scoped, tag = 'internal scratch']
  %s0 = inlined_call_operand.vmem [shape: bf16[2,144,256], index: 0, kind: input, shape index: {}]
  %s1 = inlined_call_operand.vmem [shape: bf16[32,144], index: 1, kind: input, shape index: {}]
  %s2 = inlined_call_operand.vmem [shape: f32[32,1], index: 2, kind: input, shape index: {}]
  %s3 = inlined_call_operand.vmem [shape: f32[2,32,256], index: 3, kind: output, shape index: {}]
  %s4 = sld [smem:[#allocation0]]
  $region45: #{g_forward.20} parent=0
    _
  %s6 = ssub.s32 1, %s4
  %s7 = scalar_select 0, %s6, %s4
  loop: start=0, step=1, limit=4
  $region2: #{g_forward.20} parent=0 // loop_pre_header
    _
  $region3: #{g_forward.20} parent=0 // loop_header
    %s9 = sphi 0, %s13
    %p10 = scmp.ge.s32.totalorder %s9, 4
    %s19 = sphi 0, %s21
    %s22 = sphi 0, %s19
    %s23 = sphi 0, %s22
    %s39 = sphi 0, %s23
    %s43 = sphi 0, %s43
    %s45 = sphi 0, %s43
    %s46 = sphi 0, %s45
    %s60 = sphi 0, %s46
    %s64 = sphi 0, %s64
    %s66 = sphi 0, %s64
    %s67 = sphi 0, %s66
    %s81 = sphi 0, %s67
    %s87 = sphi 0, %s89
    %s90 = sphi 0, %s87
    %s91 = sphi 0, %s90
    %s107 = sphi 0, %s91
  $region4: #{g_forward.20} parent=0 // loop_header_branch
    %12 = sbr.rel (%p10) target = $region8
  $region5: #{g_forward.20} parent=0 // loop_body
    %s14 = ssub.s32 %s9, 1
    %s15 = ssub.s32 %s9, 2
    %s16 = sadd.s32 %s9, 1
    %s17 = ssub.s32 %s9, %s16
    %p18 = scmp.eq.s32.totalorder %s17, 0
    %s20 = sadd.s32 %s19, 1
    %s21 = scalar_select %p18, %s19, %s20
    %p24 = pneg %p18
    %p25 = scmp.eq.s32.totalorder %s9, 1
    %p26 = por %p24, %p25
    %p27 = scmp.ne.s32.totalorder %s19, %s22
    %p28 = scmp.eq.s32.totalorder %s9, 0
    %p29 = por %p27, %p28
    %p30 = scmp.ne.s32.totalorder %s19, %s22
    %p31 = scmp.eq.s32.totalorder %s14, 1
    %p32 = por %p30, %p31
    %p33 = scmp.ne.s32.totalorder %s22, %s23
    %p34 = scmp.eq.s32.totalorder %s14, 0
    %p35 = por %p33, %p34
    %p36 = scmp.ne.s32.totalorder %s22, %s23
    %p37 = scmp.eq.s32.totalorder %s15, 1
    %p38 = por %p36, %p37
    %p40 = scmp.ne.s32.totalorder %s23, %s39
    %p41 = scmp.eq.s32.totalorder %s15, 0
    %p42 = por %p40, %p41
    %s44 = sadd.s32 %s43, 1
    %p47 = scmp.eq.s32.totalorder %s9, 1
    %p48 = scmp.ne.s32.totalorder %s43, %s45
    %p49 = scmp.eq.s32.totalorder %s9, 0
    %p50 = por %p48, %p49
    %p51 = scmp.ne.s32.totalorder %s43, %s45
    %p52 = scmp.eq.s32.totalorder %s14, 1
    %p53 = por %p51, %p52
    %p54 = scmp.ne.s32.totalorder %s45, %s46
    %p55 = scmp.eq.s32.totalorder %s14, 0
    %p56 = por %p54, %p55
    %p57 = scmp.ne.s32.totalorder %s45, %s46
    %p58 = scmp.eq.s32.totalorder %s15, 1
    %p59 = por %p57, %p58
    %p61 = scmp.ne.s32.totalorder %s46, %s60
    %p62 = scmp.eq.s32.totalorder %s15, 0
    %p63 = por %p61, %p62
    %s65 = sadd.s32 %s64, 1
    %p68 = scmp.eq.s32.totalorder %s9, 1
    %p69 = scmp.ne.s32.totalorder %s64, %s66
    %p70 = scmp.eq.s32.totalorder %s9, 0
    %p71 = por %p69, %p70
    %p72 = scmp.ne.s32.totalorder %s64, %s66
    %p73 = scmp.eq.s32.totalorder %s14, 1
    %p74 = por %p72, %p73
    %p75 = scmp.ne.s32.totalorder %s66, %s67
    %p76 = scmp.eq.s32.totalorder %s14, 0
    %p77 = por %p75, %p76
    %p78 = scmp.ne.s32.totalorder %s66, %s67
    %p79 = scmp.eq.s32.totalorder %s15, 1
    %p80 = por %p78, %p79
    %p82 = scmp.ne.s32.totalorder %s67, %s81
    %p83 = scmp.eq.s32.totalorder %s15, 0
    %p84 = por %p82, %p83
    %s85 = ssub.s32 %s9, %s16
    %p86 = scmp.eq.s32.totalorder %s85, 0
    %s88 = sadd.s32 %s87, 1
    %s89 = scalar_select %p86, %s87, %s88
    %p92 = pneg %p86
    %p93 = scmp.eq.s32.totalorder %s9, 1
    %p94 = por %p92, %p93
    %p95 = scmp.ne.s32.totalorder %s87, %s90
    %p96 = scmp.eq.s32.totalorder %s9, 0
    %p97 = por %p95, %p96
    %p98 = scmp.ne.s32.totalorder %s87, %s90
    %p99 = scmp.eq.s32.totalorder %s14, 1
    %p100 = por %p98, %p99
    %p101 = scmp.ne.s32.totalorder %s90, %s91
    %p102 = scmp.eq.s32.totalorder %s14, 0
    %p103 = por %p101, %p102
    %p104 = scmp.ne.s32.totalorder %s90, %s91
    %p105 = scmp.eq.s32.totalorder %s15, 1
    %p106 = por %p104, %p105
    %p108 = scmp.ne.s32.totalorder %s91, %s107
    %p109 = scmp.eq.s32.totalorder %s15, 0
    %p110 = por %p108, %p109
    %p111 = scmp.le.s32.totalorder 1, %s9
    %p112 = scmp.lt.s32.totalorder %s9, 3
    %p113 = pnand %p111, %p112
    %p114 = pneg %p113
    // Predicated region
    $region9: #{g_forward.20} parent=5 // pred_check
      _
    $region10: #{g_forward.20} parent=5 // pred_check_branch
      %116 = sbr.rel (%p113) target = $region12
    $region11: #{g_forward.20} parent=5 // pred_region
      %s117 = ssub.s32 %s9, 1
      // Predicated region
      $region13: #{g_forward.20} parent=11 // pred_check
        %p118 = pneg %p56
      $region14: #{g_forward.20} parent=11 // pred_check_branch
        %120 = sbr.rel (%p118) target = $region16
      $region15: #{g_forward.20} parent=11 // pred_region
        _
      $region16: #{g_forward.20} parent=11 // pred_fallthru
        _
      // Predicated region
      $region17: #{g_forward.20} parent=11 // pred_check
        %p121 = pneg %p77
      $region18: #{g_forward.20} parent=11 // pred_check_branch
        %123 = sbr.rel (%p121) target = $region20
      $region19: #{g_forward.20} parent=11 // pred_region
        _
      $region20: #{g_forward.20} parent=11 // pred_fallthru
        _
    $region12: #{g_forward.20} parent=5 // pred_fallthru
      _
    %p124 = scmp.lt.s32.totalorder %s9, 2
    // Predicated region
    $region21: #{g_forward.20} parent=5 // pred_check
      %p125 = pneg %p124
    $region22: #{g_forward.20} parent=5 // pred_check_branch
      %127 = sbr.rel (%p125) target = $region24
    $region23: #{g_forward.20} parent=5 // pred_region
      // Predicated region
      $region25: #{g_forward.20} parent=23 // pred_check
        %p128 = pneg %p29
      $region26: #{g_forward.20} parent=23 // pred_check_branch
        %130 = sbr.rel (%p128) target = $region28
      $region27: #{g_forward.20} parent=23 // pred_region
        %p131 = scmp.lt.s32.totalorder %s9, 1
        %s132 = scalar_select %p131, %s9, 1
        %s133 = smul.addr %s132, 36
        %s134 = smul.addr %s133, 4
        %s135 = scalar_lea.vmem %s0, %s134
      $region28: #{g_forward.20} parent=23 // pred_fallthru
        _
    $region24: #{g_forward.20} parent=5 // pred_fallthru
      _
    %p136 = scmp.le.s32.totalorder 1, %s9
    %p137 = scmp.lt.s32.totalorder %s9, 3
    %p138 = pnand %p136, %p137
    %p139 = pneg %p138
    // Predicated region
    $region29: #{g_forward.20} parent=5 // pred_check
      _
    $region30: #{g_forward.20} parent=5 // pred_check_branch
      %141 = sbr.rel (%p138) target = $region32
    $region31: #{g_forward.20} parent=5 // pred_region
      %s142 = ssub.s32 %s9, 1
      %p143 = scmp.lt.s32.totalorder %s14, 1
      %s144 = scalar_select %p143, %s14, 1
      %s145 = smul.addr %s144, 36
      %s146 = smul.addr %s145, 4
      %s147 = scalar_lea.vmem %s0, %s146
      %p148 = pneg %p35
      %p149 = pneg %p32
      %p150 = pneg %p56
      %p151 = pneg %p53
      %p152 = pneg %p77
      %p153 = pneg %p74
      %p154 = pneg %p103
      %p155 = pneg %p100
      %p156 = scmp.lt.s32.totalorder %s14, 1
      %s157 = scalar_select %p156, %s14, 1
      %s158 = smul.addr %s157, 8
      %s159 = smul.addr %s158, 8
      %s160 = scalar_lea.vmem %s3, %s159
      %p161 = scmp.lt.s32.totalorder %s14, 1
      %s162 = scalar_select %p161, %s14, 1
      %s163 = smul.addr %s162, 36
      %s164 = smul.addr %s163, 4
      %s165 = scalar_lea.vmem %s0, %s164
      %p166 = scmp.lt.s32.totalorder %s14, 1
      %s167 = scalar_select %p166, %s14, 1
      %s168 = smul.addr %s167, 8
      %s169 = smul.addr %s168, 8
      %s170 = scalar_lea.vmem %s3, %s169
      %v172 = vld [vmem:[%s1] sm:$0xff]
      %v173 = vld [vmem:[%s1 + $0x8] sm:$0xff]
      %v174 = vld [vmem:[%s1 + $0x10] sm:$0xff]
      %v175 = vld [vmem:[%s1 + $0x18] sm:$0xff]
      %v176 = vld [vmem:[%s165] sm:$0xff]
      %v177 = vld [vmem:[%s165 + $0x8] sm:$0xff]
      %v178 = vld [vmem:[%s165 + $0x10] sm:$0xff]
      %v179 = vld [vmem:[%s165 + $0x18] sm:$0xff]
      %v180 = vld [vmem:[%s165 + $0x20] sm:$0xff]
      %v181 = vld [vmem:[%s165 + $0x28] sm:$0xff]
      %v182 = vld [vmem:[%s165 + $0x30] sm:$0xff]
      %v183 = vld [vmem:[%s165 + $0x38] sm:$0xff]
      %v184 = vld [vmem:[%s165 + $0x40] sm:$0xff]
      %v185 = vld [vmem:[%s165 + $0x48] sm:$0xff]
      %v186 = vld [vmem:[%s165 + $0x50] sm:$0xff]
      %v187 = vld [vmem:[%s165 + $0x58] sm:$0xff]
      %v188 = vld [vmem:[%s165 + $0x60] sm:$0xff]
      %v189 = vld [vmem:[%s165 + $0x68] sm:$0xff]
      %v190 = vld [vmem:[%s165 + $0x70] sm:$0xff]
      %v191 = vld [vmem:[%s165 + $0x78] sm:$0xff]
      %v192 = vld [vmem:[%s165 + $0x80] sm:$0xff]
      %v193 = vld [vmem:[%s165 + $0x88] sm:$0xff]
      %v194 = vld [vmem:[%s2] sm:$0xff]
      %v195 = vld [vmem:[%s2 + $0x8] sm:$0xff]
      %v196 = vld [vmem:[%s2 + $0x10] sm:$0xff]
      %v197 = vld [vmem:[%s2 + $0x18] sm:$0xff]
      %199 = vset.pattern.permute.xlu0 0
      %200 = vperm.xlu0 %199, %v194
      %v201 = vpop.permute.xlu0 %200
      %204 = vset.pattern.permute.xlu0 0
      %205 = vperm.xlu0 %204, %v195
      %v206 = vpop.permute.xlu0 %205
      %209 = vset.pattern.permute.xlu0 0
      %210 = vperm.xlu0 %209, %v196
      %v211 = vpop.permute.xlu0 %210
      %214 = vset.pattern.permute.xlu0 0
      %215 = vperm.xlu0 %214, %v197
      %v216 = vpop.permute.xlu0 %215
      %v222 = vunpack.c.l.b16 %v172
      %v223 = vunpack.c.h.b16 %v172
      %v224 = vunpack.c.l.b16 %v173
      %v225 = vunpack.c.h.b16 %v173
      %v226 = vunpack.c.l.b16 %v174
      %v227 = vunpack.c.h.b16 %v174
      %v228 = vunpack.c.l.b16 %v175
      %v229 = vunpack.c.h.b16 %v175
      %v230 = vpack.c.b16 %v224, %v222
      %v231 = vpack.c.b16 %v225, %v223
      %v232 = vpack.c.b16 %v228, %v226
      %v233 = vpack.c.b16 %v229, %v227
      %v254 = vunpack.c.l.b16 %v176
      %v255 = vunpack.c.h.b16 %v176
      %v256 = vunpack.c.l.b16 %v177
      %v257 = vunpack.c.h.b16 %v177
      %v258 = vunpack.c.l.b16 %v178
      %v259 = vunpack.c.h.b16 %v178
      %v260 = vunpack.c.l.b16 %v179
      %v261 = vunpack.c.h.b16 %v179
      %v262 = vunpack.c.l.b16 %v180
      %v263 = vunpack.c.h.b16 %v180
      %v264 = vunpack.c.l.b16 %v181
      %v265 = vunpack.c.h.b16 %v181
      %v266 = vunpack.c.l.b16 %v182
      %v267 = vunpack.c.h.b16 %v182
      %v268 = vunpack.c.l.b16 %v183
      %v269 = vunpack.c.h.b16 %v183
      %v270 = vunpack.c.l.b16 %v184
      %v271 = vunpack.c.h.b16 %v184
      %v272 = vunpack.c.l.b16 %v185
      %v273 = vunpack.c.h.b16 %v185
      %v274 = vunpack.c.l.b16 %v186
      %v275 = vunpack.c.h.b16 %v186
      %v276 = vunpack.c.l.b16 %v187
      %v277 = vunpack.c.h.b16 %v187
      %v278 = vunpack.c.l.b16 %v188
      %v279 = vunpack.c.h.b16 %v188
      %v280 = vunpack.c.l.b16 %v189
      %v281 = vunpack.c.h.b16 %v189
      %v282 = vunpack.c.l.b16 %v190
      %v283 = vunpack.c.h.b16 %v190
      %v284 = vunpack.c.l.b16 %v191
      %v285 = vunpack.c.h.b16 %v191
      %v286 = vunpack.c.l.b16 %v192
      %v287 = vunpack.c.h.b16 %v192
      %v288 = vunpack.c.l.b16 %v193
      %v289 = vunpack.c.h.b16 %v193
      %v290 = vpack.c.b16 %v256, %v254
      %v291 = vpack.c.b16 %v257, %v255
      %v292 = vpack.c.b16 %v260, %v258
      %v293 = vpack.c.b16 %v261, %v259
      %v294 = vpack.c.b16 %v264, %v262
      %v295 = vpack.c.b16 %v265, %v263
      %v296 = vpack.c.b16 %v268, %v266
      %v297 = vpack.c.b16 %v269, %v267
      %v298 = vpack.c.b16 %v272, %v270
      %v299 = vpack.c.b16 %v273, %v271
      %v300 = vpack.c.b16 %v276, %v274
      %v301 = vpack.c.b16 %v277, %v275
      %v302 = vpack.c.b16 %v280, %v278
      %v303 = vpack.c.b16 %v281, %v279
      %v304 = vpack.c.b16 %v284, %v282
      %v305 = vpack.c.b16 %v285, %v283
      %v306 = vpack.c.b16 %v288, %v286
      %v307 = vpack.c.b16 %v289, %v287
      %vm326 = vcmask 130048
      %v328 = vsel %vm326, %v231, 0
      %v331 = vsel %vm326, %v233, 0
      %333 = vmatprep.subr.bf16.mxu0 %v291
      %334 = vmatpush1.bf16.msra.mxu0 %v290
      %335 = vmatprep.subr.bf16.mxu0 %v293
      %336 = vmatpush1.bf16.msra.mxu0 %v292
      %337 = vmatprep.subr.bf16.mxu0 %v295
      %338 = vmatpush1.bf16.msra.mxu0 %v294
      %339 = vmatprep.subr.bf16.mxu0 %v297
      %340 = vmatpush1.bf16.msra.mxu0 %v296
      %341 = vmatprep.subr.bf16.mxu0 %v299
      %342 = vmatpush1.bf16.msra.mxu0 %v298
      %343 = vmatprep.subr.bf16.mxu0 %v301
      %344 = vmatpush1.bf16.msra.mxu0 %v300
      %345 = vmatprep.subr.bf16.mxu0 %v303
      %346 = vmatpush1.bf16.msra.mxu0 %v302
      %347 = vmatprep.subr.bf16.mxu0 %v305
      %348 = vmatpush1.bf16.msra.mxu0 %v304
      %349 = vmatprep.subr.bf16.mxu0 %v307
      %350 = vmatpush1.bf16.msra.mxu0 %v306
      %351 = vmatprep.subr.bf16.mxu0 0
      %352 = vmatpush1.bf16.msra.mxu0 0
      %353 = vmatprep.subr.bf16.mxu0 0
      %354 = vmatpush1.bf16.msra.mxu0 0
      %355 = vmatprep.subr.bf16.mxu0 0
      %356 = vmatpush1.bf16.msra.mxu0 0
      %357 = vmatprep.subr.bf16.mxu0 0
      %358 = vmatpush1.bf16.msra.mxu0 0
      %359 = vmatprep.subr.bf16.mxu0 0
      %360 = vmatpush1.bf16.msra.mxu0 0
      %361 = vmatprep.subr.bf16.mxu0 0
      %362 = vmatpush1.bf16.msra.mxu0 0
      %363 = vmatprep.subr.bf16.mxu0 0
      %364 = vmatpush1.bf16.msra.mxu0 0
      %365 = vmatprep.mubr.bf16.mxu0 %v328
      %366 = vmatmul.mubr.bf16.gmra.mrb[0].mxu0 %v230
      %v367 = vpop.f32.mrb[0].mxu0
      %v368 = vadd.f32 %v201, %v367
      %v369 = vpop.f32.mrb[0].mxu0
      %v370 = vadd.f32 %v201, %v369
      %v371 = vpop.f32.mrb[0].mxu0
      %v372 = vadd.f32 %v206, %v371
      %v373 = vpop.f32.mrb[0].mxu0
      %v374 = vadd.f32 %v206, %v373
      %375 = vmatprep.mubr.bf16.mxu0 %v331
      %376 = vmatmul.mubr.bf16.gmra.mrb[0].mxu0 %v232
      %v377 = vpop.f32.mrb[0].mxu0
      %v378 = vadd.f32 %v211, %v377
      %v379 = vpop.f32.mrb[0].mxu0
      %v380 = vadd.f32 %v211, %v379
      %v381 = vpop.f32.mrb[0].mxu0
      %v382 = vadd.f32 %v216, %v381
      %v383 = vpop.f32.mrb[0].mxu0
      %v384 = vadd.f32 %v216, %v383
      %385 = vdwg.mxu0
      %v386 = vadd.f32 %v368, %v370
      %387 = vadd.xlane.f32.xlu0 %v386
      %v388 = vpop.xlane.xlu0 %387
      %v389 = vadd.f32 %v372, %v374
      %390 = vadd.xlane.f32.xlu0 %v389
      %v391 = vpop.xlane.xlu0 %390
      %v392 = vadd.f32 %v378, %v380
      %393 = vadd.xlane.f32.xlu0 %v392
      %v394 = vpop.xlane.xlu0 %393
      %v395 = vadd.f32 %v382, %v384
      %396 = vadd.xlane.f32.xlu0 %v395
      %v397 = vpop.xlane.xlu0 %396
      %v398 = vadd.f32 %v388, %v391
      %v399 = vadd.f32 %v398, %v394
      %v400 = vadd.f32 %v399, %v397
      %v401 = vrcp.pop 1024.0
      %v402 = vmul.f32 %v400, %v401
      %404 = vset.pattern.permute.xlu0 0
      %405 = vperm.xlu0 %404, %v402
      %v406 = vpop.permute.xlu0 %405
      %v408 = vsub.f32 %v368, %v406
      %v409 = vsub.f32 %v370, %v406
      %v410 = vsub.f32 %v372, %v406
      %v411 = vsub.f32 %v374, %v406
      %v412 = vsub.f32 %v378, %v406
      %v413 = vsub.f32 %v380, %v406
      %v414 = vsub.f32 %v382, %v406
      %v415 = vsub.f32 %v384, %v406
      %v416 = vmul.f32 %v408, %v408
      %v417 = vmul.f32 %v409, %v409
      %v418 = vmul.f32 %v410, %v410
      %v419 = vmul.f32 %v411, %v411
      %v420 = vmul.f32 %v412, %v412
      %v421 = vmul.f32 %v413, %v413
      %v422 = vmul.f32 %v414, %v414
      %v423 = vmul.f32 %v415, %v415
      %v424 = vadd.f32 %v416, %v417
      %425 = vadd.xlane.f32.xlu0 %v424
      %v426 = vpop.xlane.xlu0 %425
      %v427 = vadd.f32 %v418, %v419
      %428 = vadd.xlane.f32.xlu0 %v427
      %v429 = vpop.xlane.xlu0 %428
      %v430 = vadd.f32 %v420, %v421
      %431 = vadd.xlane.f32.xlu0 %v430
      %v432 = vpop.xlane.xlu0 %431
      %v433 = vadd.f32 %v422, %v423
      %434 = vadd.xlane.f32.xlu0 %v433
      %v435 = vpop.xlane.xlu0 %434
      %v436 = vadd.f32 %v426, %v429
      %v437 = vadd.f32 %v436, %v432
      %v438 = vadd.f32 %v437, %v435
      %v439 = vmul.f32 %v438, %v401
      %v440 = vadd.f32 %v439, 1e-05
      %v441 = vrsqrt.pop %v440
      %443 = vset.pattern.permute.xlu0 0
      %444 = vperm.xlu0 %443, %v441
      %v445 = vpop.permute.xlu0 %444
      %v447 = vmul.f32 %v408, %v445
      %v448 = vmul.f32 %v409, %v445
      %v449 = vmul.f32 %v410, %v445
      %v450 = vmul.f32 %v411, %v445
      %v451 = vmul.f32 %v412, %v445
      %v452 = vmul.f32 %v413, %v445
      %v453 = vmul.f32 %v414, %v445
      %v454 = vmul.f32 %v415, %v445
      %vm455 = vcmp.ge.f32.partialorder %v447, 0.0
      %vm456 = vcmp.ge.f32.partialorder %v448, 0.0
      %vm457 = vcmp.ge.f32.partialorder %v449, 0.0
      %vm458 = vcmp.ge.f32.partialorder %v450, 0.0
      %vm459 = vcmp.ge.f32.partialorder %v451, 0.0
      %vm460 = vcmp.ge.f32.partialorder %v452, 0.0
      %vm461 = vcmp.ge.f32.partialorder %v453, 0.0
      %vm462 = vcmp.ge.f32.partialorder %v454, 0.0
      %v463 = vmul.f32 %v447, 0.2
      %v464 = vmul.f32 %v448, 0.2
      %v465 = vmul.f32 %v449, 0.2
      %v466 = vmul.f32 %v450, 0.2
      %v467 = vmul.f32 %v451, 0.2
      %v468 = vmul.f32 %v452, 0.2
      %v469 = vmul.f32 %v453, 0.2
      %v470 = vmul.f32 %v454, 0.2
      %v471 = vsel %vm455, %v447, %v463
      %v472 = vsel %vm456, %v448, %v464
      %v473 = vsel %vm457, %v449, %v465
      %v474 = vsel %vm458, %v450, %v466
      %v475 = vsel %vm459, %v451, %v467
      %v476 = vsel %vm460, %v452, %v468
      %v477 = vsel %vm461, %v453, %v469
      %v478 = vsel %vm462, %v454, %v470
      %479 = vst [vmem:[%s170] sm:$0xff] %v471
      %480 = vst [vmem:[%s170 + $0x8] sm:$0xff] %v472
      %481 = vst [vmem:[%s170 + $0x10] sm:$0xff] %v473
      %482 = vst [vmem:[%s170 + $0x18] sm:$0xff] %v474
      %483 = vst [vmem:[%s170 + $0x20] sm:$0xff] %v475
      %484 = vst [vmem:[%s170 + $0x28] sm:$0xff] %v476
      %485 = vst [vmem:[%s170 + $0x30] sm:$0xff] %v477
      %486 = vst [vmem:[%s170 + $0x38] sm:$0xff] %v478
      %p487 = scmp.lt.s32.totalorder %s14, 1
      %s488 = scalar_select %p487, %s14, 1
      %s489 = smul.addr %s488, 8
      %s490 = smul.addr %s489, 8
      %s491 = scalar_lea.vmem %s3, %s490
      // Predicated region
      $region33: #{g_forward.20} parent=31 // pred_check
        %p492 = pneg %p100
      $region34: #{g_forward.20} parent=31 // pred_check_branch
        %494 = sbr.rel (%p492) target = $region36
      $region35: #{g_forward.20} parent=31 // pred_region
        _
      $region36: #{g_forward.20} parent=31 // pred_fallthru
        _
    $region32: #{g_forward.20} parent=5 // pred_fallthru
      _
    %p495 = scmp.le.s32.totalorder 2, %s9
    // Predicated region
    $region37: #{g_forward.20} parent=5 // pred_check
      %p496 = pneg %p495
    $region38: #{g_forward.20} parent=5 // pred_check_branch
      %498 = sbr.rel (%p496) target = $region40
    $region39: #{g_forward.20} parent=5 // pred_region
      %s499 = ssub.s32 %s9, 2
      // Predicated region
      $region41: #{g_forward.20} parent=39 // pred_check
        %p500 = pneg %p106
      $region42: #{g_forward.20} parent=39 // pred_check_branch
        %502 = sbr.rel (%p500) target = $region44
      $region43: #{g_forward.20} parent=39 // pred_region
        %p503 = scmp.lt.s32.totalorder %s15, 1
        %s504 = scalar_select %p503, %s15, 1
        %s505 = smul.addr %s504, 8
        %s506 = smul.addr %s505, 8
        %s507 = scalar_lea.vmem %s3, %s506
      $region44: #{g_forward.20} parent=39 // pred_fallthru
        _
    $region40: #{g_forward.20} parent=5 // pred_fallthru
      _
  $region6: #{g_forward.20} parent=0 // loop_footer
    %s13 = sadd.s32 1, %s9
  $region7: #{g_forward.20} parent=0 // loop_footer_branch
    %8 = sbr.rel target = $region3
  $region8: #{g_forward.20} parent=0 // loop_exit
    _

// kernel: g_forward.21
$region0: #{g_forward.21}
  #allocation0 [shape = 'u32[]', space=smem, size = 0x4, offset = 0x4, fixed_abs, tag = 'smem constant byte address 0x4 - core index']
  #allocation1 [shape = 'u32[144,128]{1,0:T(1,128)}', space=vmem, size = 0x12000, scoped, tag = 'internal scratch']
  %s0 = inlined_call_operand.vmem [shape: bf16[2,392,1024], index: 0, kind: input, shape index: {}]
  %s1 = inlined_call_operand.vmem [shape: bf16[3,392], index: 1, kind: input, shape index: {}]
  %s2 = inlined_call_operand.vmem [shape: f32[3,1], index: 2, kind: input, shape index: {}]
  %s3 = inlined_call_operand.vmem [shape: f32[2,3,1024], index: 3, kind: output, shape index: {}]
  %s4 = sld [smem:[#allocation0]]
  $region45: #{g_forward.21} parent=0
    _
  %s6 = ssub.s32 1, %s4
  %s7 = scalar_select 0, %s6, %s4
  loop: start=0, step=1, limit=4
  $region2: #{g_forward.21} parent=0 // loop_pre_header
    _
  $region3: #{g_forward.21} parent=0 // loop_header
    %s9 = sphi 0, %s13
    %p10 = scmp.ge.s32.totalorder %s9, 4
    %s19 = sphi 0, %s21
    %s22 = sphi 0, %s19
    %s23 = sphi 0, %s22
    %s39 = sphi 0, %s23
    %s43 = sphi 0, %s43
    %s45 = sphi 0, %s43
    %s46 = sphi 0, %s45
    %s60 = sphi 0, %s46
    %s64 = sphi 0, %s64
    %s66 = sphi 0, %s64
    %s67 = sphi 0, %s66
    %s81 = sphi 0, %s67
    %s87 = sphi 0, %s89
    %s90 = sphi 0, %s87
    %s91 = sphi 0, %s90
    %s107 = sphi 0, %s91
  $region4: #{g_forward.21} parent=0 // loop_header_branch
    %12 = sbr.rel (%p10) target = $region8
  $region5: #{g_forward.21} parent=0 // loop_body
    %s14 = ssub.s32 %s9, 1
    %s15 = ssub.s32 %s9, 2
    %s16 = sadd.s32 %s9, 1
    %s17 = ssub.s32 %s9, %s16
    %p18 = scmp.eq.s32.totalorder %s17, 0
    %s20 = sadd.s32 %s19, 1
    %s21 = scalar_select %p18, %s19, %s20
    %p24 = pneg %p18
    %p25 = scmp.eq.s32.totalorder %s9, 1
    %p26 = por %p24, %p25
    %p27 = scmp.ne.s32.totalorder %s19, %s22
    %p28 = scmp.eq.s32.totalorder %s9, 0
    %p29 = por %p27, %p28
    %p30 = scmp.ne.s32.totalorder %s19, %s22
    %p31 = scmp.eq.s32.totalorder %s14, 1
    %p32 = por %p30, %p31
    %p33 = scmp.ne.s32.totalorder %s22, %s23
    %p34 = scmp.eq.s32.totalorder %s14, 0
    %p35 = por %p33, %p34
    %p36 = scmp.ne.s32.totalorder %s22, %s23
    %p37 = scmp.eq.s32.totalorder %s15, 1
    %p38 = por %p36, %p37
    %p40 = scmp.ne.s32.totalorder %s23, %s39
    %p41 = scmp.eq.s32.totalorder %s15, 0
    %p42 = por %p40, %p41
    %s44 = sadd.s32 %s43, 1
    %p47 = scmp.eq.s32.totalorder %s9, 1
    %p48 = scmp.ne.s32.totalorder %s43, %s45
    %p49 = scmp.eq.s32.totalorder %s9, 0
    %p50 = por %p48, %p49
    %p51 = scmp.ne.s32.totalorder %s43, %s45
    %p52 = scmp.eq.s32.totalorder %s14, 1
    %p53 = por %p51, %p52
    %p54 = scmp.ne.s32.totalorder %s45, %s46
    %p55 = scmp.eq.s32.totalorder %s14, 0
    %p56 = por %p54, %p55
    %p57 = scmp.ne.s32.totalorder %s45, %s46
    %p58 = scmp.eq.s32.totalorder %s15, 1
    %p59 = por %p57, %p58
    %p61 = scmp.ne.s32.totalorder %s46, %s60
    %p62 = scmp.eq.s32.totalorder %s15, 0
    %p63 = por %p61, %p62
    %s65 = sadd.s32 %s64, 1
    %p68 = scmp.eq.s32.totalorder %s9, 1
    %p69 = scmp.ne.s32.totalorder %s64, %s66
    %p70 = scmp.eq.s32.totalorder %s9, 0
    %p71 = por %p69, %p70
    %p72 = scmp.ne.s32.totalorder %s64, %s66
    %p73 = scmp.eq.s32.totalorder %s14, 1
    %p74 = por %p72, %p73
    %p75 = scmp.ne.s32.totalorder %s66, %s67
    %p76 = scmp.eq.s32.totalorder %s14, 0
    %p77 = por %p75, %p76
    %p78 = scmp.ne.s32.totalorder %s66, %s67
    %p79 = scmp.eq.s32.totalorder %s15, 1
    %p80 = por %p78, %p79
    %p82 = scmp.ne.s32.totalorder %s67, %s81
    %p83 = scmp.eq.s32.totalorder %s15, 0
    %p84 = por %p82, %p83
    %s85 = ssub.s32 %s9, %s16
    %p86 = scmp.eq.s32.totalorder %s85, 0
    %s88 = sadd.s32 %s87, 1
    %s89 = scalar_select %p86, %s87, %s88
    %p92 = pneg %p86
    %p93 = scmp.eq.s32.totalorder %s9, 1
    %p94 = por %p92, %p93
    %p95 = scmp.ne.s32.totalorder %s87, %s90
    %p96 = scmp.eq.s32.totalorder %s9, 0
    %p97 = por %p95, %p96
    %p98 = scmp.ne.s32.totalorder %s87, %s90
    %p99 = scmp.eq.s32.totalorder %s14, 1
    %p100 = por %p98, %p99
    %p101 = scmp.ne.s32.totalorder %s90, %s91
    %p102 = scmp.eq.s32.totalorder %s14, 0
    %p103 = por %p101, %p102
    %p104 = scmp.ne.s32.totalorder %s90, %s91
    %p105 = scmp.eq.s32.totalorder %s15, 1
    %p106 = por %p104, %p105
    %p108 = scmp.ne.s32.totalorder %s91, %s107
    %p109 = scmp.eq.s32.totalorder %s15, 0
    %p110 = por %p108, %p109
    %p111 = scmp.le.s32.totalorder 1, %s9
    %p112 = scmp.lt.s32.totalorder %s9, 3
    %p113 = pnand %p111, %p112
    %p114 = pneg %p113
    // Predicated region
    $region9: #{g_forward.21} parent=5 // pred_check
      _
    $region10: #{g_forward.21} parent=5 // pred_check_branch
      %116 = sbr.rel (%p113) target = $region12
    $region11: #{g_forward.21} parent=5 // pred_region
      %s117 = ssub.s32 %s9, 1
      // Predicated region
      $region13: #{g_forward.21} parent=11 // pred_check
        %p118 = pneg %p56
      $region14: #{g_forward.21} parent=11 // pred_check_branch
        %120 = sbr.rel (%p118) target = $region16
      $region15: #{g_forward.21} parent=11 // pred_region
        _
      $region16: #{g_forward.21} parent=11 // pred_fallthru
        _
      // Predicated region
      $region17: #{g_forward.21} parent=11 // pred_check
        %p121 = pneg %p77
      $region18: #{g_forward.21} parent=11 // pred_check_branch
        %123 = sbr.rel (%p121) target = $region20
      $region19: #{g_forward.21} parent=11 // pred_region
        _
      $region20: #{g_forward.21} parent=11 // pred_fallthru
        _
    $region12: #{g_forward.21} parent=5 // pred_fallthru
      _
    %p124 = scmp.lt.s32.totalorder %s9, 2
    // Predicated region
    $region21: #{g_forward.21} parent=5 // pred_check
      %p125 = pneg %p124
    $region22: #{g_forward.21} parent=5 // pred_check_branch
      %127 = sbr.rel (%p125) target = $region24
    $region23: #{g_forward.21} parent=5 // pred_region
      // Predicated region
      $region25: #{g_forward.21} parent=23 // pred_check
        %p128 = pneg %p29
      $region26: #{g_forward.21} parent=23 // pred_check_branch
        %130 = sbr.rel (%p128) target = $region28
      $region27: #{g_forward.21} parent=23 // pred_region
        %p131 = scmp.lt.s32.totalorder %s9, 1
        %s132 = scalar_select %p131, %s9, 1
        %s133 = smul.addr %s132, 392
        %s134 = smul.addr %s133, 4
        %s135 = scalar_lea.vmem %s0, %s134
      $region28: #{g_forward.21} parent=23 // pred_fallthru
        _
    $region24: #{g_forward.21} parent=5 // pred_fallthru
      _
    %p136 = scmp.le.s32.totalorder 1, %s9
    %p137 = scmp.lt.s32.totalorder %s9, 3
    %p138 = pnand %p136, %p137
    %p139 = pneg %p138
    // Predicated region
    $region29: #{g_forward.21} parent=5 // pred_check
      _
    $region30: #{g_forward.21} parent=5 // pred_check_branch
      %141 = sbr.rel (%p138) target = $region32
    $region31: #{g_forward.21} parent=5 // pred_region
      %s142 = ssub.s32 %s9, 1
      %p143 = scmp.lt.s32.totalorder %s14, 1
      %s144 = scalar_select %p143, %s14, 1
      %s145 = smul.addr %s144, 392
      %s146 = smul.addr %s145, 4
      %s147 = scalar_lea.vmem %s0, %s146
      %p148 = pneg %p35
      %p149 = pneg %p32
      %p150 = pneg %p56
      %p151 = pneg %p53
      %p152 = pneg %p77
      %p153 = pneg %p74
      %p154 = pneg %p103
      %p155 = pneg %p100
      %p156 = scmp.lt.s32.totalorder %s14, 1
      %s157 = scalar_select %p156, %s14, 1
      %s158 = smul.addr %s157, 8
      %s159 = smul.addr %s158, 4
      %s160 = scalar_lea.vmem %s3, %s159
      %p161 = scmp.lt.s32.totalorder %s14, 1
      %s162 = scalar_select %p161, %s14, 1
      %s163 = smul.addr %s162, 392
      %s164 = smul.addr %s163, 4
      %s165 = scalar_lea.vmem %s0, %s164
      %p166 = scmp.lt.s32.totalorder %s14, 1
      %s167 = scalar_select %p166, %s14, 1
      %s168 = smul.addr %s167, 8
      %s169 = smul.addr %s168, 4
      %s170 = scalar_lea.vmem %s3, %s169
      %v172 = vld [vmem:[%s1] sm:$0xff]
      %v173 = vld [vmem:[%s165] sm:$0xff]
      %v174 = vld [vmem:[%s165 + $0x8] sm:$0xff]
      %v175 = vld [vmem:[%s165 + $0x10] sm:$0xff]
      %v176 = vld [vmem:[%s165 + $0x18] sm:$0xff]
      %v177 = vld [vmem:[%s165 + $0x20] sm:$0xff]
      %v178 = vld [vmem:[%s165 + $0x28] sm:$0xff]
      %v179 = vld [vmem:[%s165 + $0x30] sm:$0xff]
      %v180 = vld [vmem:[%s165 + $0x38] sm:$0xff]
      %v181 = vld [vmem:[%s165 + $0x40] sm:$0xff]
      %v182 = vld [vmem:[%s165 + $0x48] sm:$0xff]
      %v183 = vld [vmem:[%s165 + $0x50] sm:$0xff]
      %v184 = vld [vmem:[%s165 + $0x58] sm:$0xff]
      %v185 = vld [vmem:[%s165 + $0x60] sm:$0xff]
      %v186 = vld [vmem:[%s165 + $0x68] sm:$0xff]
      %v187 = vld [vmem:[%s165 + $0x70] sm:$0xff]
      %v188 = vld [vmem:[%s165 + $0x78] sm:$0xff]
      %v189 = vld [vmem:[%s165 + $0x80] sm:$0xff]
      %v190 = vld [vmem:[%s165 + $0x88] sm:$0xff]
      %v191 = vld [vmem:[%s165 + $0x90] sm:$0xff]
      %v192 = vld [vmem:[%s165 + $0x98] sm:$0xff]
      %v193 = vld [vmem:[%s165 + $0xa0] sm:$0xff]
      %v194 = vld [vmem:[%s165 + $0xa8] sm:$0xff]
      %v195 = vld [vmem:[%s165 + $0xb0] sm:$0xff]
      %v196 = vld [vmem:[%s165 + $0xb8] sm:$0xff]
      %v197 = vld [vmem:[%s165 + $0xc0] sm:$0xff]
      %v198 = vld [vmem:[%s165 + $0xc8] sm:$0xff]
      %v199 = vld [vmem:[%s165 + $0xd0] sm:$0xff]
      %v200 = vld [vmem:[%s165 + $0xd8] sm:$0xff]
      %v201 = vld [vmem:[%s165 + $0xe0] sm:$0xff]
      %v202 = vld [vmem:[%s165 + $0xe8] sm:$0xff]
      %v203 = vld [vmem:[%s165 + $0xf0] sm:$0xff]
      %v204 = vld [vmem:[%s165 + $0xf8] sm:$0xff]
      %v205 = vld [vmem:[%s165 + $0x100] sm:$0xff]
      %v206 = vld [vmem:[%s165 + $0x108] sm:$0xff]
      %v207 = vld [vmem:[%s165 + $0x110] sm:$0xff]
      %v208 = vld [vmem:[%s165 + $0x118] sm:$0xff]
      %v209 = vld [vmem:[%s165 + $0x120] sm:$0xff]
      %v210 = vld [vmem:[%s165 + $0x128] sm:$0xff]
      %v211 = vld [vmem:[%s165 + $0x130] sm:$0xff]
      %v212 = vld [vmem:[%s165 + $0x138] sm:$0xff]
      %v213 = vld [vmem:[%s165 + $0x140] sm:$0xff]
      %v214 = vld [vmem:[%s165 + $0x148] sm:$0xff]
      %v215 = vld [vmem:[%s165 + $0x150] sm:$0xff]
      %v216 = vld [vmem:[%s165 + $0x158] sm:$0xff]
      %v217 = vld [vmem:[%s165 + $0x160] sm:$0xff]
      %v218 = vld [vmem:[%s165 + $0x168] sm:$0xff]
      %v219 = vld [vmem:[%s165 + $0x170] sm:$0xff]
      %v220 = vld [vmem:[%s165 + $0x178] sm:$0xff]
      %v221 = vld [vmem:[%s165 + $0x180] sm:$0xff]
      %v222 = vld [vmem:[%s165 + $0x188] sm:$0xff]
      %v223 = vld [vmem:[%s165 + $0x190] sm:$0xff]
      %v224 = vld [vmem:[%s165 + $0x198] sm:$0xff]
      %v225 = vld [vmem:[%s165 + $0x1a0] sm:$0xff]
      %v226 = vld [vmem:[%s165 + $0x1a8] sm:$0xff]
      %v227 = vld [vmem:[%s165 + $0x1b0] sm:$0xff]
      %v228 = vld [vmem:[%s165 + $0x1b8] sm:$0xff]
      %v229 = vld [vmem:[%s165 + $0x1c0] sm:$0xff]
      %v230 = vld [vmem:[%s165 + $0x1c8] sm:$0xff]
      %v231 = vld [vmem:[%s165 + $0x1d0] sm:$0xff]
      %v232 = vld [vmem:[%s165 + $0x1d8] sm:$0xff]
      %v233 = vld [vmem:[%s165 + $0x1e0] sm:$0xff]
      %v234 = vld [vmem:[%s165 + $0x1e8] sm:$0xff]
      %v235 = vld [vmem:[%s165 + $0x1f0] sm:$0xff]
      %v236 = vld [vmem:[%s165 + $0x1f8] sm:$0xff]
      %v237 = vld [vmem:[%s165 + $0x200] sm:$0xff]
      %v238 = vld [vmem:[%s165 + $0x208] sm:$0xff]
      %v239 = vld [vmem:[%s165 + $0x210] sm:$0xff]
      %v240 = vld [vmem:[%s165 + $0x218] sm:$0xff]
      %v241 = vld [vmem:[%s165 + $0x220] sm:$0xff]
      %v242 = vld [vmem:[%s165 + $0x228] sm:$0xff]
      %v243 = vld [vmem:[%s165 + $0x230] sm:$0xff]
      %v244 = vld [vmem:[%s165 + $0x238] sm:$0xff]
      %v245 = vld [vmem:[%s165 + $0x240] sm:$0xff]
      %v246 = vld [vmem:[%s165 + $0x248] sm:$0xff]
      %v247 = vld [vmem:[%s165 + $0x250] sm:$0xff]
      %v248 = vld [vmem:[%s165 + $0x258] sm:$0xff]
      %v249 = vld [vmem:[%s165 + $0x260] sm:$0xff]
      %v250 = vld [vmem:[%s165 + $0x268] sm:$0xff]
      %v251 = vld [vmem:[%s165 + $0x270] sm:$0xff]
      %v252 = vld [vmem:[%s165 + $0x278] sm:$0xff]
      %v253 = vld [vmem:[%s165 + $0x280] sm:$0xff]
      %v254 = vld [vmem:[%s165 + $0x288] sm:$0xff]
      %v255 = vld [vmem:[%s165 + $0x290] sm:$0xff]
      %v256 = vld [vmem:[%s165 + $0x298] sm:$0xff]
      %v257 = vld [vmem:[%s165 + $0x2a0] sm:$0xff]
      %v258 = vld [vmem:[%s165 + $0x2a8] sm:$0xff]
      %v259 = vld [vmem:[%s165 + $0x2b0] sm:$0xff]
      %v260 = vld [vmem:[%s165 + $0x2b8] sm:$0xff]
      %v261 = vld [vmem:[%s165 + $0x2c0] sm:$0xff]
      %v262 = vld [vmem:[%s165 + $0x2c8] sm:$0xff]
      %v263 = vld [vmem:[%s165 + $0x2d0] sm:$0xff]
      %v264 = vld [vmem:[%s165 + $0x2d8] sm:$0xff]
      %v265 = vld [vmem:[%s165 + $0x2e0] sm:$0xff]
      %v266 = vld [vmem:[%s165 + $0x2e8] sm:$0xff]
      %v267 = vld [vmem:[%s165 + $0x2f0] sm:$0xff]
      %v268 = vld [vmem:[%s165 + $0x2f8] sm:$0xff]
      %v269 = vld [vmem:[%s165 + $0x300] sm:$0xff]
      %v270 = vld [vmem:[%s165 + $0x308] sm:$0xff]
      %v271 = vld [vmem:[%s165 + $0x310] sm:$0xff]
      %v272 = vld [vmem:[%s165 + $0x318] sm:$0xff]
      %v273 = vld [vmem:[%s165 + $0x320] sm:$0xff]
      %v274 = vld [vmem:[%s165 + $0x328] sm:$0xff]
      %v275 = vld [vmem:[%s165 + $0x330] sm:$0xff]
      %v276 = vld [vmem:[%s165 + $0x338] sm:$0xff]
      %v277 = vld [vmem:[%s165 + $0x340] sm:$0xff]
      %v278 = vld [vmem:[%s165 + $0x348] sm:$0xff]
      %v279 = vld [vmem:[%s165 + $0x350] sm:$0xff]
      %v280 = vld [vmem:[%s165 + $0x358] sm:$0xff]
      %v281 = vld [vmem:[%s165 + $0x360] sm:$0xff]
      %v282 = vld [vmem:[%s165 + $0x368] sm:$0xff]
      %v283 = vld [vmem:[%s165 + $0x370] sm:$0xff]
      %v284 = vld [vmem:[%s165 + $0x378] sm:$0xff]
      %v285 = vld [vmem:[%s165 + $0x380] sm:$0xff]
      %v286 = vld [vmem:[%s165 + $0x388] sm:$0xff]
      %v287 = vld [vmem:[%s165 + $0x390] sm:$0xff]
      %v288 = vld [vmem:[%s165 + $0x398] sm:$0xff]
      %v289 = vld [vmem:[%s165 + $0x3a0] sm:$0xff]
      %v290 = vld [vmem:[%s165 + $0x3a8] sm:$0xff]
      %v291 = vld [vmem:[%s165 + $0x3b0] sm:$0xff]
      %v292 = vld [vmem:[%s165 + $0x3b8] sm:$0xff]
      %v293 = vld [vmem:[%s165 + $0x3c0] sm:$0xff]
      %v294 = vld [vmem:[%s165 + $0x3c8] sm:$0xff]
      %v295 = vld [vmem:[%s165 + $0x3d0] sm:$0xff]
      %v296 = vld [vmem:[%s165 + $0x3d8] sm:$0xff]
      %v297 = vld [vmem:[%s165 + $0x3e0] sm:$0xff]
      %v298 = vld [vmem:[%s165 + $0x3e8] sm:$0xff]
      %v299 = vld [vmem:[%s165 + $0x3f0] sm:$0xff]
      %v300 = vld [vmem:[%s165 + $0x3f8] sm:$0xff]
      %v301 = vld [vmem:[%s165 + $0x400] sm:$0xff]
      %v302 = vld [vmem:[%s165 + $0x408] sm:$0xff]
      %v303 = vld [vmem:[%s165 + $0x410] sm:$0xff]
      %v304 = vld [vmem:[%s165 + $0x418] sm:$0xff]
      %v305 = vld [vmem:[%s165 + $0x420] sm:$0xff]
      %v306 = vld [vmem:[%s165 + $0x428] sm:$0xff]
      %v307 = vld [vmem:[%s165 + $0x430] sm:$0xff]
      %v308 = vld [vmem:[%s165 + $0x438] sm:$0xff]
      %v309 = vld [vmem:[%s165 + $0x440] sm:$0xff]
      %v310 = vld [vmem:[%s165 + $0x448] sm:$0xff]
      %v311 = vld [vmem:[%s165 + $0x450] sm:$0xff]
      %v312 = vld [vmem:[%s165 + $0x458] sm:$0xff]
      %v313 = vld [vmem:[%s165 + $0x460] sm:$0xff]
      %v314 = vld [vmem:[%s165 + $0x468] sm:$0xff]
      %v315 = vld [vmem:[%s165 + $0x470] sm:$0xff]
      %v316 = vld [vmem:[%s165 + $0x478] sm:$0xff]
      %v317 = vld [vmem:[%s165 + $0x480] sm:$0xff]
      %v318 = vld [vmem:[%s165 + $0x488] sm:$0xff]
      %v319 = vld [vmem:[%s165 + $0x490] sm:$0xff]
      %v320 = vld [vmem:[%s165 + $0x498] sm:$0xff]
      %v321 = vld [vmem:[%s165 + $0x4a0] sm:$0xff]
      %v322 = vld [vmem:[%s165 + $0x4a8] sm:$0xff]
      %v323 = vld [vmem:[%s165 + $0x4b0] sm:$0xff]
      %v324 = vld [vmem:[%s165 + $0x4b8] sm:$0xff]
      %v325 = vld [vmem:[%s165 + $0x4c0] sm:$0xff]
      %v326 = vld [vmem:[%s165 + $0x4c8] sm:$0xff]
      %v327 = vld [vmem:[%s165 + $0x4d0] sm:$0xff]
      %v328 = vld [vmem:[%s165 + $0x4d8] sm:$0xff]
      %v329 = vld [vmem:[%s165 + $0x4e0] sm:$0xff]
      %v330 = vld [vmem:[%s165 + $0x4e8] sm:$0xff]
      %v331 = vld [vmem:[%s165 + $0x4f0] sm:$0xff]
      %v332 = vld [vmem:[%s165 + $0x4f8] sm:$0xff]
      %v333 = vld [vmem:[%s165 + $0x500] sm:$0xff]
      %v334 = vld [vmem:[%s165 + $0x508] sm:$0xff]
      %v335 = vld [vmem:[%s165 + $0x510] sm:$0xff]
      %v336 = vld [vmem:[%s165 + $0x518] sm:$0xff]
      %v337 = vld [vmem:[%s165 + $0x520] sm:$0xff]
      %v338 = vld [vmem:[%s165 + $0x528] sm:$0xff]
      %v339 = vld [vmem:[%s165 + $0x530] sm:$0xff]
      %v340 = vld [vmem:[%s165 + $0x538] sm:$0xff]
      %v341 = vld [vmem:[%s165 + $0x540] sm:$0xff]
      %v342 = vld [vmem:[%s165 + $0x548] sm:$0xff]
      %v343 = vld [vmem:[%s165 + $0x550] sm:$0xff]
      %v344 = vld [vmem:[%s165 + $0x558] sm:$0xff]
      %v345 = vld [vmem:[%s165 + $0x560] sm:$0xff]
      %v346 = vld [vmem:[%s165 + $0x568] sm:$0xff]
      %v347 = vld [vmem:[%s165 + $0x570] sm:$0xff]
      %v348 = vld [vmem:[%s165 + $0x578] sm:$0xff]
      %v349 = vld [vmem:[%s165 + $0x580] sm:$0xff]
      %v350 = vld [vmem:[%s165 + $0x588] sm:$0xff]
      %v351 = vld [vmem:[%s165 + $0x590] sm:$0xff]
      %v352 = vld [vmem:[%s165 + $0x598] sm:$0xff]
      %v353 = vld [vmem:[%s165 + $0x5a0] sm:$0xff]
      %v354 = vld [vmem:[%s165 + $0x5a8] sm:$0xff]
      %v355 = vld [vmem:[%s165 + $0x5b0] sm:$0xff]
      %v356 = vld [vmem:[%s165 + $0x5b8] sm:$0xff]
      %v357 = vld [vmem:[%s165 + $0x5c0] sm:$0xff]
      %v358 = vld [vmem:[%s165 + $0x5c8] sm:$0xff]
      %v359 = vld [vmem:[%s165 + $0x5d0] sm:$0xff]
      %v360 = vld [vmem:[%s165 + $0x5d8] sm:$0xff]
      %v361 = vld [vmem:[%s165 + $0x5e0] sm:$0xff]
      %v362 = vld [vmem:[%s165 + $0x5e8] sm:$0xff]
      %v363 = vld [vmem:[%s165 + $0x5f0] sm:$0xff]
      %v364 = vld [vmem:[%s165 + $0x5f8] sm:$0xff]
      %v365 = vld [vmem:[%s165 + $0x600] sm:$0xff]
      %v366 = vld [vmem:[%s165 + $0x608] sm:$0xff]
      %v367 = vld [vmem:[%s165 + $0x610] sm:$0xff]
      %v368 = vld [vmem:[%s165 + $0x618] sm:$0xff]
      %v369 = vld [vmem:[%s2] sm:$0x7]
      %371 = vset.pattern.permute.xlu0 0
      %372 = vperm.xlu0 %371, %v369
      %v373 = vpop.permute.xlu0 %372
      %v376 = vcombine.high %v172, %v172
      %v378 = vunpack.c.l.s4 1983009808
      %v379 = vunpack.c.0.s8 %v378
      %v380 = vlaneseq
      %v381 = vshrl.u32 %v380, 7
      %v382 = vsub.s32 %v379, %v381
      %v383 = vrot.slane %v172, %v382
      %v385 = vunpack.c.l.s4 1983009808
      %v386 = vunpack.c.0.s8 %v385
      %v387 = vlaneseq
      %v388 = vshrl.u32 %v387, 7
      %v389 = vsub.s32 %v386, %v388
      %v390 = vrot.slane %v376, %v389
      %v391 = vcombine.high %v383, %v383
      %v392 = vcombine.high %v390, %v390
      %v592 = vunpack.c.l.b16 %v173
      %v593 = vunpack.c.h.b16 %v173
      %v594 = vunpack.c.l.b16 %v174
      %v595 = vunpack.c.h.b16 %v174
      %v596 = vunpack.c.l.b16 %v175
      %v597 = vunpack.c.h.b16 %v175
      %v598 = vunpack.c.l.b16 %v176
      %v599 = vunpack.c.h.b16 %v176
      %v600 = vunpack.c.l.b16 %v177
      %v601 = vunpack.c.h.b16 %v177
      %v602 = vunpack.c.l.b16 %v178
      %v603 = vunpack.c.h.b16 %v178
      %v604 = vunpack.c.l.b16 %v179
      %v605 = vunpack.c.h.b16 %v179
      %v606 = vunpack.c.l.b16 %v180
      %v607 = vunpack.c.h.b16 %v180
      %v608 = vunpack.c.l.b16 %v181
      %v609 = vunpack.c.h.b16 %v181
      %v610 = vunpack.c.l.b16 %v182
      %v611 = vunpack.c.h.b16 %v182
      %v612 = vunpack.c.l.b16 %v183
      %v613 = vunpack.c.h.b16 %v183
      %v614 = vunpack.c.l.b16 %v184
      %v615 = vunpack.c.h.b16 %v184
      %v616 = vunpack.c.l.b16 %v185
      %v617 = vunpack.c.h.b16 %v185
      %v618 = vunpack.c.l.b16 %v186
      %v619 = vunpack.c.h.b16 %v186
      %v620 = vunpack.c.l.b16 %v187
      %v621 = vunpack.c.h.b16 %v187
      %v622 = vunpack.c.l.b16 %v188
      %v623 = vunpack.c.h.b16 %v188
      %v624 = vunpack.c.l.b16 %v189
      %v625 = vunpack.c.h.b16 %v189
      %v626 = vunpack.c.l.b16 %v190
      %v627 = vunpack.c.h.b16 %v190
      %v628 = vunpack.c.l.b16 %v191
      %v629 = vunpack.c.h.b16 %v191
      %v630 = vunpack.c.l.b16 %v192
      %v631 = vunpack.c.h.b16 %v192
      %v632 = vunpack.c.l.b16 %v193
      %v633 = vunpack.c.h.b16 %v193
      %v634 = vunpack.c.l.b16 %v194
      %v635 = vunpack.c.h.b16 %v194
      %v636 = vunpack.c.l.b16 %v195
      %v637 = vunpack.c.h.b16 %v195
      %v638 = vunpack.c.l.b16 %v196
      %v639 = vunpack.c.h.b16 %v196
      %v640 = vunpack.c.l.b16 %v197
      %v641 = vunpack.c.h.b16 %v197
      %v642 = vunpack.c.l.b16 %v198
      %v643 = vunpack.c.h.b16 %v198
      %v644 = vunpack.c.l.b16 %v199
      %v645 = vunpack.c.h.b16 %v199
      %v646 = vunpack.c.l.b16 %v200
      %v647 = vunpack.c.h.b16 %v200
      %v648 = vunpack.c.l.b16 %v201
      %v649 = vunpack.c.h.b16 %v201
      %v650 = vunpack.c.l.b16 %v202
      %v651 = vunpack.c.h.b16 %v202
      %v652 = vunpack.c.l.b16 %v203
      %v653 = vunpack.c.h.b16 %v203
      %v654 = vunpack.c.l.b16 %v204
      %v655 = vunpack.c.h.b16 %v204
      %v656 = vunpack.c.l.b16 %v205
      %v657 = vunpack.c.h.b16 %v205
      %v658 = vunpack.c.l.b16 %v206
      %v659 = vunpack.c.h.b16 %v206
      %v660 = vunpack.c.l.b16 %v207
      %v661 = vunpack.c.h.b16 %v207
      %v662 = vunpack.c.l.b16 %v208
      %v663 = vunpack.c.h.b16 %v208
      %v664 = vunpack.c.l.b16 %v209
      %v665 = vunpack.c.h.b16 %v209
      %v666 = vunpack.c.l.b16 %v210
      %v667 = vunpack.c.h.b16 %v210
      %v668 = vunpack.c.l.b16 %v211
      %v669 = vunpack.c.h.b16 %v211
      %v670 = vunpack.c.l.b16 %v212
      %v671 = vunpack.c.h.b16 %v212
      %v672 = vunpack.c.l.b16 %v213
      %v673 = vunpack.c.h.b16 %v213
      %v674 = vunpack.c.l.b16 %v214
      %v675 = vunpack.c.h.b16 %v214
      %v676 = vunpack.c.l.b16 %v215
      %v677 = vunpack.c.h.b16 %v215
      %v678 = vunpack.c.l.b16 %v216
      %v679 = vunpack.c.h.b16 %v216
      %v680 = vunpack.c.l.b16 %v217
      %v681 = vunpack.c.h.b16 %v217
      %v682 = vunpack.c.l.b16 %v218
      %v683 = vunpack.c.h.b16 %v218
      %v684 = vunpack.c.l.b16 %v219
      %v685 = vunpack.c.h.b16 %v219
      %v686 = vunpack.c.l.b16 %v220
      %v687 = vunpack.c.h.b16 %v220
      %v688 = vunpack.c.l.b16 %v221
      %v689 = vunpack.c.h.b16 %v221
      %v690 = vunpack.c.l.b16 %v222
      %v691 = vunpack.c.h.b16 %v222
      %v692 = vunpack.c.l.b16 %v223
      %v693 = vunpack.c.h.b16 %v223
      %v694 = vunpack.c.l.b16 %v224
      %v695 = vunpack.c.h.b16 %v224
      %v696 = vunpack.c.l.b16 %v225
      %v697 = vunpack.c.h.b16 %v225
      %v698 = vunpack.c.l.b16 %v226
      %v699 = vunpack.c.h.b16 %v226
      %v700 = vunpack.c.l.b16 %v227
      %v701 = vunpack.c.h.b16 %v227
      %v702 = vunpack.c.l.b16 %v228
      %v703 = vunpack.c.h.b16 %v228
      %v704 = vunpack.c.l.b16 %v229
      %v705 = vunpack.c.h.b16 %v229
      %v706 = vunpack.c.l.b16 %v230
      %v707 = vunpack.c.h.b16 %v230
      %v708 = vunpack.c.l.b16 %v231
      %v709 = vunpack.c.h.b16 %v231
      %v710 = vunpack.c.l.b16 %v232
      %v711 = vunpack.c.h.b16 %v232
      %v712 = vunpack.c.l.b16 %v233
      %v713 = vunpack.c.h.b16 %v233
      %v714 = vunpack.c.l.b16 %v234
      %v715 = vunpack.c.h.b16 %v234
      %v716 = vunpack.c.l.b16 %v235
      %v717 = vunpack.c.h.b16 %v235
      %v718 = vunpack.c.l.b16 %v236
      %v719 = vunpack.c.h.b16 %v236
      %v720 = vunpack.c.l.b16 %v237
      %v721 = vunpack.c.h.b16 %v237
      %v722 = vunpack.c.l.b16 %v238
      %v723 = vunpack.c.h.b16 %v238
      %v724 = vunpack.c.l.b16 %v239
      %v725 = vunpack.c.h.b16 %v239
      %v726 = vunpack.c.l.b16 %v240
      %v727 = vunpack.c.h.b16 %v240
      %v728 = vunpack.c.l.b16 %v241
      %v729 = vunpack.c.h.b16 %v241
      %v730 = vunpack.c.l.b16 %v242
      %v731 = vunpack.c.h.b16 %v242
      %v732 = vunpack.c.l.b16 %v243
      %v733 = vunpack.c.h.b16 %v243
      %v734 = vunpack.c.l.b16 %v244
      %v735 = vunpack.c.h.b16 %v244
      %v736 = vunpack.c.l.b16 %v245
      %v737 = vunpack.c.h.b16 %v245
      %v738 = vunpack.c.l.b16 %v246
      %v739 = vunpack.c.h.b16 %v246
      %v740 = vunpack.c.l.b16 %v247
      %v741 = vunpack.c.h.b16 %v247
      %v742 = vunpack.c.l.b16 %v248
      %v743 = vunpack.c.h.b16 %v248
      %v744 = vunpack.c.l.b16 %v249
      %v745 = vunpack.c.h.b16 %v249
      %v746 = vunpack.c.l.b16 %v250
      %v747 = vunpack.c.h.b16 %v250
      %v748 = vunpack.c.l.b16 %v251
      %v749 = vunpack.c.h.b16 %v251
      %v750 = vunpack.c.l.b16 %v252
      %v751 = vunpack.c.h.b16 %v252
      %v752 = vunpack.c.l.b16 %v253
      %v753 = vunpack.c.h.b16 %v253
      %v754 = vunpack.c.l.b16 %v254
      %v755 = vunpack.c.h.b16 %v254
      %v756 = vunpack.c.l.b16 %v255
      %v757 = vunpack.c.h.b16 %v255
      %v758 = vunpack.c.l.b16 %v256
      %v759 = vunpack.c.h.b16 %v256
      %v760 = vunpack.c.l.b16 %v257
      %v761 = vunpack.c.h.b16 %v257
      %v762 = vunpack.c.l.b16 %v258
      %v763 = vunpack.c.h.b16 %v258
      %v764 = vunpack.c.l.b16 %v259
      %v765 = vunpack.c.h.b16 %v259
      %v766 = vunpack.c.l.b16 %v260
      %v767 = vunpack.c.h.b16 %v260
      %v768 = vunpack.c.l.b16 %v261
      %v769 = vunpack.c.h.b16 %v261
      %v770 = vunpack.c.l.b16 %v262
      %v771 = vunpack.c.h.b16 %v262
      %v772 = vunpack.c.l.b16 %v263
      %v773 = vunpack.c.h.b16 %v263
      %v774 = vunpack.c.l.b16 %v264
      %v775 = vunpack.c.h.b16 %v264
      %v776 = vunpack.c.l.b16 %v265
      %v777 = vunpack.c.h.b16 %v265
      %v778 = vunpack.c.l.b16 %v266
      %v779 = vunpack.c.h.b16 %v266
      %v780 = vunpack.c.l.b16 %v267
      %v781 = vunpack.c.h.b16 %v267
      %v782 = vunpack.c.l.b16 %v268
      %v783 = vunpack.c.h.b16 %v268
      %v784 = vunpack.c.l.b16 %v269
      %v785 = vunpack.c.h.b16 %v269
      %v786 = vunpack.c.l.b16 %v270
      %v787 = vunpack.c.h.b16 %v270
      %v788 = vunpack.c.l.b16 %v271
      %v789 = vunpack.c.h.b16 %v271
      %v790 = vunpack.c.l.b16 %v272
      %v791 = vunpack.c.h.b16 %v272
      %v792 = vunpack.c.l.b16 %v273
      %v793 = vunpack.c.h.b16 %v273
      %v794 = vunpack.c.l.b16 %v274
      %v795 = vunpack.c.h.b16 %v274
      %v796 = vunpack.c.l.b16 %v275
      %v797 = vunpack.c.h.b16 %v275
      %v798 = vunpack.c.l.b16 %v276
      %v799 = vunpack.c.h.b16 %v276
      %v800 = vunpack.c.l.b16 %v277
      %v801 = vunpack.c.h.b16 %v277
      %v802 = vunpack.c.l.b16 %v278
      %v803 = vunpack.c.h.b16 %v278
      %v804 = vunpack.c.l.b16 %v279
      %v805 = vunpack.c.h.b16 %v279
      %v806 = vunpack.c.l.b16 %v280
      %v807 = vunpack.c.h.b16 %v280
      %v808 = vunpack.c.l.b16 %v281
      %v809 = vunpack.c.h.b16 %v281
      %v810 = vunpack.c.l.b16 %v282
      %v811 = vunpack.c.h.b16 %v282
      %v812 = vunpack.c.l.b16 %v283
      %v813 = vunpack.c.h.b16 %v283
      %v814 = vunpack.c.l.b16 %v284
      %v815 = vunpack.c.h.b16 %v284
      %v816 = vunpack.c.l.b16 %v285
      %v817 = vunpack.c.h.b16 %v285
      %v818 = vunpack.c.l.b16 %v286
      %v819 = vunpack.c.h.b16 %v286
      %v820 = vunpack.c.l.b16 %v287
      %v821 = vunpack.c.h.b16 %v287
      %v822 = vunpack.c.l.b16 %v288
      %v823 = vunpack.c.h.b16 %v288
      %v824 = vunpack.c.l.b16 %v289
      %v825 = vunpack.c.h.b16 %v289
      %v826 = vunpack.c.l.b16 %v290
      %v827 = vunpack.c.h.b16 %v290
      %v828 = vunpack.c.l.b16 %v291
      %v829 = vunpack.c.h.b16 %v291
      %v830 = vunpack.c.l.b16 %v292
      %v831 = vunpack.c.h.b16 %v292
      %v832 = vunpack.c.l.b16 %v293
      %v833 = vunpack.c.h.b16 %v293
      %v834 = vunpack.c.l.b16 %v294
      %v835 = vunpack.c.h.b16 %v294
      %v836 = vunpack.c.l.b16 %v295
      %v837 = vunpack.c.h.b16 %v295
      %v838 = vunpack.c.l.b16 %v296
      %v839 = vunpack.c.h.b16 %v296
      %v840 = vunpack.c.l.b16 %v297
      %v841 = vunpack.c.h.b16 %v297
      %v842 = vunpack.c.l.b16 %v298
      %v843 = vunpack.c.h.b16 %v298
      %v844 = vunpack.c.l.b16 %v299
      %v845 = vunpack.c.h.b16 %v299
      %v846 = vunpack.c.l.b16 %v300
      %v847 = vunpack.c.h.b16 %v300
      %v848 = vunpack.c.l.b16 %v301
      %v849 = vunpack.c.h.b16 %v301
      %v850 = vunpack.c.l.b16 %v302
      %v851 = vunpack.c.h.b16 %v302
      %v852 = vunpack.c.l.b16 %v303
      %v853 = vunpack.c.h.b16 %v303
      %v854 = vunpack.c.l.b16 %v304
      %v855 = vunpack.c.h.b16 %v304
      %v856 = vunpack.c.l.b16 %v305
      %v857 = vunpack.c.h.b16 %v305
      %v858 = vunpack.c.l.b16 %v306
      %v859 = vunpack.c.h.b16 %v306
      %v860 = vunpack.c.l.b16 %v307
      %v861 = vunpack.c.h.b16 %v307
      %v862 = vunpack.c.l.b16 %v308
      %v863 = vunpack.c.h.b16 %v308
      %v864 = vunpack.c.l.b16 %v309
      %v865 = vunpack.c.h.b16 %v309
      %v866 = vunpack.c.l.b16 %v310
      %v867 = vunpack.c.h.b16 %v310
      %v868 = vunpack.c.l.b16 %v311
      %v869 = vunpack.c.h.b16 %v311
      %v870 = vunpack.c.l.b16 %v312
      %v871 = vunpack.c.h.b16 %v312
      %v872 = vunpack.c.l.b16 %v313
      %v873 = vunpack.c.h.b16 %v313
      %v874 = vunpack.c.l.b16 %v314
      %v875 = vunpack.c.h.b16 %v314
      %v876 = vunpack.c.l.b16 %v315
      %v877 = vunpack.c.h.b16 %v315
      %v878 = vunpack.c.l.b16 %v316
      %v879 = vunpack.c.h.b16 %v316
      %v880 = vunpack.c.l.b16 %v317
      %v881 = vunpack.c.h.b16 %v317
      %v882 = vunpack.c.l.b16 %v318
      %v883 = vunpack.c.h.b16 %v318
      %v884 = vunpack.c.l.b16 %v319
      %v885 = vunpack.c.h.b16 %v319
      %v886 = vunpack.c.l.b16 %v320
      %v887 = vunpack.c.h.b16 %v320
      %v888 = vunpack.c.l.b16 %v321
      %v889 = vunpack.c.h.b16 %v321
      %v890 = vunpack.c.l.b16 %v322
      %v891 = vunpack.c.h.b16 %v322
      %v892 = vunpack.c.l.b16 %v323
      %v893 = vunpack.c.h.b16 %v323
      %v894 = vunpack.c.l.b16 %v324
      %v895 = vunpack.c.h.b16 %v324
      %v896 = vunpack.c.l.b16 %v325
      %v897 = vunpack.c.h.b16 %v325
      %v898 = vunpack.c.l.b16 %v326
      %v899 = vunpack.c.h.b16 %v326
      %v900 = vunpack.c.l.b16 %v327
      %v901 = vunpack.c.h.b16 %v327
      %v902 = vunpack.c.l.b16 %v328
      %v903 = vunpack.c.h.b16 %v328
      %v904 = vunpack.c.l.b16 %v329
      %v905 = vunpack.c.h.b16 %v329
      %v906 = vunpack.c.l.b16 %v330
      %v907 = vunpack.c.h.b16 %v330
      %v908 = vunpack.c.l.b16 %v331
      %v909 = vunpack.c.h.b16 %v331
      %v910 = vunpack.c.l.b16 %v332
      %v911 = vunpack.c.h.b16 %v332
      %v912 = vunpack.c.l.b16 %v333
      %v913 = vunpack.c.h.b16 %v333
      %v914 = vunpack.c.l.b16 %v334
      %v915 = vunpack.c.h.b16 %v334
      %v916 = vunpack.c.l.b16 %v335
      %v917 = vunpack.c.h.b16 %v335
      %v918 = vunpack.c.l.b16 %v336
      %v919 = vunpack.c.h.b16 %v336
      %v920 = vunpack.c.l.b16 %v337
      %v921 = vunpack.c.h.b16 %v337
      %v922 = vunpack.c.l.b16 %v338
      %v923 = vunpack.c.h.b16 %v338
      %v924 = vunpack.c.l.b16 %v339
      %v925 = vunpack.c.h.b16 %v339
      %v926 = vunpack.c.l.b16 %v340
      %v927 = vunpack.c.h.b16 %v340
      %v928 = vunpack.c.l.b16 %v341
      %v929 = vunpack.c.h.b16 %v341
      %v930 = vunpack.c.l.b16 %v342
      %v931 = vunpack.c.h.b16 %v342
      %v932 = vunpack.c.l.b16 %v343
      %v933 = vunpack.c.h.b16 %v343
      %v934 = vunpack.c.l.b16 %v344
      %v935 = vunpack.c.h.b16 %v344
      %v936 = vunpack.c.l.b16 %v345
      %v937 = vunpack.c.h.b16 %v345
      %v938 = vunpack.c.l.b16 %v346
      %v939 = vunpack.c.h.b16 %v346
      %v940 = vunpack.c.l.b16 %v347
      %v941 = vunpack.c.h.b16 %v347
      %v942 = vunpack.c.l.b16 %v348
      %v943 = vunpack.c.h.b16 %v348
      %v944 = vunpack.c.l.b16 %v349
      %v945 = vunpack.c.h.b16 %v349
      %v946 = vunpack.c.l.b16 %v350
      %v947 = vunpack.c.h.b16 %v350
      %v948 = vunpack.c.l.b16 %v351
      %v949 = vunpack.c.h.b16 %v351
      %v950 = vunpack.c.l.b16 %v352
      %v951 = vunpack.c.h.b16 %v352
      %v952 = vunpack.c.l.b16 %v353
      %v953 = vunpack.c.h.b16 %v353
      %v954 = vunpack.c.l.b16 %v354
      %v955 = vunpack.c.h.b16 %v354
      %v956 = vunpack.c.l.b16 %v355
      %v957 = vunpack.c.h.b16 %v355
      %v958 = vunpack.c.l.b16 %v356
      %v959 = vunpack.c.h.b16 %v356
      %v960 = vunpack.c.l.b16 %v357
      %v961 = vunpack.c.h.b16 %v357
      %v962 = vunpack.c.l.b16 %v358
      %v963 = vunpack.c.h.b16 %v358
      %v964 = vunpack.c.l.b16 %v359
      %v965 = vunpack.c.h.b16 %v359
      %v966 = vunpack.c.l.b16 %v360
      %v967 = vunpack.c.h.b16 %v360
      %v968 = vunpack.c.l.b16 %v361
      %v969 = vunpack.c.h.b16 %v361
      %v970 = vunpack.c.l.b16 %v362
      %v971 = vunpack.c.h.b16 %v362
      %v972 = vunpack.c.l.b16 %v363
      %v973 = vunpack.c.h.b16 %v363
      %v974 = vunpack.c.l.b16 %v364
      %v975 = vunpack.c.h.b16 %v364
      %v976 = vunpack.c.l.b16 %v365
      %v977 = vunpack.c.h.b16 %v365
      %v978 = vunpack.c.l.b16 %v366
      %v979 = vunpack.c.h.b16 %v366
      %v980 = vunpack.c.l.b16 %v367
      %v981 = vunpack.c.h.b16 %v367
      %v982 = vunpack.c.l.b16 %v368
      %v983 = vunpack.c.h.b16 %v368
      %v984 = vpack.c.b16 %v600, %v592
      %v985 = vpack.c.b16 %v601, %v593
      %v986 = vpack.c.b16 %v602, %v594
      %v987 = vpack.c.b16 %v603, %v595
      %v988 = vpack.c.b16 %v604, %v596
      %v989 = vpack.c.b16 %v605, %v597
      %v990 = vpack.c.b16 %v606, %v598
      %v991 = vpack.c.b16 %v607, %v599
      %v992 = vpack.c.b16 %v616, %v608
      %v993 = vpack.c.b16 %v617, %v609
      %v994 = vpack.c.b16 %v618, %v610
      %v995 = vpack.c.b16 %v619, %v611
      %v996 = vpack.c.b16 %v620, %v612
      %v997 = vpack.c.b16 %v621, %v613
      %v998 = vpack.c.b16 %v622, %v614
      %v999 = vpack.c.b16 %v623, %v615
      %v1000 = vpack.c.b16 %v632, %v624
      %v1001 = vpack.c.b16 %v633, %v625
      %v1002 = vpack.c.b16 %v634, %v626
      %v1003 = vpack.c.b16 %v635, %v627
      %v1004 = vpack.c.b16 %v636, %v628
      %v1005 = vpack.c.b16 %v637, %v629
      %v1006 = vpack.c.b16 %v638, %v630
      %v1007 = vpack.c.b16 %v639, %v631
      %v1008 = vpack.c.b16 %v648, %v640
      %v1009 = vpack.c.b16 %v649, %v641
      %v1010 = vpack.c.b16 %v650, %v642
      %v1011 = vpack.c.b16 %v651, %v643
      %v1012 = vpack.c.b16 %v652, %v644
      %v1013 = vpack.c.b16 %v653, %v645
      %v1014 = vpack.c.b16 %v654, %v646
      %v1015 = vpack.c.b16 %v655, %v647
      %v1016 = vpack.c.b16 %v664, %v656
      %v1017 = vpack.c.b16 %v665, %v657
      %v1018 = vpack.c.b16 %v666, %v658
      %v1019 = vpack.c.b16 %v667, %v659
      %v1020 = vpack.c.b16 %v668, %v660
      %v1021 = vpack.c.b16 %v669, %v661
      %v1022 = vpack.c.b16 %v670, %v662
      %v1023 = vpack.c.b16 %v671, %v663
      %v1024 = vpack.c.b16 %v680, %v672
      %v1025 = vpack.c.b16 %v681, %v673
      %v1026 = vpack.c.b16 %v682, %v674
      %v1027 = vpack.c.b16 %v683, %v675
      %v1028 = vpack.c.b16 %v684, %v676
      %v1029 = vpack.c.b16 %v685, %v677
      %v1030 = vpack.c.b16 %v686, %v678
      %v1031 = vpack.c.b16 %v687, %v679
      %v1032 = vpack.c.b16 %v696, %v688
      %v1033 = vpack.c.b16 %v697, %v689
      %v1034 = vpack.c.b16 %v698, %v690
      %v1035 = vpack.c.b16 %v699, %v691
      %v1036 = vpack.c.b16 %v700, %v692
      %v1037 = vpack.c.b16 %v701, %v693
      %v1038 = vpack.c.b16 %v702, %v694
      %v1039 = vpack.c.b16 %v703, %v695
      %v1040 = vpack.c.b16 %v712, %v704
      %v1041 = vpack.c.b16 %v713, %v705
      %v1042 = vpack.c.b16 %v714, %v706
      %v1043 = vpack.c.b16 %v715, %v707
      %v1044 = vpack.c.b16 %v716, %v708
      %v1045 = vpack.c.b16 %v717, %v709
      %v1046 = vpack.c.b16 %v718, %v710
      %v1047 = vpack.c.b16 %v719, %v711
      %v1048 = vpack.c.b16 %v728, %v720
      %v1049 = vpack.c.b16 %v729, %v721
      %v1050 = vpack.c.b16 %v730, %v722
      %v1051 = vpack.c.b16 %v731, %v723
      %v1052 = vpack.c.b16 %v732, %v724
      %v1053 = vpack.c.b16 %v733, %v725
      %v1054 = vpack.c.b16 %v734, %v726
      %v1055 = vpack.c.b16 %v735, %v727
      %v1056 = vpack.c.b16 %v744, %v736
      %v1057 = vpack.c.b16 %v745, %v737
      %v1058 = vpack.c.b16 %v746, %v738
      %v1059 = vpack.c.b16 %v747, %v739
      %v1060 = vpack.c.b16 %v748, %v740
      %v1061 = vpack.c.b16 %v749, %v741
      %v1062 = vpack.c.b16 %v750, %v742
      %v1063 = vpack.c.b16 %v751, %v743
      %v1064 = vpack.c.b16 %v760, %v752
      %v1065 = vpack.c.b16 %v761, %v753
      %v1066 = vpack.c.b16 %v762, %v754
      %v1067 = vpack.c.b16 %v763, %v755
      %v1068 = vpack.c.b16 %v764, %v756
      %v1069 = vpack.c.b16 %v765, %v757
      %v1070 = vpack.c.b16 %v766, %v758
      %v1071 = vpack.c.b16 %v767, %v759
      %v1072 = vpack.c.b16 %v776, %v768
      %v1073 = vpack.c.b16 %v777, %v769
      %v1074 = vpack.c.b16 %v778, %v770
      %v1075 = vpack.c.b16 %v779, %v771
      %v1076 = vpack.c.b16 %v780, %v772
      %v1077 = vpack.c.b16 %v781, %v773
      %v1078 = vpack.c.b16 %v782, %v774
      %v1079 = vpack.c.b16 %v783, %v775
      %v1080 = vpack.c.b16 %v792, %v784
      %v1081 = vpack.c.b16 %v793, %v785
      %v1082 = vpack.c.b16 %v794, %v786
      %v1083 = vpack.c.b16 %v795, %v787
      %v1084 = vpack.c.b16 %v796, %v788
      %v1085 = vpack.c.b16 %v797, %v789
      %v1086 = vpack.c.b16 %v798, %v790
      %v1087 = vpack.c.b16 %v799, %v791
      %v1088 = vpack.c.b16 %v808, %v800
      %v1089 = vpack.c.b16 %v809, %v801
      %v1090 = vpack.c.b16 %v810, %v802
      %v1091 = vpack.c.b16 %v811, %v803
      %v1092 = vpack.c.b16 %v812, %v804
      %v1093 = vpack.c.b16 %v813, %v805
      %v1094 = vpack.c.b16 %v814, %v806
      %v1095 = vpack.c.b16 %v815, %v807
      %v1096 = vpack.c.b16 %v824, %v816
      %v1097 = vpack.c.b16 %v825, %v817
      %v1098 = vpack.c.b16 %v826, %v818
      %v1099 = vpack.c.b16 %v827, %v819
      %v1100 = vpack.c.b16 %v828, %v820
      %v1101 = vpack.c.b16 %v829, %v821
      %v1102 = vpack.c.b16 %v830, %v822
      %v1103 = vpack.c.b16 %v831, %v823
      %v1104 = vpack.c.b16 %v840, %v832
      %v1105 = vpack.c.b16 %v841, %v833
      %v1106 = vpack.c.b16 %v842, %v834
      %v1107 = vpack.c.b16 %v843, %v835
      %v1108 = vpack.c.b16 %v844, %v836
      %v1109 = vpack.c.b16 %v845, %v837
      %v1110 = vpack.c.b16 %v846, %v838
      %v1111 = vpack.c.b16 %v847, %v839
      %v1112 = vpack.c.b16 %v856, %v848
      %v1113 = vpack.c.b16 %v857, %v849
      %v1114 = vpack.c.b16 %v858, %v850
      %v1115 = vpack.c.b16 %v859, %v851
      %v1116 = vpack.c.b16 %v860, %v852
      %v1117 = vpack.c.b16 %v861, %v853
      %v1118 = vpack.c.b16 %v862, %v854
      %v1119 = vpack.c.b16 %v863, %v855
      %v1120 = vpack.c.b16 %v872, %v864
      %v1121 = vpack.c.b16 %v873, %v865
      %v1122 = vpack.c.b16 %v874, %v866
      %v1123 = vpack.c.b16 %v875, %v867
      %v1124 = vpack.c.b16 %v876, %v868
      %v1125 = vpack.c.b16 %v877, %v869
      %v1126 = vpack.c.b16 %v878, %v870
      %v1127 = vpack.c.b16 %v879, %v871
      %v1128 = vpack.c.b16 %v888, %v880
      %v1129 = vpack.c.b16 %v889, %v881
      %v1130 = vpack.c.b16 %v890, %v882
      %v1131 = vpack.c.b16 %v891, %v883
      %v1132 = vpack.c.b16 %v892, %v884
      %v1133 = vpack.c.b16 %v893, %v885
      %v1134 = vpack.c.b16 %v894, %v886
      %v1135 = vpack.c.b16 %v895, %v887
      %v1136 = vpack.c.b16 %v904, %v896
      %v1137 = vpack.c.b16 %v905, %v897
      %v1138 = vpack.c.b16 %v906, %v898
      %v1139 = vpack.c.b16 %v907, %v899
      %v1140 = vpack.c.b16 %v908, %v900
      %v1141 = vpack.c.b16 %v909, %v901
      %v1142 = vpack.c.b16 %v910, %v902
      %v1143 = vpack.c.b16 %v911, %v903
      %v1144 = vpack.c.b16 %v920, %v912
      %v1145 = vpack.c.b16 %v921, %v913
      %v1146 = vpack.c.b16 %v922, %v914
      %v1147 = vpack.c.b16 %v923, %v915
      %v1148 = vpack.c.b16 %v924, %v916
      %v1149 = vpack.c.b16 %v925, %v917
      %v1150 = vpack.c.b16 %v926, %v918
      %v1151 = vpack.c.b16 %v927, %v919
      %v1152 = vpack.c.b16 %v936, %v928
      %v1153 = vpack.c.b16 %v937, %v929
      %v1154 = vpack.c.b16 %v938, %v930
      %v1155 = vpack.c.b16 %v939, %v931
      %v1156 = vpack.c.b16 %v940, %v932
      %v1157 = vpack.c.b16 %v941, %v933
      %v1158 = vpack.c.b16 %v942, %v934
      %v1159 = vpack.c.b16 %v943, %v935
      %v1160 = vpack.c.b16 %v952, %v944
      %v1161 = vpack.c.b16 %v953, %v945
      %v1162 = vpack.c.b16 %v954, %v946
      %v1163 = vpack.c.b16 %v955, %v947
      %v1164 = vpack.c.b16 %v956, %v948
      %v1165 = vpack.c.b16 %v957, %v949
      %v1166 = vpack.c.b16 %v958, %v950
      %v1167 = vpack.c.b16 %v959, %v951
      %v1168 = vpack.c.b16 %v968, %v960
      %v1169 = vpack.c.b16 %v969, %v961
      %v1170 = vpack.c.b16 %v970, %v962
      %v1171 = vpack.c.b16 %v971, %v963
      %v1172 = vpack.c.b16 %v972, %v964
      %v1173 = vpack.c.b16 %v973, %v965
      %v1174 = vpack.c.b16 %v974, %v966
      %v1175 = vpack.c.b16 %v975, %v967
      %v1176 = vpack.c.b16 %v976, %v976
      %v1177 = vpack.c.b16 %v977, %v977
      %v1178 = vpack.c.b16 %v978, %v978
      %v1179 = vpack.c.b16 %v979, %v979
      %v1180 = vpack.c.b16 %v980, %v980
      %v1181 = vpack.c.b16 %v981, %v981
      %v1182 = vpack.c.b16 %v982, %v982
      %v1183 = vpack.c.b16 %v983, %v983
      %vm1376 = vcmask 64512
      %v1378 = vsel %vm1376, %v392, 0
      %vm1380 = vcmask 1043456
      %v1382 = vsel %vm1380, %v1176, 0
      %v1385 = vsel %vm1380, %v1177, 0
      %v1388 = vsel %vm1380, %v1178, 0
      %v1391 = vsel %vm1380, %v1179, 0
      %v1394 = vsel %vm1380, %v1180, 0
      %v1397 = vsel %vm1380, %v1181, 0
      %v1400 = vsel %vm1380, %v1182, 0
      %v1403 = vsel %vm1380, %v1183, 0
      %1405 = vmatprep.subr.bf16.mxu0 %v985
      %1406 = vmatpush1.bf16.msra.mxu0 %v984
      %1407 = vmatprep.subr.bf16.mxu0 %v993
      %1408 = vmatpush1.bf16.msra.mxu0 %v992
      %1409 = vmatprep.subr.bf16.mxu0 %v1001
      %1410 = vmatpush1.bf16.msra.mxu0 %v1000
      %1411 = vmatprep.subr.bf16.mxu0 %v1009
      %1412 = vmatpush1.bf16.msra.mxu0 %v1008
      %1413 = vmatprep.subr.bf16.mxu0 %v1017
      %1414 = vmatpush1.bf16.msra.mxu0 %v1016
      %1415 = vmatprep.subr.bf16.mxu0 %v1025
      %1416 = vmatpush1.bf16.msra.mxu0 %v1024
      %1417 = vmatprep.subr.bf16.mxu0 %v1033
      %1418 = vmatpush1.bf16.msra.mxu0 %v1032
      %1419 = vmatprep.subr.bf16.mxu0 %v1041
      %1420 = vmatpush1.bf16.msra.mxu0 %v1040
      %1421 = vmatprep.subr.bf16.mxu0 %v1049
      %1422 = vmatpush1.bf16.msra.mxu0 %v1048
      %1423 = vmatprep.subr.bf16.mxu0 %v1057
      %1424 = vmatpush1.bf16.msra.mxu0 %v1056
      %1425 = vmatprep.subr.bf16.mxu0 %v1065
      %1426 = vmatpush1.bf16.msra.mxu0 %v1064
      %1427 = vmatprep.subr.bf16.mxu0 %v1073
      %1428 = vmatpush1.bf16.msra.mxu0 %v1072
      %1429 = vmatprep.subr.bf16.mxu0 %v1081
      %1430 = vmatpush1.bf16.msra.mxu0 %v1080
      %1431 = vmatprep.subr.bf16.mxu0 %v1089
      %1432 = vmatpush1.bf16.msra.mxu0 %v1088
      %1433 = vmatprep.subr.bf16.mxu0 %v1097
      %1434 = vmatpush1.bf16.msra.mxu0 %v1096
      %1435 = vmatprep.subr.bf16.mxu0 %v1105
      %1436 = vmatpush1.bf16.msra.mxu0 %v1104
      %1437 = vmatprep.mubr.bf16.mxu0 %v391
      %1438 = vmatmul.mubr.bf16.gmra.mrb[0].mxu0 %v383
      %v1439 = vpop.f32.mrb[0].mxu0
      %v1440 = vadd.f32 %v373, %v1439
      %v1441 = vpop.f32.mrb[0].mxu0
      %v1442 = vadd.f32 %v373, %v1441
      %v1443 = vpop.f32.mrb[0].mxu0
      %v1444 = vpop.f32.mrb[0].mxu0
      %1445 = vdwg.mxu0
      %1446 = vmatprep.subr.bf16.mxu0 %v1113
      %1447 = vmatpush1.bf16.msra.mxu0 %v1112
      %1448 = vmatprep.subr.bf16.mxu0 %v1121
      %1449 = vmatpush1.bf16.msra.mxu0 %v1120
      %1450 = vmatprep.subr.bf16.mxu0 %v1129
      %1451 = vmatpush1.bf16.msra.mxu0 %v1128
      %1452 = vmatprep.subr.bf16.mxu0 %v1137
      %1453 = vmatpush1.bf16.msra.mxu0 %v1136
      %1454 = vmatprep.subr.bf16.mxu0 %v1145
      %1455 = vmatpush1.bf16.msra.mxu0 %v1144
      %1456 = vmatprep.subr.bf16.mxu0 %v1153
      %1457 = vmatpush1.bf16.msra.mxu0 %v1152
      %1458 = vmatprep.subr.bf16.mxu0 %v1161
      %1459 = vmatpush1.bf16.msra.mxu0 %v1160
      %1460 = vmatprep.subr.bf16.mxu0 %v1169
      %1461 = vmatpush1.bf16.msra.mxu0 %v1168
      %1462 = vmatprep.subr.bf16.mxu0 %v1385
      %1463 = vmatpush1.bf16.msra.mxu0 %v1382
      %1464 = vmatprep.subr.bf16.mxu0 0
      %1465 = vmatpush1.bf16.msra.mxu0 0
      %1466 = vmatprep.subr.bf16.mxu0 0
      %1467 = vmatpush1.bf16.msra.mxu0 0
      %1468 = vmatprep.subr.bf16.mxu0 0
      %1469 = vmatpush1.bf16.msra.mxu0 0
      %1470 = vmatprep.subr.bf16.mxu0 0
      %1471 = vmatpush1.bf16.msra.mxu0 0
      %1472 = vmatprep.subr.bf16.mxu0 0
      %1473 = vmatpush1.bf16.msra.mxu0 0
      %1474 = vmatprep.subr.bf16.mxu0 0
      %1475 = vmatpush1.bf16.msra.mxu0 0
      %1476 = vmatprep.subr.bf16.mxu0 0
      %1477 = vmatpush1.bf16.msra.mxu0 0
      %1478 = vmatprep.mubr.bf16.mxu0 %v1378
      %1479 = vmatmul.mubr.bf16.gmra.mrb[0].mxu0 %v390
      %v1480 = vpop.f32.mrb[0].mxu0
      %v1481 = vadd.f32 %v1440, %v1480
      %v1482 = vpop.f32.mrb[0].mxu0
      %v1483 = vadd.f32 %v1442, %v1482
      %v1484 = vpop.f32.mrb[0].mxu0
      %v1485 = vpop.f32.mrb[0].mxu0
      %1486 = vdwg.mxu0
      %1487 = vmatprep.subr.bf16.mxu0 %v987
      %1488 = vmatpush1.bf16.msra.mxu0 %v986
      %1489 = vmatprep.subr.bf16.mxu0 %v995
      %1490 = vmatpush1.bf16.msra.mxu0 %v994
      %1491 = vmatprep.subr.bf16.mxu0 %v1003
      %1492 = vmatpush1.bf16.msra.mxu0 %v1002
      %1493 = vmatprep.subr.bf16.mxu0 %v1011
      %1494 = vmatpush1.bf16.msra.mxu0 %v1010
      %1495 = vmatprep.subr.bf16.mxu0 %v1019
      %1496 = vmatpush1.bf16.msra.mxu0 %v1018
      %1497 = vmatprep.subr.bf16.mxu0 %v1027
      %1498 = vmatpush1.bf16.msra.mxu0 %v1026
      %1499 = vmatprep.subr.bf16.mxu0 %v1035
      %1500 = vmatpush1.bf16.msra.mxu0 %v1034
      %1501 = vmatprep.subr.bf16.mxu0 %v1043
      %1502 = vmatpush1.bf16.msra.mxu0 %v1042
      %1503 = vmatprep.subr.bf16.mxu0 %v1051
      %1504 = vmatpush1.bf16.msra.mxu0 %v1050
      %1505 = vmatprep.subr.bf16.mxu0 %v1059
      %1506 = vmatpush1.bf16.msra.mxu0 %v1058
      %1507 = vmatprep.subr.bf16.mxu0 %v1067
      %1508 = vmatpush1.bf16.msra.mxu0 %v1066
      %1509 = vmatprep.subr.bf16.mxu0 %v1075
      %1510 = vmatpush1.bf16.msra.mxu0 %v1074
      %1511 = vmatprep.subr.bf16.mxu0 %v1083
      %1512 = vmatpush1.bf16.msra.mxu0 %v1082
      %1513 = vmatprep.subr.bf16.mxu0 %v1091
      %1514 = vmatpush1.bf16.msra.mxu0 %v1090
      %1515 = vmatprep.subr.bf16.mxu0 %v1099
      %1516 = vmatpush1.bf16.msra.mxu0 %v1098
      %1517 = vmatprep.subr.bf16.mxu0 %v1107
      %1518 = vmatpush1.bf16.msra.mxu0 %v1106
      %1519 = vmatprep.mubr.bf16.mxu0 %v391
      %1520 = vmatmul.mubr.bf16.gmra.mrb[0].mxu0 %v383
      %v1521 = vpop.f32.mrb[0].mxu0
      %v1522 = vadd.f32 %v373, %v1521
      %v1523 = vpop.f32.mrb[0].mxu0
      %v1524 = vadd.f32 %v373, %v1523
      %v1525 = vpop.f32.mrb[0].mxu0
      %v1526 = vpop.f32.mrb[0].mxu0
      %1527 = vdwg.mxu0
      %1528 = vmatprep.subr.bf16.mxu0 %v1115
      %1529 = vmatpush1.bf16.msra.mxu0 %v1114
      %1530 = vmatprep.subr.bf16.mxu0 %v1123
      %1531 = vmatpush1.bf16.msra.mxu0 %v1122
      %1532 = vmatprep.subr.bf16.mxu0 %v1131
      %1533 = vmatpush1.bf16.msra.mxu0 %v1130
      %1534 = vmatprep.subr.bf16.mxu0 %v1139
      %1535 = vmatpush1.bf16.msra.mxu0 %v1138
      %1536 = vmatprep.subr.bf16.mxu0 %v1147
      %1537 = vmatpush1.bf16.msra.mxu0 %v1146
      %1538 = vmatprep.subr.bf16.mxu0 %v1155
      %1539 = vmatpush1.bf16.msra.mxu0 %v1154
      %1540 = vmatprep.subr.bf16.mxu0 %v1163
      %1541 = vmatpush1.bf16.msra.mxu0 %v1162
      %1542 = vmatprep.subr.bf16.mxu0 %v1171
      %1543 = vmatpush1.bf16.msra.mxu0 %v1170
      %1544 = vmatprep.subr.bf16.mxu0 %v1391
      %1545 = vmatpush1.bf16.msra.mxu0 %v1388
      %1546 = vmatprep.subr.bf16.mxu0 0
      %1547 = vmatpush1.bf16.msra.mxu0 0
      %1548 = vmatprep.subr.bf16.mxu0 0
      %1549 = vmatpush1.bf16.msra.mxu0 0
      %1550 = vmatprep.subr.bf16.mxu0 0
      %1551 = vmatpush1.bf16.msra.mxu0 0
      %1552 = vmatprep.subr.bf16.mxu0 0
      %1553 = vmatpush1.bf16.msra.mxu0 0
      %1554 = vmatprep.subr.bf16.mxu0 0
      %1555 = vmatpush1.bf16.msra.mxu0 0
      %1556 = vmatprep.subr.bf16.mxu0 0
      %1557 = vmatpush1.bf16.msra.mxu0 0
      %1558 = vmatprep.subr.bf16.mxu0 0
      %1559 = vmatpush1.bf16.msra.mxu0 0
      %1560 = vmatprep.mubr.bf16.mxu0 %v1378
      %1561 = vmatmul.mubr.bf16.gmra.mrb[0].mxu0 %v390
      %v1562 = vpop.f32.mrb[0].mxu0
      %v1563 = vadd.f32 %v1522, %v1562
      %v1564 = vpop.f32.mrb[0].mxu0
      %v1565 = vadd.f32 %v1524, %v1564
      %v1566 = vpop.f32.mrb[0].mxu0
      %v1567 = vpop.f32.mrb[0].mxu0
      %1568 = vdwg.mxu0
      %1569 = vmatprep.subr.bf16.mxu0 %v989
      %1570 = vmatpush1.bf16.msra.mxu0 %v988
      %1571 = vmatprep.subr.bf16.mxu0 %v997
      %1572 = vmatpush1.bf16.msra.mxu0 %v996
      %1573 = vmatprep.subr.bf16.mxu0 %v1005
      %1574 = vmatpush1.bf16.msra.mxu0 %v1004
      %1575 = vmatprep.subr.bf16.mxu0 %v1013
      %1576 = vmatpush1.bf16.msra.mxu0 %v1012
      %1577 = vmatprep.subr.bf16.mxu0 %v1021
      %1578 = vmatpush1.bf16.msra.mxu0 %v1020
      %1579 = vmatprep.subr.bf16.mxu0 %v1029
      %1580 = vmatpush1.bf16.msra.mxu0 %v1028
      %1581 = vmatprep.subr.bf16.mxu0 %v1037
      %1582 = vmatpush1.bf16.msra.mxu0 %v1036
      %1583 = vmatprep.subr.bf16.mxu0 %v1045
      %1584 = vmatpush1.bf16.msra.mxu0 %v1044
      %1585 = vmatprep.subr.bf16.mxu0 %v1053
      %1586 = vmatpush1.bf16.msra.mxu0 %v1052
      %1587 = vmatprep.subr.bf16.mxu0 %v1061
      %1588 = vmatpush1.bf16.msra.mxu0 %v1060
      %1589 = vmatprep.subr.bf16.mxu0 %v1069
      %1590 = vmatpush1.bf16.msra.mxu0 %v1068
      %1591 = vmatprep.subr.bf16.mxu0 %v1077
      %1592 = vmatpush1.bf16.msra.mxu0 %v1076
      %1593 = vmatprep.subr.bf16.mxu0 %v1085
      %1594 = vmatpush1.bf16.msra.mxu0 %v1084
      %1595 = vmatprep.subr.bf16.mxu0 %v1093
      %1596 = vmatpush1.bf16.msra.mxu0 %v1092
      %1597 = vmatprep.subr.bf16.mxu0 %v1101
      %1598 = vmatpush1.bf16.msra.mxu0 %v1100
      %1599 = vmatprep.subr.bf16.mxu0 %v1109
      %1600 = vmatpush1.bf16.msra.mxu0 %v1108
      %1601 = vmatprep.mubr.bf16.mxu0 %v391
      %1602 = vmatmul.mubr.bf16.gmra.mrb[0].mxu0 %v383
      %v1603 = vpop.f32.mrb[0].mxu0
      %v1604 = vadd.f32 %v373, %v1603
      %v1605 = vpop.f32.mrb[0].mxu0
      %v1606 = vadd.f32 %v373, %v1605
      %v1607 = vpop.f32.mrb[0].mxu0
      %v1608 = vpop.f32.mrb[0].mxu0
      %1609 = vdwg.mxu0
      %1610 = vmatprep.subr.bf16.mxu0 %v1117
      %1611 = vmatpush1.bf16.msra.mxu0 %v1116
      %1612 = vmatprep.subr.bf16.mxu0 %v1125
      %1613 = vmatpush1.bf16.msra.mxu0 %v1124
      %1614 = vmatprep.subr.bf16.mxu0 %v1133
      %1615 = vmatpush1.bf16.msra.mxu0 %v1132
      %1616 = vmatprep.subr.bf16.mxu0 %v1141
      %1617 = vmatpush1.bf16.msra.mxu0 %v1140
      %1618 = vmatprep.subr.bf16.mxu0 %v1149
      %1619 = vmatpush1.bf16.msra.mxu0 %v1148
      %1620 = vmatprep.subr.bf16.mxu0 %v1157
      %1621 = vmatpush1.bf16.msra.mxu0 %v1156
      %1622 = vmatprep.subr.bf16.mxu0 %v1165
      %1623 = vmatpush1.bf16.msra.mxu0 %v1164
      %1624 = vmatprep.subr.bf16.mxu0 %v1173
      %1625 = vmatpush1.bf16.msra.mxu0 %v1172
      %1626 = vmatprep.subr.bf16.mxu0 %v1397
      %1627 = vmatpush1.bf16.msra.mxu0 %v1394
      %1628 = vmatprep.subr.bf16.mxu0 0
      %1629 = vmatpush1.bf16.msra.mxu0 0
      %1630 = vmatprep.subr.bf16.mxu0 0
      %1631 = vmatpush1.bf16.msra.mxu0 0
      %1632 = vmatprep.subr.bf16.mxu0 0
      %1633 = vmatpush1.bf16.msra.mxu0 0
      %1634 = vmatprep.subr.bf16.mxu0 0
      %1635 = vmatpush1.bf16.msra.mxu0 0
      %1636 = vmatprep.subr.bf16.mxu0 0
      %1637 = vmatpush1.bf16.msra.mxu0 0
      %1638 = vmatprep.subr.bf16.mxu0 0
      %1639 = vmatpush1.bf16.msra.mxu0 0
      %1640 = vmatprep.subr.bf16.mxu0 0
      %1641 = vmatpush1.bf16.msra.mxu0 0
      %1642 = vmatprep.mubr.bf16.mxu0 %v1378
      %1643 = vmatmul.mubr.bf16.gmra.mrb[0].mxu0 %v390
      %v1644 = vpop.f32.mrb[0].mxu0
      %v1645 = vadd.f32 %v1604, %v1644
      %v1646 = vpop.f32.mrb[0].mxu0
      %v1647 = vadd.f32 %v1606, %v1646
      %v1648 = vpop.f32.mrb[0].mxu0
      %v1649 = vpop.f32.mrb[0].mxu0
      %1650 = vdwg.mxu0
      %1651 = vmatprep.subr.bf16.mxu0 %v991
      %1652 = vmatpush1.bf16.msra.mxu0 %v990
      %1653 = vmatprep.subr.bf16.mxu0 %v999
      %1654 = vmatpush1.bf16.msra.mxu0 %v998
      %1655 = vmatprep.subr.bf16.mxu0 %v1007
      %1656 = vmatpush1.bf16.msra.mxu0 %v1006
      %1657 = vmatprep.subr.bf16.mxu0 %v1015
      %1658 = vmatpush1.bf16.msra.mxu0 %v1014
      %1659 = vmatprep.subr.bf16.mxu0 %v1023
      %1660 = vmatpush1.bf16.msra.mxu0 %v1022
      %1661 = vmatprep.subr.bf16.mxu0 %v1031
      %1662 = vmatpush1.bf16.msra.mxu0 %v1030
      %1663 = vmatprep.subr.bf16.mxu0 %v1039
      %1664 = vmatpush1.bf16.msra.mxu0 %v1038
      %1665 = vmatprep.subr.bf16.mxu0 %v1047
      %1666 = vmatpush1.bf16.msra.mxu0 %v1046
      %1667 = vmatprep.subr.bf16.mxu0 %v1055
      %1668 = vmatpush1.bf16.msra.mxu0 %v1054
      %1669 = vmatprep.subr.bf16.mxu0 %v1063
      %1670 = vmatpush1.bf16.msra.mxu0 %v1062
      %1671 = vmatprep.subr.bf16.mxu0 %v1071
      %1672 = vmatpush1.bf16.msra.mxu0 %v1070
      %1673 = vmatprep.subr.bf16.mxu0 %v1079
      %1674 = vmatpush1.bf16.msra.mxu0 %v1078
      %1675 = vmatprep.subr.bf16.mxu0 %v1087
      %1676 = vmatpush1.bf16.msra.mxu0 %v1086
      %1677 = vmatprep.subr.bf16.mxu0 %v1095
      %1678 = vmatpush1.bf16.msra.mxu0 %v1094
      %1679 = vmatprep.subr.bf16.mxu0 %v1103
      %1680 = vmatpush1.bf16.msra.mxu0 %v1102
      %1681 = vmatprep.subr.bf16.mxu0 %v1111
      %1682 = vmatpush1.bf16.msra.mxu0 %v1110
      %1683 = vmatprep.mubr.bf16.mxu0 %v391
      %1684 = vmatmul.mubr.bf16.gmra.mrb[0].mxu0 %v383
      %v1685 = vpop.f32.mrb[0].mxu0
      %v1686 = vadd.f32 %v373, %v1685
      %v1687 = vpop.f32.mrb[0].mxu0
      %v1688 = vadd.f32 %v373, %v1687
      %v1689 = vpop.f32.mrb[0].mxu0
      %v1690 = vpop.f32.mrb[0].mxu0
      %1691 = vdwg.mxu0
      %1692 = vmatprep.subr.bf16.mxu0 %v1119
      %1693 = vmatpush1.bf16.msra.mxu0 %v1118
      %1694 = vmatprep.subr.bf16.mxu0 %v1127
      %1695 = vmatpush1.bf16.msra.mxu0 %v1126
      %1696 = vmatprep.subr.bf16.mxu0 %v1135
      %1697 = vmatpush1.bf16.msra.mxu0 %v1134
      %1698 = vmatprep.subr.bf16.mxu0 %v1143
      %1699 = vmatpush1.bf16.msra.mxu0 %v1142
      %1700 = vmatprep.subr.bf16.mxu0 %v1151
      %1701 = vmatpush1.bf16.msra.mxu0 %v1150
      %1702 = vmatprep.subr.bf16.mxu0 %v1159
      %1703 = vmatpush1.bf16.msra.mxu0 %v1158
      %1704 = vmatprep.subr.bf16.mxu0 %v1167
      %1705 = vmatpush1.bf16.msra.mxu0 %v1166
      %1706 = vmatprep.subr.bf16.mxu0 %v1175
      %1707 = vmatpush1.bf16.msra.mxu0 %v1174
      %1708 = vmatprep.subr.bf16.mxu0 %v1403
      %1709 = vmatpush1.bf16.msra.mxu0 %v1400
      %1710 = vmatprep.subr.bf16.mxu0 0
      %1711 = vmatpush1.bf16.msra.mxu0 0
      %1712 = vmatprep.subr.bf16.mxu0 0
      %1713 = vmatpush1.bf16.msra.mxu0 0
      %1714 = vmatprep.subr.bf16.mxu0 0
      %1715 = vmatpush1.bf16.msra.mxu0 0
      %1716 = vmatprep.subr.bf16.mxu0 0
      %1717 = vmatpush1.bf16.msra.mxu0 0
      %1718 = vmatprep.subr.bf16.mxu0 0
      %1719 = vmatpush1.bf16.msra.mxu0 0
      %1720 = vmatprep.subr.bf16.mxu0 0
      %1721 = vmatpush1.bf16.msra.mxu0 0
      %1722 = vmatprep.subr.bf16.mxu0 0
      %1723 = vmatpush1.bf16.msra.mxu0 0
      %1724 = vmatprep.mubr.bf16.mxu0 %v1378
      %1725 = vmatmul.mubr.bf16.gmra.mrb[0].mxu0 %v390
      %v1726 = vpop.f32.mrb[0].mxu0
      %v1727 = vadd.f32 %v1686, %v1726
      %v1728 = vpop.f32.mrb[0].mxu0
      %v1729 = vadd.f32 %v1688, %v1728
      %v1730 = vpop.f32.mrb[0].mxu0
      %v1731 = vpop.f32.mrb[0].mxu0
      %1732 = vdwg.mxu0
      %v1733 = vtanh.pop %v1481
      %v1734 = vtanh.pop %v1483
      %v1735 = vtanh.pop %v1563
      %v1736 = vtanh.pop %v1565
      %v1737 = vtanh.pop %v1645
      %v1738 = vtanh.pop %v1647
      %v1739 = vtanh.pop %v1727
      %v1740 = vtanh.pop %v1729
      %v1749 = vcombine.low %v1733, %v1734
      %v1750 = vcombine.low %v1735, %v1736
      %v1751 = vcombine.low %v1737, %v1738
      %v1752 = vcombine.low %v1739, %v1740
      %1757 = vst [vmem:[%s170] sm:$0x77] %v1749
      %1758 = vst [vmem:[%s170 + $0x8] sm:$0x77] %v1750
      %1759 = vst [vmem:[%s170 + $0x10] sm:$0x77] %v1751
      %1760 = vst [vmem:[%s170 + $0x18] sm:$0x77] %v1752
      %p1761 = scmp.lt.s32.totalorder %s14, 1
      %s1762 = scalar_select %p1761, %s14, 1
      %s1763 = smul.addr %s1762, 8
      %s1764 = smul.addr %s1763, 4
      %s1765 = scalar_lea.vmem %s3, %s1764
      // Predicated region
      $region33: #{g_forward.21} parent=31 // pred_check
        %p1766 = pneg %p100
      $region34: #{g_forward.21} parent=31 // pred_check_branch
        %1768 = sbr.rel (%p1766) target = $region36
      $region35: #{g_forward.21} parent=31 // pred_region
        _
      $region36: #{g_forward.21} parent=31 // pred_fallthru
        _
    $region32: #{g_forward.21} parent=5 // pred_fallthru
      _
    %p1769 = scmp.le.s32.totalorder 2, %s9
    // Predicated region
    $region37: #{g_forward.21} parent=5 // pred_check
      %p1770 = pneg %p1769
    $region38: #{g_forward.21} parent=5 // pred_check_branch
      %1772 = sbr.rel (%p1770) target = $region40
    $region39: #{g_forward.21} parent=5 // pred_region
      %s1773 = ssub.s32 %s9, 2
      // Predicated region
      $region41: #{g_forward.21} parent=39 // pred_check
        %p1774 = pneg %p106
      $region42: #{g_forward.21} parent=39 // pred_check_branch
        %1776 = sbr.rel (%p1774) target = $region44
      $region43: #{g_forward.21} parent=39 // pred_region
        %p1777 = scmp.lt.s32.totalorder %s15, 1
        %s1778 = scalar_select %p1777, %s15, 1
        %s1779 = smul.addr %s1778, 8
        %s1780 = smul.addr %s1779, 4
        %s1781 = scalar_lea.vmem %s3, %s1780
      $region44: #{g_forward.21} parent=39 // pred_fallthru
        _
    $region40: #{g_forward.21} parent=5 // pred_fallthru
      _
  $region6: #{g_forward.21} parent=0 // loop_footer
    %s13 = sadd.s32 1, %s9
  $region7: #{g_forward.21} parent=0 // loop_footer_branch
    %8 = sbr.rel target = $region3
  $region8: #{g_forward.21} parent=0 // loop_exit
    _

</llo_original>
